<compile_context>
chip_gen: v6e
topology: v6e:2x2x1
jax: 0.10.0
libtpu: 0.0.40
codegen_flags: <defaults>
</compile_context>

<pallas_src>
import functools
import math

import jax
import jax.numpy as jnp
from jax.experimental import pallas as pl
from jax.experimental.pallas import tpu as pltpu


# ----------------------------------------------------------------------------
# Pallas kernel 1: fused  out = relu?( clamp?(x) @ w + b )   (used by the convs)
# ----------------------------------------------------------------------------
def _matmul_kernel(x_ref, w_ref, b_ref, o_ref, *, relu, clamp_in):
    x = x_ref[...]                                   # bf16 tile (tm, K)
    if clamp_in is not None:                         # fused image.clamp(0, 1)
        x = jnp.clip(x, clamp_in[0], clamp_in[1])
    acc = jnp.dot(x, w_ref[...], preferred_element_type=jnp.float32)  # MXU, f32 acc
    acc = acc + b_ref[...]                           # f32 epilogue
    if relu:
        acc = jnp.maximum(acc, 0.0)
    o_ref[...] = acc.astype(o_ref.dtype)


def pallas_matmul_bias_act(x, w, b, *, relu=False, clamp_in=None,
                           out_dtype=None, tm_max=512):
    """x: (M, K) bf16, w: (K, N) bf16, b: (1, N) f32 -> (M, N) out_dtype.

    M is tiled (parallel grid) when it exceeds tm_max; small M uses one full block.
    tm_max: 512 is a safe default for v7x's 64 MiB VMEM; v6e tolerates 1024-2048.
    """
    M, K = x.shape
    K2, N = w.shape
    assert K == K2, (K, K2)
    out_dtype = out_dtype or x.dtype
    b2 = b.reshape(1, N).astype(jnp.float32)
    tm = M if M <= tm_max else tm_max                # tm_max is a multiple of 8
    kernel = functools.partial(_matmul_kernel, relu=relu, clamp_in=clamp_in)
    return pl.pallas_call(
        kernel,
        out_shape=jax.ShapeDtypeStruct((M, N), out_dtype),
        grid=(pl.cdiv(M, tm),),
        in_specs=[
            pl.BlockSpec((tm, K), lambda i: (i, 0)),
            pl.BlockSpec((K, N), lambda i: (0, 0)),
            pl.BlockSpec((1, N), lambda i: (0, 0)),
        ],
        out_specs=pl.BlockSpec((tm, N), lambda i: (i, 0)),
        compiler_params=pltpu.CompilerParams(dimension_semantics=("parallel",)),
    )(x, w, b2)


# ----------------------------------------------------------------------------
# Pallas kernel 2: fully fused actor head
#   h1 = relu(feat @ W1f + qpos_clamped @ W1q + b1)     (concat folded into split weights)
#   h2 = relu(h1 @ W2 + b2)
#   z  = h2 @ Whead + bhead     (mean & log_std heads packed into one >=128-wide matmul)
#   out[:, :A]   = tanh(z[:, :A])          (mean)
#   out[:, A:2A] = clamp(z[:, A:2A],-5,2)  (log_std)
# ----------------------------------------------------------------------------
def _head_kernel(feat_ref, qpos_ref, w1f_ref, w1q_ref, b1_ref,
                 w2_ref, b2_ref, wh_ref, bh_ref, o_ref, *, action_dim, qpos_dim):
    h1 = jnp.dot(feat_ref[...], w1f_ref[...], preferred_element_type=jnp.float32)
    q = jnp.clip(qpos_ref[...], -10.0, 10.0)        # fused qpos.clamp(-10, 10), f32
    for qi in range(qpos_dim):                       # tiny K: do it on the VPU in f32
        h1 = h1 + q[:, qi:qi + 1] * w1q_ref[qi:qi + 1, :]
    h1 = jnp.maximum(h1 + b1_ref[...], 0.0)

    h2 = jnp.dot(h1.astype(w2_ref.dtype), w2_ref[...], preferred_element_type=jnp.float32)
    h2 = jnp.maximum(h2 + b2_ref[...], 0.0)

    z = jnp.dot(h2.astype(wh_ref.dtype), wh_ref[...], preferred_element_type=jnp.float32)
    z = z + bh_ref[...]
    col = jax.lax.broadcasted_iota(jnp.int32, z.shape, dimension=1)
    out = jnp.where(col < action_dim, jnp.tanh(z),
                    jnp.where(col < 2 * action_dim, jnp.clip(z, -5.0, 2.0), 0.0))
    o_ref[...] = out.astype(o_ref.dtype)


def fused_head(feat, qpos, w1f, w1q, b1, w2, b2, wh, bh, *,
               action_dim, tm_max=512):
    M, F = feat.shape
    Q = qpos.shape[1]
    H1 = w1f.shape[1]
    H2 = w2.shape[1]
    NH = wh.shape[1]                                  # lane-dense (>=128) padded head width
    tm = M if M <= tm_max else tm_max
    kernel = functools.partial(_head_kernel, action_dim=action_dim, qpos_dim=Q)
    return pl.pallas_call(
        kernel,
        out_shape=jax.ShapeDtypeStruct((M, NH), jnp.float32),
        grid=(pl.cdiv(M, tm),),
        in_specs=[
            pl.BlockSpec((tm, F), lambda i: (i, 0)),
            pl.BlockSpec((tm, Q), lambda i: (i, 0)),
            pl.BlockSpec((F, H1), lambda i: (0, 0)),
            pl.BlockSpec((Q, H1), lambda i: (0, 0)),
            pl.BlockSpec((1, H1), lambda i: (0, 0)),
            pl.BlockSpec((H1, H2), lambda i: (0, 0)),
            pl.BlockSpec((1, H2), lambda i: (0, 0)),
            pl.BlockSpec((H2, NH), lambda i: (0, 0)),
            pl.BlockSpec((1, NH), lambda i: (0, 0)),
        ],
        out_specs=pl.BlockSpec((tm, NH), lambda i: (i, 0)),
        compiler_params=pltpu.CompilerParams(dimension_semantics=("parallel",)),
    )(feat, qpos, w1f, w1q, b1, w2, b2, wh, bh)


# ----------------------------------------------------------------------------
# Conv2d (valid padding) via channels-last im2col + fused Pallas matmul kernel.
# No transposes: NHWC strided slices, lane-axis concat, free major-dim reshapes.
# ----------------------------------------------------------------------------
def _im2col_nhwc(x, kh, kw, stride):
    B, H, W, C = x.shape
    Ho = (H - kh) // stride + 1
    Wo = (W - kw) // stride + 1
    cols = []
    for i in range(kh):
        for j in range(kw):
            cols.append(x[:, i:i + stride * Ho:stride, j:j + stride * Wo:stride, :])
    p = jnp.concatenate(cols, axis=-1)                # (B, Ho, Wo, kh*kw*C), (i, j, c) order
    return p.reshape(B * Ho * Wo, kh * kw * C), Ho, Wo


def conv2d_nhwc(x, w_mat, b, kh, kw, stride, *, relu=True, clamp_in=None):
    """x: (B, H, W, C) bf16; w_mat: (kh*kw*C, O) bf16 (patch (i,j,c) row order); b: (1, O) f32."""
    B, H, W, C = x.shape
    assert w_mat.shape[0] == kh * kw * C
    p, Ho, Wo = _im2col_nhwc(x, kh, kw, stride)
    out = pallas_matmul_bias_act(p, w_mat, b, relu=relu, clamp_in=clamp_in,
                                 out_dtype=x.dtype)   # (B*Ho*Wo, O) bf16
    return out.reshape(B, Ho, Wo, w_mat.shape[1])


# ----------------------------------------------------------------------------
# AdaptiveAvgPool2d (PyTorch bin semantics), NHWC.  Identity short-circuit.
# ----------------------------------------------------------------------------
def adaptive_avg_pool2d_nhwc(x, out_hw):
    B, H, W, C = x.shape
    oh, ow = out_hw
    if (H, W) == (oh, ow):
        return x                                      # identity for the 3x3 feature map
    rows = []
    for i in range(oh):
        hs, he = (i * H) // oh, -(-((i + 1) * H) // oh)
        cols = []
        for j in range(ow):
            ws, we = (j * W) // ow, -(-((j + 1) * W) // ow)
            cols.append(x[:, hs:he, ws:we, :].mean(axis=(1, 2)))
        rows.append(jnp.stack(cols, axis=1))
    return jnp.stack(rows, axis=1)                    # (B, oh, ow, C)


# ----------------------------------------------------------------------------
# Parameter init (deterministic).  Weights are stored directly in the layouts the
# kernels want: conv weights as (kh*kw*C, O) with patch (i, j, c) row order, the
# first actor layer split into feature/qpos row blocks (features in NHWC (h, w, c)
# flatten order — to load PyTorch weights, permute its first 288 rows from (c,h,w)
# to (h,w,c)), and the mean/log_std heads packed into one 128-wide padded block.
# ----------------------------------------------------------------------------
def _uniform(key, shape, bound):
    return jax.random.uniform(key, shape, jnp.float32, -bound, bound)


def init_policy_params(key, qpos_dim=2, action_dim=1):
    flat = 32 * 3 * 3
    ks = jax.random.split(key, 14)
    bf = jnp.bfloat16

    def bound(fan_in):
        return 1.0 / math.sqrt(fan_in)

    b1 = bound(3 * 8 * 8)
    b2 = bound(8 * 4 * 4)
    b3 = bound(16 * 4 * 4)
    bl1 = bound(flat + qpos_dim)
    bl2 = bound(256)

    # mean / log_std heads packed lane-dense: cols [0:A]=mean, [A:2A]=log_std, rest 0.
    NH = 128 * ((2 * action_dim + 127) // 128)
    head_w = jnp.zeros((128, NH), jnp.float32)
    head_w = head_w.at[:, :action_dim].set(_uniform(ks[10], (128, action_dim), 0.001))
    head_w = head_w.at[:, action_dim:2 * action_dim].set(
        _uniform(ks[11], (128, action_dim), 0.001))
    head_b = jnp.zeros((1, NH), jnp.float32)
    head_b = head_b.at[0, :action_dim].set(_uniform(ks[12], (action_dim,), 0.001))
    head_b = head_b.at[0, action_dim:2 * action_dim].set(
        _uniform(ks[13], (action_dim,), 0.001))

    return {
        "c1w": _uniform(ks[0], (8 * 8 * 3, 8), b1).astype(bf),
        "c1b": _uniform(ks[1], (1, 8), b1),
        "c2w": _uniform(ks[2], (4 * 4 * 8, 16), b2).astype(bf),
        "c2b": _uniform(ks[3], (1, 16), b2),
        "c3w": _uniform(ks[4], (4 * 4 * 16, 32), b3).astype(bf),
        "c3b": _uniform(ks[5], (1, 32), b3),
        "l1wf": _uniform(ks[6], (flat, 256), bl1).astype(bf),
        "l1wq": _uniform(ks[7], (qpos_dim, 256), bl1),     # tiny, kept f32 (VPU path)
        "l1b": _uniform(ks[8], (1, 256), bl1),
        "l2w": _uniform(ks[9], (256, 128), bl2).astype(bf),
        "l2b": _uniform(ks[9], (1, 128), bl2),
        "head_w": head_w.astype(bf),
        "head_b": head_b,
    }


# ----------------------------------------------------------------------------
# SACPolicy forward: (image NCHW, qpos) -> (mean, log_std)
# ----------------------------------------------------------------------------
def policy_forward(params, image, qpos, *, action_dim=1):
    # single NCHW -> NHWC reorder, fused with the f32 -> bf16 cast (one pass over input)
    x = jnp.transpose(image, (0, 2, 3, 1)).astype(jnp.bfloat16)
    # conv trunk (image.clamp(0, 1) fused into the conv1 kernel)
    x = conv2d_nhwc(x, params["c1w"], params["c1b"], 8, 8, 4, relu=True, clamp_in=(0.0, 1.0))
    x = conv2d_nhwc(x, params["c2w"], params["c2b"], 4, 4, 2, relu=True)
    x = conv2d_nhwc(x, params["c3w"], params["c3b"], 4, 4, 2, relu=True)
    x = adaptive_avg_pool2d_nhwc(x, (3, 3))
    B = x.shape[0]
    feat = x.reshape(B, -1)                       # (B, 288), free reshape, (h, w, c) order

    if qpos.ndim > 2:
        qpos = qpos.reshape(B, -1)
    qpos = qpos.astype(jnp.float32)

    out = fused_head(feat, qpos,
                     params["l1wf"], params["l1wq"], params["l1b"],
                     params["l2w"], params["l2b"],
                     params["head_w"], params["head_b"],
                     action_dim=action_dim)       # (B, 128) f32, lane-dense store
    mean = out[:, :action_dim]
    log_std = out[:, action_dim:2 * action_dim]
    return mean, log_std


if __name__ == "__main__":
    key = jax.random.PRNGKey(0)
    kp, ki, kq = jax.random.split(key, 3)

    B = 2
    image_size = 84          # conv-stack consistent: 84 -> 20 -> 9 -> 3
    qpos_dim = 2
    action_dim = 1

    params = init_policy_params(kp, qpos_dim=qpos_dim, action_dim=action_dim)
    image = jax.random.uniform(ki, (B, 3, image_size, image_size), jnp.float32)
    qpos = jax.random.normal(kq, (B, qpos_dim), jnp.float32)

    fwd = jax.jit(functools.partial(policy_forward, action_dim=action_dim))
    mean, log_std = fwd(params, image, qpos)
    jax.block_until_ready((mean, log_std))

    assert mean.shape == (B, action_dim) and log_std.shape == (B, action_dim)
    assert mean.dtype == jnp.float32 and log_std.dtype == jnp.float32
    assert bool(jnp.all(jnp.isfinite(mean))) and bool(jnp.all(jnp.isfinite(log_std)))
    assert bool(jnp.all(jnp.abs(mean) <= 1.0))
    assert bool(jnp.all((log_std >= -5.0) & (log_std <= 2.0)))
    print("KERNEL_OK")
</pallas_src>

<mosaic_0001>
module attributes {stable_mosaic.version = 11 : i64} {
  func.func @_matmul_kernel(%arg0: i32, %arg1: memref<512x192xbf16, #tpu.memory_space<vmem>>, %arg2: memref<192x8xbf16, #tpu.memory_space<vmem>>, %arg3: memref<1x8xf32, #tpu.memory_space<vmem>>, %arg4: memref<512x8xbf16, #tpu.memory_space<vmem>>) attributes {dimension_semantics = [#tpu.dimension_semantics<parallel>], iteration_bounds = array<i64: 2>, scalar_prefetch = 0 : i64, scratch_operands = 0 : i64, tpu.core_type = #tpu.core_type<tc>, window_params = [{transform_indices = @transform_0, window_bounds = array<i64: 512, 192>}, {pipeline_mode = #tpu.pipeline_mode<synchronous>, transform_indices = @transform_1, window_bounds = array<i64: 192, 8>}, {pipeline_mode = #tpu.pipeline_mode<synchronous>, transform_indices = @transform_2, window_bounds = array<i64: 1, 8>}, {transform_indices = @transform_3, window_bounds = array<i64: 512, 8>}]} {
    %c0 = arith.constant 0 : index
    %c0_0 = arith.constant 0 : index
    %0 = vector.load %arg1[%c0, %c0_0] : memref<512x192xbf16, #tpu.memory_space<vmem>>, vector<512x192xbf16>
    %cst = arith.constant 0.000000e+00 : f32
    %cst_1 = arith.constant 1.000000e+00 : f32
    %1 = arith.truncf %cst : f32 to bf16
    %2 = vector.broadcast %1 : bf16 to vector<512x192xbf16>
    %3 = arith.maximumf %2, %0 : vector<512x192xbf16>
    %4 = arith.truncf %cst_1 : f32 to bf16
    %5 = vector.broadcast %4 : bf16 to vector<512x192xbf16>
    %6 = arith.minimumf %5, %3 : vector<512x192xbf16>
    %c0_2 = arith.constant 0 : index
    %c0_3 = arith.constant 0 : index
    %7 = vector.load %arg2[%c0_2, %c0_3] : memref<192x8xbf16, #tpu.memory_space<vmem>>, vector<192x8xbf16>
    %cst_4 = arith.constant dense<0.000000e+00> : vector<512x8xf32>
    %8 = tpu.matmul %6, %7, %cst_4 {dimension_numbers = #tpu.dot_dimension_numbers<[1], [0], [0], [1], [0, 0, 1, 1], [], []>} : vector<512x192xbf16>, vector<192x8xbf16>, vector<512x8xf32> -> vector<512x8xf32>
    %c0_5 = arith.constant 0 : index
    %c0_6 = arith.constant 0 : index
    %9 = vector.load %arg3[%c0_5, %c0_6] : memref<1x8xf32, #tpu.memory_space<vmem>>, vector<1x8xf32>
    %10 = vector.broadcast %9 : vector<1x8xf32> to vector<512x8xf32>
    %11 = arith.addf %8, %10 : vector<512x8xf32>
    %cst_7 = arith.constant 0.000000e+00 : f32
    %12 = vector.broadcast %cst_7 : f32 to vector<512x8xf32>
    %13 = arith.maximumf %11, %12 : vector<512x8xf32>
    %14 = arith.truncf %13 : vector<512x8xf32> to vector<512x8xbf16>
    %c0_8 = arith.constant 0 : index
    %c0_9 = arith.constant 0 : index
    %15 = vector.load %arg4[%c0_8, %c0_9] : memref<512x8xbf16, #tpu.memory_space<vmem>>, vector<512x8xbf16>
    tpu.vector_store %arg4[%c0_8, %c0_9], %14 {strides = array<i32>} : memref<512x8xbf16, #tpu.memory_space<vmem>>, vector<512x8xbf16>,
    return
  }
  func.func @transform_0(%arg0: i32) -> (i32, i32) {
    %c0_i32 = arith.constant 0 : i32
    %c0_i32_0 = arith.constant 0 : i32
    return %arg0, %c0_i32 : i32, i32
  }
  func.func @transform_1(%arg0: i32) -> (i32, i32) {
    %c0_i32 = arith.constant 0 : i32
    %c0_i32_0 = arith.constant 0 : i32
    %c0_i32_1 = arith.constant 0 : i32
    return %c0_i32, %c0_i32_0 : i32, i32
  }
  func.func @transform_2(%arg0: i32) -> (i32, i32) {
    %c0_i32 = arith.constant 0 : i32
    %c0_i32_0 = arith.constant 0 : i32
    %c0_i32_1 = arith.constant 0 : i32
    return %c0_i32, %c0_i32_0 : i32, i32
  }
  func.func @transform_3(%arg0: i32) -> (i32, i32) {
    %c0_i32 = arith.constant 0 : i32
    %c0_i32_0 = arith.constant 0 : i32
    return %arg0, %c0_i32 : i32, i32
  }
}

module attributes {stable_mosaic.version = 11 : i64} {
  func.func @_matmul_kernel(%arg0: i32, %arg1: memref<162x128xbf16, #tpu.memory_space<vmem>>, %arg2: memref<128x16xbf16, #tpu.memory_space<vmem>>, %arg3: memref<1x16xf32, #tpu.memory_space<vmem>>, %arg4: memref<162x16xbf16, #tpu.memory_space<vmem>>) attributes {dimension_semantics = [#tpu.dimension_semantics<parallel>], iteration_bounds = array<i64: 1>, scalar_prefetch = 0 : i64, scratch_operands = 0 : i64, tpu.core_type = #tpu.core_type<tc>, window_params = [{transform_indices = @transform_0, window_bounds = array<i64: 162, 128>}, {pipeline_mode = #tpu.pipeline_mode<synchronous>, transform_indices = @transform_1, window_bounds = array<i64: 128, 16>}, {pipeline_mode = #tpu.pipeline_mode<synchronous>, transform_indices = @transform_2, window_bounds = array<i64: 1, 16>}, {transform_indices = @transform_3, window_bounds = array<i64: 162, 16>}]} {
    %c0 = arith.constant 0 : index
    %c0_0 = arith.constant 0 : index
    %0 = vector.load %arg1[%c0, %c0_0] : memref<162x128xbf16, #tpu.memory_space<vmem>>, vector<162x128xbf16>
    %c0_1 = arith.constant 0 : index
    %c0_2 = arith.constant 0 : index
    %1 = vector.load %arg2[%c0_1, %c0_2] : memref<128x16xbf16, #tpu.memory_space<vmem>>, vector<128x16xbf16>
    %cst = arith.constant dense<0.000000e+00> : vector<162x16xf32>
    %2 = tpu.matmul %0, %1, %cst {dimension_numbers = #tpu.dot_dimension_numbers<[1], [0], [0], [1], [0, 0, 1, 1], [], []>} : vector<162x128xbf16>, vector<128x16xbf16>, vector<162x16xf32> -> vector<162x16xf32>
    %c0_3 = arith.constant 0 : index
    %c0_4 = arith.constant 0 : index
    %3 = vector.load %arg3[%c0_3, %c0_4] : memref<1x16xf32, #tpu.memory_space<vmem>>, vector<1x16xf32>
    %4 = vector.broadcast %3 : vector<1x16xf32> to vector<162x16xf32>
    %5 = arith.addf %2, %4 : vector<162x16xf32>
    %cst_5 = arith.constant 0.000000e+00 : f32
    %6 = vector.broadcast %cst_5 : f32 to vector<162x16xf32>
    %7 = arith.maximumf %5, %6 : vector<162x16xf32>
    %8 = arith.truncf %7 : vector<162x16xf32> to vector<162x16xbf16>
    %c0_6 = arith.constant 0 : index
    %c0_7 = arith.constant 0 : index
    %9 = vector.load %arg4[%c0_6, %c0_7] : memref<162x16xbf16, #tpu.memory_space<vmem>>, vector<162x16xbf16>
    tpu.vector_store %arg4[%c0_6, %c0_7], %8 {strides = array<i32>} : memref<162x16xbf16, #tpu.memory_space<vmem>>, vector<162x16xbf16>,
    return
  }
  func.func @transform_0(%arg0: i32) -> (i32, i32) {
    %c0_i32 = arith.constant 0 : i32
    %c0_i32_0 = arith.constant 0 : i32
    return %arg0, %c0_i32 : i32, i32
  }
  func.func @transform_1(%arg0: i32) -> (i32, i32) {
    %c0_i32 = arith.constant 0 : i32
    %c0_i32_0 = arith.constant 0 : i32
    %c0_i32_1 = arith.constant 0 : i32
    return %c0_i32, %c0_i32_0 : i32, i32
  }
  func.func @transform_2(%arg0: i32) -> (i32, i32) {
    %c0_i32 = arith.constant 0 : i32
    %c0_i32_0 = arith.constant 0 : i32
    %c0_i32_1 = arith.constant 0 : i32
    return %c0_i32, %c0_i32_0 : i32, i32
  }
  func.func @transform_3(%arg0: i32) -> (i32, i32) {
    %c0_i32 = arith.constant 0 : i32
    %c0_i32_0 = arith.constant 0 : i32
    return %arg0, %c0_i32 : i32, i32
  }
}

module attributes {stable_mosaic.version = 11 : i64} {
  func.func @_matmul_kernel(%arg0: i32, %arg1: memref<18x256xbf16, #tpu.memory_space<vmem>>, %arg2: memref<256x32xbf16, #tpu.memory_space<vmem>>, %arg3: memref<1x32xf32, #tpu.memory_space<vmem>>, %arg4: memref<18x32xbf16, #tpu.memory_space<vmem>>) attributes {dimension_semantics = [#tpu.dimension_semantics<parallel>], iteration_bounds = array<i64: 1>, scalar_prefetch = 0 : i64, scratch_operands = 0 : i64, tpu.core_type = #tpu.core_type<tc>, window_params = [{transform_indices = @transform_0, window_bounds = array<i64: 18, 256>}, {pipeline_mode = #tpu.pipeline_mode<synchronous>, transform_indices = @transform_1, window_bounds = array<i64: 256, 32>}, {pipeline_mode = #tpu.pipeline_mode<synchronous>, transform_indices = @transform_2, window_bounds = array<i64: 1, 32>}, {transform_indices = @transform_3, window_bounds = array<i64: 18, 32>}]} {
    %c0 = arith.constant 0 : index
    %c0_0 = arith.constant 0 : index
    %0 = vector.load %arg1[%c0, %c0_0] : memref<18x256xbf16, #tpu.memory_space<vmem>>, vector<18x256xbf16>
    %c0_1 = arith.constant 0 : index
    %c0_2 = arith.constant 0 : index
    %1 = vector.load %arg2[%c0_1, %c0_2] : memref<256x32xbf16, #tpu.memory_space<vmem>>, vector<256x32xbf16>
    %cst = arith.constant dense<0.000000e+00> : vector<18x32xf32>
    %2 = tpu.matmul %0, %1, %cst {dimension_numbers = #tpu.dot_dimension_numbers<[1], [0], [0], [1], [0, 0, 1, 1], [], []>} : vector<18x256xbf16>, vector<256x32xbf16>, vector<18x32xf32> -> vector<18x32xf32>
    %c0_3 = arith.constant 0 : index
    %c0_4 = arith.constant 0 : index
    %3 = vector.load %arg3[%c0_3, %c0_4] : memref<1x32xf32, #tpu.memory_space<vmem>>, vector<1x32xf32>
    %4 = vector.broadcast %3 : vector<1x32xf32> to vector<18x32xf32>
    %5 = arith.addf %2, %4 : vector<18x32xf32>
    %cst_5 = arith.constant 0.000000e+00 : f32
    %6 = vector.broadcast %cst_5 : f32 to vector<18x32xf32>
    %7 = arith.maximumf %5, %6 : vector<18x32xf32>
    %8 = arith.truncf %7 : vector<18x32xf32> to vector<18x32xbf16>
    %c0_6 = arith.constant 0 : index
    %c0_7 = arith.constant 0 : index
    %9 = vector.load %arg4[%c0_6, %c0_7] : memref<18x32xbf16, #tpu.memory_space<vmem>>, vector<18x32xbf16>
    tpu.vector_store %arg4[%c0_6, %c0_7], %8 {strides = array<i32>} : memref<18x32xbf16, #tpu.memory_space<vmem>>, vector<18x32xbf16>,
    return
  }
  func.func @transform_0(%arg0: i32) -> (i32, i32) {
    %c0_i32 = arith.constant 0 : i32
    %c0_i32_0 = arith.constant 0 : i32
    return %arg0, %c0_i32 : i32, i32
  }
  func.func @transform_1(%arg0: i32) -> (i32, i32) {
    %c0_i32 = arith.constant 0 : i32
    %c0_i32_0 = arith.constant 0 : i32
    %c0_i32_1 = arith.constant 0 : i32
    return %c0_i32, %c0_i32_0 : i32, i32
  }
  func.func @transform_2(%arg0: i32) -> (i32, i32) {
    %c0_i32 = arith.constant 0 : i32
    %c0_i32_0 = arith.constant 0 : i32
    %c0_i32_1 = arith.constant 0 : i32
    return %c0_i32, %c0_i32_0 : i32, i32
  }
  func.func @transform_3(%arg0: i32) -> (i32, i32) {
    %c0_i32 = arith.constant 0 : i32
    %c0_i32_0 = arith.constant 0 : i32
    return %arg0, %c0_i32 : i32, i32
  }
}

module attributes {stable_mosaic.version = 11 : i64} {
  func.func @_head_kernel(%arg0: i32, %arg1: memref<2x288xbf16, #tpu.memory_space<vmem>>, %arg2: memref<2x2xf32, #tpu.memory_space<vmem>>, %arg3: memref<288x256xbf16, #tpu.memory_space<vmem>>, %arg4: memref<2x256xf32, #tpu.memory_space<vmem>>, %arg5: memref<1x256xf32, #tpu.memory_space<vmem>>, %arg6: memref<256x128xbf16, #tpu.memory_space<vmem>>, %arg7: memref<1x128xf32, #tpu.memory_space<vmem>>, %arg8: memref<128x128xbf16, #tpu.memory_space<vmem>>, %arg9: memref<1x128xf32, #tpu.memory_space<vmem>>, %arg10: memref<2x128xf32, #tpu.memory_space<vmem>>) attributes {dimension_semantics = [#tpu.dimension_semantics<parallel>], iteration_bounds = array<i64: 1>, scalar_prefetch = 0 : i64, scratch_operands = 0 : i64, tpu.core_type = #tpu.core_type<tc>, window_params = [{transform_indices = @transform_0, window_bounds = array<i64: 2, 288>}, {transform_indices = @transform_1, window_bounds = array<i64: 2, 2>}, {pipeline_mode = #tpu.pipeline_mode<synchronous>, transform_indices = @transform_2, window_bounds = array<i64: 288, 256>}, {pipeline_mode = #tpu.pipeline_mode<synchronous>, transform_indices = @transform_3, window_bounds = array<i64: 2, 256>}, {pipeline_mode = #tpu.pipeline_mode<synchronous>, transform_indices = @transform_4, window_bounds = array<i64: 1, 256>}, {pipeline_mode = #tpu.pipeline_mode<synchronous>, transform_indices = @transform_5, window_bounds = array<i64: 256, 128>}, {pipeline_mode = #tpu.pipeline_mode<synchronous>, transform_indices = @transform_6, window_bounds = array<i64: 1, 128>}, {pipeline_mode = #tpu.pipeline_mode<synchronous>, transform_indices = @transform_7, window_bounds = array<i64: 128, 128>}, {pipeline_mode = #tpu.pipeline_mode<synchronous>, transform_indices = @transform_8, window_bounds = array<i64: 1, 128>}, {transform_indices = @transform_9, window_bounds = array<i64: 2, 128>}]} {
    %c0 = arith.constant 0 : index
    %c0_0 = arith.constant 0 : index
    %0 = vector.load %arg1[%c0, %c0_0] : memref<2x288xbf16, #tpu.memory_space<vmem>>, vector<2x288xbf16>
    %c0_1 = arith.constant 0 : index
    %c0_2 = arith.constant 0 : index
    %1 = vector.load %arg3[%c0_1, %c0_2] : memref<288x256xbf16, #tpu.memory_space<vmem>>, vector<288x256xbf16>
    %cst = arith.constant dense<0.000000e+00> : vector<2x256xf32>
    %2 = tpu.matmul %0, %1, %cst {dimension_numbers = #tpu.dot_dimension_numbers<[1], [0], [0], [1], [0, 0, 1, 1], [], []>} : vector<2x288xbf16>, vector<288x256xbf16>, vector<2x256xf32> -> vector<2x256xf32>
    %c0_3 = arith.constant 0 : index
    %c0_4 = arith.constant 0 : index
    %3 = vector.load %arg2[%c0_3, %c0_4] : memref<2x2xf32, #tpu.memory_space<vmem>>, vector<2x2xf32>
    %cst_5 = arith.constant -1.000000e+01 : f32
    %cst_6 = arith.constant 1.000000e+01 : f32
    %4 = vector.broadcast %cst_5 : f32 to vector<2x2xf32>
    %5 = arith.maximumf %4, %3 : vector<2x2xf32>
    %6 = vector.broadcast %cst_6 : f32 to vector<2x2xf32>
    %7 = arith.minimumf %6, %5 : vector<2x2xf32>
    %8 = vector.extract_strided_slice %7 {offsets = [0, 0], sizes = [2, 1], strides = [1, 1]} : vector<2x2xf32> to vector<2x1xf32>
    %c0_7 = arith.constant 0 : index
    %c0_8 = arith.constant 0 : index
    %9 = vector.load %arg4[%c0_7, %c0_8] : memref<2x256xf32, #tpu.memory_space<vmem>>, vector<1x256xf32>
    %10 = vector.broadcast %8 : vector<2x1xf32> to vector<2x256xf32>
    %11 = vector.broadcast %9 : vector<1x256xf32> to vector<2x256xf32>
    %12 = arith.mulf %10, %11 : vector<2x256xf32>
    %13 = arith.addf %2, %12 : vector<2x256xf32>
    %14 = vector.extract_strided_slice %7 {offsets = [0, 1], sizes = [2, 1], strides = [1, 1]} : vector<2x2xf32> to vector<2x1xf32>
    %c1 = arith.constant 1 : index
    %c0_9 = arith.constant 0 : index
    %15 = vector.load %arg4[%c1, %c0_9] : memref<2x256xf32, #tpu.memory_space<vmem>>, vector<1x256xf32>
    %16 = vector.broadcast %14 : vector<2x1xf32> to vector<2x256xf32>
    %17 = vector.broadcast %15 : vector<1x256xf32> to vector<2x256xf32>
    %18 = arith.mulf %16, %17 : vector<2x256xf32>
    %19 = arith.addf %13, %18 : vector<2x256xf32>
    %c0_10 = arith.constant 0 : index
    %c0_11 = arith.constant 0 : index
    %20 = vector.load %arg5[%c0_10, %c0_11] : memref<1x256xf32, #tpu.memory_space<vmem>>, vector<1x256xf32>
    %21 = vector.broadcast %20 : vector<1x256xf32> to vector<2x256xf32>
    %22 = arith.addf %19, %21 : vector<2x256xf32>
    %cst_12 = arith.constant 0.000000e+00 : f32
    %23 = vector.broadcast %cst_12 : f32 to vector<2x256xf32>
    %24 = arith.maximumf %22, %23 : vector<2x256xf32>
    %25 = arith.truncf %24 : vector<2x256xf32> to vector<2x256xbf16>
    %c0_13 = arith.constant 0 : index
    %c0_14 = arith.constant 0 : index
    %26 = vector.load %arg6[%c0_13, %c0_14] : memref<256x128xbf16, #tpu.memory_space<vmem>>, vector<256x128xbf16>
    %cst_15 = arith.constant dense<0.000000e+00> : vector<2x128xf32>
    %27 = tpu.matmul %25, %26, %cst_15 {dimension_numbers = #tpu.dot_dimension_numbers<[1], [0], [0], [1], [0, 0, 1, 1], [], []>} : vector<2x256xbf16>, vector<256x128xbf16>, vector<2x128xf32> -> vector<2x128xf32>
    %c0_16 = arith.constant 0 : index
    %c0_17 = arith.constant 0 : index
    %28 = vector.load %arg7[%c0_16, %c0_17] : memref<1x128xf32, #tpu.memory_space<vmem>>, vector<1x128xf32>
    %29 = vector.broadcast %28 : vector<1x128xf32> to vector<2x128xf32>
    %30 = arith.addf %27, %29 : vector<2x128xf32>
    %cst_18 = arith.constant 0.000000e+00 : f32
    %31 = vector.broadcast %cst_18 : f32 to vector<2x128xf32>
    %32 = arith.maximumf %30, %31 : vector<2x128xf32>
    %33 = arith.truncf %32 : vector<2x128xf32> to vector<2x128xbf16>
    %c0_19 = arith.constant 0 : index
    %c0_20 = arith.constant 0 : index
    %34 = vector.load %arg8[%c0_19, %c0_20] : memref<128x128xbf16, #tpu.memory_space<vmem>>, vector<128x128xbf16>
    %cst_21 = arith.constant dense<0.000000e+00> : vector<2x128xf32>
    %35 = tpu.matmul %33, %34, %cst_21 {dimension_numbers = #tpu.dot_dimension_numbers<[1], [0], [0], [1], [0, 0, 1, 1], [], []>} : vector<2x128xbf16>, vector<128x128xbf16>, vector<2x128xf32> -> vector<2x128xf32>
    %c0_22 = arith.constant 0 : index
    %c0_23 = arith.constant 0 : index
    %36 = vector.load %arg9[%c0_22, %c0_23] : memref<1x128xf32, #tpu.memory_space<vmem>>, vector<1x128xf32>
    %37 = vector.broadcast %36 : vector<1x128xf32> to vector<2x128xf32>
    %38 = arith.addf %35, %37 : vector<2x128xf32>
    %39 = tpu.iota {dimensions = array<i32: 1>} : vector<2x128xi32>
    %c1_i32 = arith.constant 1 : i32
    %40 = vector.broadcast %c1_i32 : i32 to vector<2x128xi32>
    %41 = arith.cmpi slt, %39, %40 : vector<2x128xi32>
    %42 = math.tanh %38 : vector<2x128xf32>
    %c2_i32 = arith.constant 2 : i32
    %43 = vector.broadcast %c2_i32 : i32 to vector<2x128xi32>
    %44 = arith.cmpi slt, %39, %43 : vector<2x128xi32>
    %cst_24 = arith.constant -5.000000e+00 : f32
    %cst_25 = arith.constant 2.000000e+00 : f32
    %45 = vector.broadcast %cst_24 : f32 to vector<2x128xf32>
    %46 = arith.maximumf %45, %38 : vector<2x128xf32>
    %47 = vector.broadcast %cst_25 : f32 to vector<2x128xf32>
    %48 = arith.minimumf %47, %46 : vector<2x128xf32>
    %cst_26 = arith.constant 0.000000e+00 : f32
    %49 = vector.broadcast %cst_26 : f32 to vector<2x128xf32>
    %50 = arith.select %44, %48, %49 : vector<2x128xi1>, vector<2x128xf32>
    %51 = arith.select %41, %42, %50 : vector<2x128xi1>, vector<2x128xf32>
    %c0_27 = arith.constant 0 : index
    %c0_28 = arith.constant 0 : index
    %52 = vector.load %arg10[%c0_27, %c0_28] : memref<2x128xf32, #tpu.memory_space<vmem>>, vector<2x128xf32>
    tpu.vector_store %arg10[%c0_27, %c0_28], %51 {strides = array<i32>} : memref<2x128xf32, #tpu.memory_space<vmem>>, vector<2x128xf32>,
    return
  }
  func.func @transform_0(%arg0: i32) -> (i32, i32) {
    %c0_i32 = arith.constant 0 : i32
    %c0_i32_0 = arith.constant 0 : i32
    return %arg0, %c0_i32 : i32, i32
  }
  func.func @transform_1(%arg0: i32) -> (i32, i32) {
    %c0_i32 = arith.constant 0 : i32
    %c0_i32_0 = arith.constant 0 : i32
    return %arg0, %c0_i32 : i32, i32
  }
  func.func @transform_2(%arg0: i32) -> (i32, i32) {
    %c0_i32 = arith.constant 0 : i32
    %c0_i32_0 = arith.constant 0 : i32
    %c0_i32_1 = arith.constant 0 : i32
    return %c0_i32, %c0_i32_0 : i32, i32
  }
  func.func @transform_3(%arg0: i32) -> (i32, i32) {
    %c0_i32 = arith.constant 0 : i32
    %c0_i32_0 = arith.constant 0 : i32
    %c0_i32_1 = arith.constant 0 : i32
    return %c0_i32, %c0_i32_0 : i32, i32
  }
  func.func @transform_4(%arg0: i32) -> (i32, i32) {
    %c0_i32 = arith.constant 0 : i32
    %c0_i32_0 = arith.constant 0 : i32
    %c0_i32_1 = arith.constant 0 : i32
    return %c0_i32, %c0_i32_0 : i32, i32
  }
  func.func @transform_5(%arg0: i32) -> (i32, i32) {
    %c0_i32 = arith.constant 0 : i32
    %c0_i32_0 = arith.constant 0 : i32
    %c0_i32_1 = arith.constant 0 : i32
    return %c0_i32, %c0_i32_0 : i32, i32
  }
  func.func @transform_6(%arg0: i32) -> (i32, i32) {
    %c0_i32 = arith.constant 0 : i32
    %c0_i32_0 = arith.constant 0 : i32
    %c0_i32_1 = arith.constant 0 : i32
    return %c0_i32, %c0_i32_0 : i32, i32
  }
  func.func @transform_7(%arg0: i32) -> (i32, i32) {
    %c0_i32 = arith.constant 0 : i32
    %c0_i32_0 = arith.constant 0 : i32
    %c0_i32_1 = arith.constant 0 : i32
    return %c0_i32, %c0_i32_0 : i32, i32
  }
  func.func @transform_8(%arg0: i32) -> (i32, i32) {
    %c0_i32 = arith.constant 0 : i32
    %c0_i32_0 = arith.constant 0 : i32
    %c0_i32_1 = arith.constant 0 : i32
    return %c0_i32, %c0_i32_0 : i32, i32
  }
  func.func @transform_9(%arg0: i32) -> (i32, i32) {
    %c0_i32 = arith.constant 0 : i32
    %c0_i32_0 = arith.constant 0 : i32
    return %arg0, %c0_i32 : i32, i32
  }
}

</mosaic_0001>

<llo_original>
// kernel: policy_forward.4
$region0: #{policy_forward.4}
  #allocation0 [shape = 'u32[]', space=smem, size = 0x4, offset = 0x4, fixed_abs, tag = 'smem constant byte address 0x4 - core index']
  #allocation1 [shape = 'u32[144,128]{1,0:T(1,128)}', space=vmem, size = 0x12000, scoped, tag = 'internal scratch']
  %s0 = inlined_call_operand.vmem [shape: bf16[800,192], index: 0, kind: input, shape index: {}]
  %s1 = inlined_call_operand.vmem [shape: bf16[192,8], index: 1, kind: input, shape index: {}]
  %s2 = inlined_call_operand.vmem [shape: f32[1,8], index: 2, kind: input, shape index: {}]
  %s3 = inlined_call_operand.vmem [shape: bf16[800,8], index: 3, kind: output, shape index: {}]
  %s4 = sld [smem:[#allocation0]]
  $region89: #{policy_forward.4} parent=0
    _
  %s6 = ssub.s32 1, %s4
  %s7 = scalar_select 0, %s6, %s4
  $region1: #{policy_forward.4} parent=0
    #allocation2 [shape = 'u8[262144]{0}', space=vmem, size = 0x40000, scoped, tag = 'output window, operand 0']
    loop: start=0, step=1, limit=4
    $region2: #{policy_forward.4} parent=1 // loop_pre_header
      _
    $region3: #{policy_forward.4} parent=1 // loop_header
      %s9 = sphi 0, %s13
      %p10 = scmp.ge.s32.totalorder %s9, 4
      %s19 = sphi 0, %s21
      %s22 = sphi 0, %s19
      %s23 = sphi 0, %s22
      %s39 = sphi 0, %s23
      %s43 = sphi 0, %s43
      %s45 = sphi 0, %s43
      %s46 = sphi 0, %s45
      %s60 = sphi 0, %s46
      %s64 = sphi 0, %s64
      %s66 = sphi 0, %s64
      %s67 = sphi 0, %s66
      %s81 = sphi 0, %s67
      %s87 = sphi 0, %s89
      %s90 = sphi 0, %s87
      %s91 = sphi 0, %s90
      %s107 = sphi 0, %s91
    $region4: #{policy_forward.4} parent=1 // loop_header_branch
      %12 = sbr.rel (%p10) target = $region8
    $region5: #{policy_forward.4} parent=1 // loop_body
      %s14 = ssub.s32 %s9, 1
      %s15 = ssub.s32 %s9, 2
      %s16 = sadd.s32 %s9, 1
      %s17 = ssub.s32 %s9, %s16
      %p18 = scmp.eq.s32.totalorder %s17, 0
      %s20 = sadd.s32 %s19, 1
      %s21 = scalar_select %p18, %s19, %s20
      %p24 = pneg %p18
      %p25 = scmp.eq.s32.totalorder %s9, 1
      %p26 = por %p24, %p25
      %p27 = scmp.ne.s32.totalorder %s19, %s22
      %p28 = scmp.eq.s32.totalorder %s9, 0
      %p29 = por %p27, %p28
      %p30 = scmp.ne.s32.totalorder %s19, %s22
      %p31 = scmp.eq.s32.totalorder %s14, 1
      %p32 = por %p30, %p31
      %p33 = scmp.ne.s32.totalorder %s22, %s23
      %p34 = scmp.eq.s32.totalorder %s14, 0
      %p35 = por %p33, %p34
      %p36 = scmp.ne.s32.totalorder %s22, %s23
      %p37 = scmp.eq.s32.totalorder %s15, 1
      %p38 = por %p36, %p37
      %p40 = scmp.ne.s32.totalorder %s23, %s39
      %p41 = scmp.eq.s32.totalorder %s15, 0
      %p42 = por %p40, %p41
      %s44 = sadd.s32 %s43, 1
      %p47 = scmp.eq.s32.totalorder %s9, 1
      %p48 = scmp.ne.s32.totalorder %s43, %s45
      %p49 = scmp.eq.s32.totalorder %s9, 0
      %p50 = por %p48, %p49
      %p51 = scmp.ne.s32.totalorder %s43, %s45
      %p52 = scmp.eq.s32.totalorder %s14, 1
      %p53 = por %p51, %p52
      %p54 = scmp.ne.s32.totalorder %s45, %s46
      %p55 = scmp.eq.s32.totalorder %s14, 0
      %p56 = por %p54, %p55
      %p57 = scmp.ne.s32.totalorder %s45, %s46
      %p58 = scmp.eq.s32.totalorder %s15, 1
      %p59 = por %p57, %p58
      %p61 = scmp.ne.s32.totalorder %s46, %s60
      %p62 = scmp.eq.s32.totalorder %s15, 0
      %p63 = por %p61, %p62
      %s65 = sadd.s32 %s64, 1
      %p68 = scmp.eq.s32.totalorder %s9, 1
      %p69 = scmp.ne.s32.totalorder %s64, %s66
      %p70 = scmp.eq.s32.totalorder %s9, 0
      %p71 = por %p69, %p70
      %p72 = scmp.ne.s32.totalorder %s64, %s66
      %p73 = scmp.eq.s32.totalorder %s14, 1
      %p74 = por %p72, %p73
      %p75 = scmp.ne.s32.totalorder %s66, %s67
      %p76 = scmp.eq.s32.totalorder %s14, 0
      %p77 = por %p75, %p76
      %p78 = scmp.ne.s32.totalorder %s66, %s67
      %p79 = scmp.eq.s32.totalorder %s15, 1
      %p80 = por %p78, %p79
      %p82 = scmp.ne.s32.totalorder %s67, %s81
      %p83 = scmp.eq.s32.totalorder %s15, 0
      %p84 = por %p82, %p83
      %s85 = ssub.s32 %s9, %s16
      %p86 = scmp.eq.s32.totalorder %s85, 0
      %s88 = sadd.s32 %s87, 1
      %s89 = scalar_select %p86, %s87, %s88
      %p92 = pneg %p86
      %p93 = scmp.eq.s32.totalorder %s9, 1
      %p94 = por %p92, %p93
      %p95 = scmp.ne.s32.totalorder %s87, %s90
      %p96 = scmp.eq.s32.totalorder %s9, 0
      %p97 = por %p95, %p96
      %p98 = scmp.ne.s32.totalorder %s87, %s90
      %p99 = scmp.eq.s32.totalorder %s14, 1
      %p100 = por %p98, %p99
      %p101 = scmp.ne.s32.totalorder %s90, %s91
      %p102 = scmp.eq.s32.totalorder %s14, 0
      %p103 = por %p101, %p102
      %p104 = scmp.ne.s32.totalorder %s90, %s91
      %p105 = scmp.eq.s32.totalorder %s15, 1
      %p106 = por %p104, %p105
      %p108 = scmp.ne.s32.totalorder %s91, %s107
      %p109 = scmp.eq.s32.totalorder %s15, 0
      %p110 = por %p108, %p109
      %p111 = scmp.le.s32.totalorder 1, %s9
      %p112 = scmp.lt.s32.totalorder %s9, 3
      %p113 = pnand %p111, %p112
      %p114 = pneg %p113
      // Predicated region
      $region9: #{policy_forward.4} parent=5 // pred_check
        _
      $region10: #{policy_forward.4} parent=5 // pred_check_branch
        %116 = sbr.rel (%p113) target = $region12
      $region11: #{policy_forward.4} parent=5 // pred_region
        %s117 = ssub.s32 %s9, 1
        // Predicated region
        $region13: #{policy_forward.4} parent=11 // pred_check
          %p118 = pneg %p56
        $region14: #{policy_forward.4} parent=11 // pred_check_branch
          %120 = sbr.rel (%p118) target = $region16
        $region15: #{policy_forward.4} parent=11 // pred_region
          _
        $region16: #{policy_forward.4} parent=11 // pred_fallthru
          _
        // Predicated region
        $region17: #{policy_forward.4} parent=11 // pred_check
          %p121 = pneg %p77
        $region18: #{policy_forward.4} parent=11 // pred_check_branch
          %123 = sbr.rel (%p121) target = $region20
        $region19: #{policy_forward.4} parent=11 // pred_region
          _
        $region20: #{policy_forward.4} parent=11 // pred_fallthru
          _
      $region12: #{policy_forward.4} parent=5 // pred_fallthru
        _
      %p124 = scmp.lt.s32.totalorder %s9, 2
      // Predicated region
      $region21: #{policy_forward.4} parent=5 // pred_check
        %p125 = pneg %p124
      $region22: #{policy_forward.4} parent=5 // pred_check_branch
        %127 = sbr.rel (%p125) target = $region24
      $region23: #{policy_forward.4} parent=5 // pred_region
        // Predicated region
        $region25: #{policy_forward.4} parent=23 // pred_check
          %p128 = pneg %p29
        $region26: #{policy_forward.4} parent=23 // pred_check_branch
          %130 = sbr.rel (%p128) target = $region28
        $region27: #{policy_forward.4} parent=23 // pred_region
          %s131 = smul.u32 64, %s9
          %s132 = ssub.s32 100, %s131
          %p133 = scmp.lt.s32.totalorder %s132, 64
          %s134 = scalar_select %p133, %s132, 64
          %s135 = smul.u32 64, %s134
          %s136 = smul.u32 %s135, 2
          %p137 = scmp.lt.s32.totalorder %s131, 99
          %s138 = scalar_select %p137, %s131, 99
          %s139 = smul.addr %s138, 2
          %s140 = smul.addr %s139, 4
          %s141 = scalar_lea.vmem %s0, %s140
          %s142 = smul.u32 64, %s9
          %s143 = ssub.s32 100, %s142
          %p144 = scmp.lt.s32.totalorder %s143, 64
          %s145 = scalar_select %p144, %s143, 64
          %s146 = smul.u32 64, %s145
          %s147 = smul.u32 %s146, 2
        $region28: #{policy_forward.4} parent=23 // pred_fallthru
          _
      $region24: #{policy_forward.4} parent=5 // pred_fallthru
        _
      %p148 = scmp.le.s32.totalorder 1, %s9
      %p149 = scmp.lt.s32.totalorder %s9, 3
      %p150 = pnand %p148, %p149
      %p151 = pneg %p150
      // Predicated region
      $region29: #{policy_forward.4} parent=5 // pred_check
        _
      $region30: #{policy_forward.4} parent=5 // pred_check_branch
        %153 = sbr.rel (%p150) target = $region32
      $region31: #{policy_forward.4} parent=5 // pred_region
        %s154 = ssub.s32 %s9, 1
        %s155 = smul.u32 64, %s14
        %s156 = ssub.s32 100, %s155
        %p157 = scmp.lt.s32.totalorder %s156, 64
        %s158 = scalar_select %p157, %s156, 64
        %s159 = smul.u32 64, %s158
        %s160 = smul.u32 %s159, 2
        %p161 = scmp.lt.s32.totalorder %s155, 99
        %s162 = scalar_select %p161, %s155, 99
        %s163 = smul.addr %s162, 2
        %s164 = smul.addr %s163, 4
        %s165 = scalar_lea.vmem %s0, %s164
        %p166 = pneg %p35
        %p167 = pneg %p32
        %p168 = pneg %p56
        %p169 = pneg %p53
        %p170 = pneg %p77
        %p171 = pneg %p74
        %p172 = pneg %p103
        %p173 = pneg %p100
        %s174 = sand.u32 %s90, 1
        %s175 = sand.u32 %s90, 1
        %s176 = smul.addr %s175, 256
        %s177 = scalar_lea.vmem [#allocation2], %s176
        %s178 = smul.u32 64, %s14
        %s179 = ssub.s32 100, %s178
        %p180 = scmp.lt.s32.totalorder %s179, 64
        %s181 = scalar_select %p180, %s179, 64
        %s182 = smul.u32 64, %s181
        %s183 = smul.u32 %s182, 2
        %p184 = scmp.lt.s32.totalorder %s178, 99
        %s185 = scalar_select %p184, %s178, 99
        %s186 = smul.addr %s185, 2
        %s187 = smul.addr %s186, 4
        %s188 = scalar_lea.vmem %s0, %s187
        %s189 = smul.u32 64, %s14
        %s190 = ssub.s32 100, %s189
        %p191 = scmp.lt.s32.totalorder %s190, 64
        %s192 = scalar_select %p191, %s190, 64
        %s193 = smul.u32 64, %s192
        %s194 = smul.u32 %s193, 2
        %s195 = smul.u32 64, %s14
        %s196 = ssub.s32 100, %s195
        %p197 = scmp.lt.s32.totalorder %s196, 64
        %s198 = scalar_select %p197, %s196, 64
        %s199 = smul.u32 64, %s198
        %v202 = vld [vmem:[%s188] sm:$0xff]
        %v203 = vld [vmem:[%s188 + $0x8] sm:$0xff]
        %v204 = vld [vmem:[%s188 + $0x10] sm:$0xff]
        %v205 = vld [vmem:[%s188 + $0x18] sm:$0xff]
        %v206 = vld [vmem:[%s188 + $0x20] sm:$0xff]
        %v207 = vld [vmem:[%s188 + $0x28] sm:$0xff]
        %v208 = vld [vmem:[%s188 + $0x30] sm:$0xff]
        %v209 = vld [vmem:[%s188 + $0x38] sm:$0xff]
        %v210 = vld [vmem:[%s188 + $0x40] sm:$0xff]
        %v211 = vld [vmem:[%s188 + $0x48] sm:$0xff]
        %v212 = vld [vmem:[%s188 + $0x50] sm:$0xff]
        %v213 = vld [vmem:[%s188 + $0x58] sm:$0xff]
        %v214 = vld [vmem:[%s188 + $0x60] sm:$0xff]
        %v215 = vld [vmem:[%s188 + $0x68] sm:$0xff]
        %v216 = vld [vmem:[%s188 + $0x70] sm:$0xff]
        %v217 = vld [vmem:[%s188 + $0x78] sm:$0xff]
        %v218 = vld [vmem:[%s188 + $0x80] sm:$0xff]
        %v219 = vld [vmem:[%s188 + $0x88] sm:$0xff]
        %v220 = vld [vmem:[%s188 + $0x90] sm:$0xff]
        %v221 = vld [vmem:[%s188 + $0x98] sm:$0xff]
        %v222 = vld [vmem:[%s188 + $0xa0] sm:$0xff]
        %v223 = vld [vmem:[%s188 + $0xa8] sm:$0xff]
        %v224 = vld [vmem:[%s188 + $0xb0] sm:$0xff]
        %v225 = vld [vmem:[%s188 + $0xb8] sm:$0xff]
        %v226 = vld [vmem:[%s188 + $0xc0] sm:$0xff]
        %v227 = vld [vmem:[%s188 + $0xc8] sm:$0xff]
        %v228 = vld [vmem:[%s188 + $0xd0] sm:$0xff]
        %v229 = vld [vmem:[%s188 + $0xd8] sm:$0xff]
        %v230 = vld [vmem:[%s188 + $0xe0] sm:$0xff]
        %v231 = vld [vmem:[%s188 + $0xe8] sm:$0xff]
        %v232 = vld [vmem:[%s188 + $0xf0] sm:$0xff]
        %v233 = vld [vmem:[%s188 + $0xf8] sm:$0xff]
        %v234 = vld [vmem:[%s188 + $0x100] sm:$0xff]
        %v235 = vld [vmem:[%s188 + $0x108] sm:$0xff]
        %v236 = vld [vmem:[%s188 + $0x110] sm:$0xff]
        %v237 = vld [vmem:[%s188 + $0x118] sm:$0xff]
        %v238 = vld [vmem:[%s188 + $0x120] sm:$0xff]
        %v239 = vld [vmem:[%s188 + $0x128] sm:$0xff]
        %v240 = vld [vmem:[%s188 + $0x130] sm:$0xff]
        %v241 = vld [vmem:[%s188 + $0x138] sm:$0xff]
        %v242 = vld [vmem:[%s188 + $0x140] sm:$0xff]
        %v243 = vld [vmem:[%s188 + $0x148] sm:$0xff]
        %v244 = vld [vmem:[%s188 + $0x150] sm:$0xff]
        %v245 = vld [vmem:[%s188 + $0x158] sm:$0xff]
        %v246 = vld [vmem:[%s188 + $0x160] sm:$0xff]
        %v247 = vld [vmem:[%s188 + $0x168] sm:$0xff]
        %v248 = vld [vmem:[%s188 + $0x170] sm:$0xff]
        %v249 = vld [vmem:[%s188 + $0x178] sm:$0xff]
        %v250 = vld [vmem:[%s188 + $0x180] sm:$0xff]
        %v251 = vld [vmem:[%s188 + $0x188] sm:$0xff]
        %v252 = vld [vmem:[%s188 + $0x190] sm:$0xff]
        %v253 = vld [vmem:[%s188 + $0x198] sm:$0xff]
        %v254 = vld [vmem:[%s188 + $0x1a0] sm:$0xff]
        %v255 = vld [vmem:[%s188 + $0x1a8] sm:$0xff]
        %v256 = vld [vmem:[%s188 + $0x1b0] sm:$0xff]
        %v257 = vld [vmem:[%s188 + $0x1b8] sm:$0xff]
        %v258 = vld [vmem:[%s188 + $0x1c0] sm:$0xff]
        %v259 = vld [vmem:[%s188 + $0x1c8] sm:$0xff]
        %v260 = vld [vmem:[%s188 + $0x1d0] sm:$0xff]
        %v261 = vld [vmem:[%s188 + $0x1d8] sm:$0xff]
        %v262 = vld [vmem:[%s188 + $0x1e0] sm:$0xff]
        %v263 = vld [vmem:[%s188 + $0x1e8] sm:$0xff]
        %v264 = vld [vmem:[%s188 + $0x1f0] sm:$0xff]
        %v265 = vld [vmem:[%s188 + $0x1f8] sm:$0xff]
        %v266 = vmax.bf16 %v202, 0
        %v267 = vmax.bf16 %v203, 0
        %v268 = vmax.bf16 %v204, 0
        %v269 = vmax.bf16 %v205, 0
        %v270 = vmax.bf16 %v206, 0
        %v271 = vmax.bf16 %v207, 0
        %v272 = vmax.bf16 %v208, 0
        %v273 = vmax.bf16 %v209, 0
        %v274 = vmax.bf16 %v210, 0
        %v275 = vmax.bf16 %v211, 0
        %v276 = vmax.bf16 %v212, 0
        %v277 = vmax.bf16 %v213, 0
        %v278 = vmax.bf16 %v214, 0
        %v279 = vmax.bf16 %v215, 0
        %v280 = vmax.bf16 %v216, 0
        %v281 = vmax.bf16 %v217, 0
        %v282 = vmax.bf16 %v218, 0
        %v283 = vmax.bf16 %v219, 0
        %v284 = vmax.bf16 %v220, 0
        %v285 = vmax.bf16 %v221, 0
        %v286 = vmax.bf16 %v222, 0
        %v287 = vmax.bf16 %v223, 0
        %v288 = vmax.bf16 %v224, 0
        %v289 = vmax.bf16 %v225, 0
        %v290 = vmax.bf16 %v226, 0
        %v291 = vmax.bf16 %v227, 0
        %v292 = vmax.bf16 %v228, 0
        %v293 = vmax.bf16 %v229, 0
        %v294 = vmax.bf16 %v230, 0
        %v295 = vmax.bf16 %v231, 0
        %v296 = vmax.bf16 %v232, 0
        %v297 = vmax.bf16 %v233, 0
        %v298 = vmax.bf16 %v234, 0
        %v299 = vmax.bf16 %v235, 0
        %v300 = vmax.bf16 %v236, 0
        %v301 = vmax.bf16 %v237, 0
        %v302 = vmax.bf16 %v238, 0
        %v303 = vmax.bf16 %v239, 0
        %v304 = vmax.bf16 %v240, 0
        %v305 = vmax.bf16 %v241, 0
        %v306 = vmax.bf16 %v242, 0
        %v307 = vmax.bf16 %v243, 0
        %v308 = vmax.bf16 %v244, 0
        %v309 = vmax.bf16 %v245, 0
        %v310 = vmax.bf16 %v246, 0
        %v311 = vmax.bf16 %v247, 0
        %v312 = vmax.bf16 %v248, 0
        %v313 = vmax.bf16 %v249, 0
        %v314 = vmax.bf16 %v250, 0
        %v315 = vmax.bf16 %v251, 0
        %v316 = vmax.bf16 %v252, 0
        %v317 = vmax.bf16 %v253, 0
        %v318 = vmax.bf16 %v254, 0
        %v319 = vmax.bf16 %v255, 0
        %v320 = vmax.bf16 %v256, 0
        %v321 = vmax.bf16 %v257, 0
        %v322 = vmax.bf16 %v258, 0
        %v323 = vmax.bf16 %v259, 0
        %v324 = vmax.bf16 %v260, 0
        %v325 = vmax.bf16 %v261, 0
        %v326 = vmax.bf16 %v262, 0
        %v327 = vmax.bf16 %v263, 0
        %v328 = vmax.bf16 %v264, 0
        %v329 = vmax.bf16 %v265, 0
        %v330 = vmin.bf16 %v266, 1065369472
        %v331 = vmin.bf16 %v267, 1065369472
        %v332 = vmin.bf16 %v268, 1065369472
        %v333 = vmin.bf16 %v269, 1065369472
        %v334 = vmin.bf16 %v270, 1065369472
        %v335 = vmin.bf16 %v271, 1065369472
        %v336 = vmin.bf16 %v272, 1065369472
        %v337 = vmin.bf16 %v273, 1065369472
        %v338 = vmin.bf16 %v274, 1065369472
        %v339 = vmin.bf16 %v275, 1065369472
        %v340 = vmin.bf16 %v276, 1065369472
        %v341 = vmin.bf16 %v277, 1065369472
        %v342 = vmin.bf16 %v278, 1065369472
        %v343 = vmin.bf16 %v279, 1065369472
        %v344 = vmin.bf16 %v280, 1065369472
        %v345 = vmin.bf16 %v281, 1065369472
        %v346 = vmin.bf16 %v282, 1065369472
        %v347 = vmin.bf16 %v283, 1065369472
        %v348 = vmin.bf16 %v284, 1065369472
        %v349 = vmin.bf16 %v285, 1065369472
        %v350 = vmin.bf16 %v286, 1065369472
        %v351 = vmin.bf16 %v287, 1065369472
        %v352 = vmin.bf16 %v288, 1065369472
        %v353 = vmin.bf16 %v289, 1065369472
        %v354 = vmin.bf16 %v290, 1065369472
        %v355 = vmin.bf16 %v291, 1065369472
        %v356 = vmin.bf16 %v292, 1065369472
        %v357 = vmin.bf16 %v293, 1065369472
        %v358 = vmin.bf16 %v294, 1065369472
        %v359 = vmin.bf16 %v295, 1065369472
        %v360 = vmin.bf16 %v296, 1065369472
        %v361 = vmin.bf16 %v297, 1065369472
        %v362 = vmin.bf16 %v298, 1065369472
        %v363 = vmin.bf16 %v299, 1065369472
        %v364 = vmin.bf16 %v300, 1065369472
        %v365 = vmin.bf16 %v301, 1065369472
        %v366 = vmin.bf16 %v302, 1065369472
        %v367 = vmin.bf16 %v303, 1065369472
        %v368 = vmin.bf16 %v304, 1065369472
        %v369 = vmin.bf16 %v305, 1065369472
        %v370 = vmin.bf16 %v306, 1065369472
        %v371 = vmin.bf16 %v307, 1065369472
        %v372 = vmin.bf16 %v308, 1065369472
        %v373 = vmin.bf16 %v309, 1065369472
        %v374 = vmin.bf16 %v310, 1065369472
        %v375 = vmin.bf16 %v311, 1065369472
        %v376 = vmin.bf16 %v312, 1065369472
        %v377 = vmin.bf16 %v313, 1065369472
        %v378 = vmin.bf16 %v314, 1065369472
        %v379 = vmin.bf16 %v315, 1065369472
        %v380 = vmin.bf16 %v316, 1065369472
        %v381 = vmin.bf16 %v317, 1065369472
        %v382 = vmin.bf16 %v318, 1065369472
        %v383 = vmin.bf16 %v319, 1065369472
        %v384 = vmin.bf16 %v320, 1065369472
        %v385 = vmin.bf16 %v321, 1065369472
        %v386 = vmin.bf16 %v322, 1065369472
        %v387 = vmin.bf16 %v323, 1065369472
        %v388 = vmin.bf16 %v324, 1065369472
        %v389 = vmin.bf16 %v325, 1065369472
        %v390 = vmin.bf16 %v326, 1065369472
        %v391 = vmin.bf16 %v327, 1065369472
        %v392 = vmin.bf16 %v328, 1065369472
        %v393 = vmin.bf16 %v329, 1065369472
        %v394 = vld [vmem:[%s1] sm:$0xf]
        %v395 = vld [vmem:[%s1 + $0x4] sm:$0xf]
        %v396 = vld [vmem:[%s1 + $0x8] sm:$0xf]
        %v397 = vld [vmem:[%s1 + $0xc] sm:$0xf]
        %v398 = vld [vmem:[%s1 + $0x10] sm:$0xf]
        %v399 = vld [vmem:[%s1 + $0x14] sm:$0xf]
        %v400 = vld [vmem:[%s1 + $0x18] sm:$0xf]
        %v401 = vld [vmem:[%s1 + $0x1c] sm:$0xf]
        %v402 = vld [vmem:[%s1 + $0x20] sm:$0xf]
        %v403 = vld [vmem:[%s1 + $0x24] sm:$0xf]
        %v404 = vld [vmem:[%s1 + $0x28] sm:$0xf]
        %v405 = vld [vmem:[%s1 + $0x2c] sm:$0xf]
        %v406 = vld [vmem:[%s1 + $0x30] sm:$0xf]
        %v407 = vld [vmem:[%s1 + $0x34] sm:$0xf]
        %v408 = vld [vmem:[%s1 + $0x38] sm:$0xf]
        %v409 = vld [vmem:[%s1 + $0x3c] sm:$0xf]
        %v410 = vld [vmem:[%s1 + $0x40] sm:$0xf]
        %v411 = vld [vmem:[%s1 + $0x44] sm:$0xf]
        %v412 = vld [vmem:[%s1 + $0x48] sm:$0xf]
        %v413 = vld [vmem:[%s1 + $0x4c] sm:$0xf]
        %v414 = vld [vmem:[%s1 + $0x50] sm:$0xf]
        %v415 = vld [vmem:[%s1 + $0x54] sm:$0xf]
        %v416 = vld [vmem:[%s1 + $0x58] sm:$0xf]
        %v417 = vld [vmem:[%s1 + $0x5c] sm:$0xf]
        %v418 = vld [vmem:[%s2] sm:$0x1]
        %v420 = vlaneseq
        %v421 = vshrl.u32 %v420, 7
        %v422 = vsub.s32 0, %v421
        %v423 = vrot.slane %v418, %v422
        %v489 = vunpack.c.l.b16 %v330
        %v490 = vunpack.c.h.b16 %v330
        %v491 = vunpack.c.l.b16 %v331
        %v492 = vunpack.c.h.b16 %v331
        %v493 = vunpack.c.l.b16 %v332
        %v494 = vunpack.c.h.b16 %v332
        %v495 = vunpack.c.l.b16 %v333
        %v496 = vunpack.c.h.b16 %v333
        %v497 = vunpack.c.l.b16 %v334
        %v498 = vunpack.c.h.b16 %v334
        %v499 = vunpack.c.l.b16 %v335
        %v500 = vunpack.c.h.b16 %v335
        %v501 = vunpack.c.l.b16 %v336
        %v502 = vunpack.c.h.b16 %v336
        %v503 = vunpack.c.l.b16 %v337
        %v504 = vunpack.c.h.b16 %v337
        %v505 = vunpack.c.l.b16 %v338
        %v506 = vunpack.c.h.b16 %v338
        %v507 = vunpack.c.l.b16 %v339
        %v508 = vunpack.c.h.b16 %v339
        %v509 = vunpack.c.l.b16 %v340
        %v510 = vunpack.c.h.b16 %v340
        %v511 = vunpack.c.l.b16 %v341
        %v512 = vunpack.c.h.b16 %v341
        %v513 = vunpack.c.l.b16 %v342
        %v514 = vunpack.c.h.b16 %v342
        %v515 = vunpack.c.l.b16 %v343
        %v516 = vunpack.c.h.b16 %v343
        %v517 = vunpack.c.l.b16 %v344
        %v518 = vunpack.c.h.b16 %v344
        %v519 = vunpack.c.l.b16 %v345
        %v520 = vunpack.c.h.b16 %v345
        %v521 = vunpack.c.l.b16 %v346
        %v522 = vunpack.c.h.b16 %v346
        %v523 = vunpack.c.l.b16 %v347
        %v524 = vunpack.c.h.b16 %v347
        %v525 = vunpack.c.l.b16 %v348
        %v526 = vunpack.c.h.b16 %v348
        %v527 = vunpack.c.l.b16 %v349
        %v528 = vunpack.c.h.b16 %v349
        %v529 = vunpack.c.l.b16 %v350
        %v530 = vunpack.c.h.b16 %v350
        %v531 = vunpack.c.l.b16 %v351
        %v532 = vunpack.c.h.b16 %v351
        %v533 = vunpack.c.l.b16 %v352
        %v534 = vunpack.c.h.b16 %v352
        %v535 = vunpack.c.l.b16 %v353
        %v536 = vunpack.c.h.b16 %v353
        %v537 = vunpack.c.l.b16 %v354
        %v538 = vunpack.c.h.b16 %v354
        %v539 = vunpack.c.l.b16 %v355
        %v540 = vunpack.c.h.b16 %v355
        %v541 = vunpack.c.l.b16 %v356
        %v542 = vunpack.c.h.b16 %v356
        %v543 = vunpack.c.l.b16 %v357
        %v544 = vunpack.c.h.b16 %v357
        %v545 = vunpack.c.l.b16 %v358
        %v546 = vunpack.c.h.b16 %v358
        %v547 = vunpack.c.l.b16 %v359
        %v548 = vunpack.c.h.b16 %v359
        %v549 = vunpack.c.l.b16 %v360
        %v550 = vunpack.c.h.b16 %v360
        %v551 = vunpack.c.l.b16 %v361
        %v552 = vunpack.c.h.b16 %v361
        %v553 = vunpack.c.l.b16 %v362
        %v554 = vunpack.c.h.b16 %v362
        %v555 = vunpack.c.l.b16 %v363
        %v556 = vunpack.c.h.b16 %v363
        %v557 = vunpack.c.l.b16 %v364
        %v558 = vunpack.c.h.b16 %v364
        %v559 = vunpack.c.l.b16 %v365
        %v560 = vunpack.c.h.b16 %v365
        %v561 = vunpack.c.l.b16 %v366
        %v562 = vunpack.c.h.b16 %v366
        %v563 = vunpack.c.l.b16 %v367
        %v564 = vunpack.c.h.b16 %v367
        %v565 = vunpack.c.l.b16 %v368
        %v566 = vunpack.c.h.b16 %v368
        %v567 = vunpack.c.l.b16 %v369
        %v568 = vunpack.c.h.b16 %v369
        %v569 = vunpack.c.l.b16 %v370
        %v570 = vunpack.c.h.b16 %v370
        %v571 = vunpack.c.l.b16 %v371
        %v572 = vunpack.c.h.b16 %v371
        %v573 = vunpack.c.l.b16 %v372
        %v574 = vunpack.c.h.b16 %v372
        %v575 = vunpack.c.l.b16 %v373
        %v576 = vunpack.c.h.b16 %v373
        %v577 = vunpack.c.l.b16 %v374
        %v578 = vunpack.c.h.b16 %v374
        %v579 = vunpack.c.l.b16 %v375
        %v580 = vunpack.c.h.b16 %v375
        %v581 = vunpack.c.l.b16 %v376
        %v582 = vunpack.c.h.b16 %v376
        %v583 = vunpack.c.l.b16 %v377
        %v584 = vunpack.c.h.b16 %v377
        %v585 = vunpack.c.l.b16 %v378
        %v586 = vunpack.c.h.b16 %v378
        %v587 = vunpack.c.l.b16 %v379
        %v588 = vunpack.c.h.b16 %v379
        %v589 = vunpack.c.l.b16 %v380
        %v590 = vunpack.c.h.b16 %v380
        %v591 = vunpack.c.l.b16 %v381
        %v592 = vunpack.c.h.b16 %v381
        %v593 = vunpack.c.l.b16 %v382
        %v594 = vunpack.c.h.b16 %v382
        %v595 = vunpack.c.l.b16 %v383
        %v596 = vunpack.c.h.b16 %v383
        %v597 = vunpack.c.l.b16 %v384
        %v598 = vunpack.c.h.b16 %v384
        %v599 = vunpack.c.l.b16 %v385
        %v600 = vunpack.c.h.b16 %v385
        %v601 = vunpack.c.l.b16 %v386
        %v602 = vunpack.c.h.b16 %v386
        %v603 = vunpack.c.l.b16 %v387
        %v604 = vunpack.c.h.b16 %v387
        %v605 = vunpack.c.l.b16 %v388
        %v606 = vunpack.c.h.b16 %v388
        %v607 = vunpack.c.l.b16 %v389
        %v608 = vunpack.c.h.b16 %v389
        %v609 = vunpack.c.l.b16 %v390
        %v610 = vunpack.c.h.b16 %v390
        %v611 = vunpack.c.l.b16 %v391
        %v612 = vunpack.c.h.b16 %v391
        %v613 = vunpack.c.l.b16 %v392
        %v614 = vunpack.c.h.b16 %v392
        %v615 = vunpack.c.l.b16 %v393
        %v616 = vunpack.c.h.b16 %v393
        %v617 = vpack.c.b16 %v491, %v489
        %v618 = vpack.c.b16 %v492, %v490
        %v619 = vpack.c.b16 %v495, %v493
        %v620 = vpack.c.b16 %v496, %v494
        %v621 = vpack.c.b16 %v499, %v497
        %v622 = vpack.c.b16 %v500, %v498
        %v623 = vpack.c.b16 %v503, %v501
        %v624 = vpack.c.b16 %v504, %v502
        %v625 = vpack.c.b16 %v507, %v505
        %v626 = vpack.c.b16 %v508, %v506
        %v627 = vpack.c.b16 %v511, %v509
        %v628 = vpack.c.b16 %v512, %v510
        %v629 = vpack.c.b16 %v515, %v513
        %v630 = vpack.c.b16 %v516, %v514
        %v631 = vpack.c.b16 %v519, %v517
        %v632 = vpack.c.b16 %v520, %v518
        %v633 = vpack.c.b16 %v523, %v521
        %v634 = vpack.c.b16 %v524, %v522
        %v635 = vpack.c.b16 %v527, %v525
        %v636 = vpack.c.b16 %v528, %v526
        %v637 = vpack.c.b16 %v531, %v529
        %v638 = vpack.c.b16 %v532, %v530
        %v639 = vpack.c.b16 %v535, %v533
        %v640 = vpack.c.b16 %v536, %v534
        %v641 = vpack.c.b16 %v539, %v537
        %v642 = vpack.c.b16 %v540, %v538
        %v643 = vpack.c.b16 %v543, %v541
        %v644 = vpack.c.b16 %v544, %v542
        %v645 = vpack.c.b16 %v547, %v545
        %v646 = vpack.c.b16 %v548, %v546
        %v647 = vpack.c.b16 %v551, %v549
        %v648 = vpack.c.b16 %v552, %v550
        %v649 = vpack.c.b16 %v555, %v553
        %v650 = vpack.c.b16 %v556, %v554
        %v651 = vpack.c.b16 %v559, %v557
        %v652 = vpack.c.b16 %v560, %v558
        %v653 = vpack.c.b16 %v563, %v561
        %v654 = vpack.c.b16 %v564, %v562
        %v655 = vpack.c.b16 %v567, %v565
        %v656 = vpack.c.b16 %v568, %v566
        %v657 = vpack.c.b16 %v571, %v569
        %v658 = vpack.c.b16 %v572, %v570
        %v659 = vpack.c.b16 %v575, %v573
        %v660 = vpack.c.b16 %v576, %v574
        %v661 = vpack.c.b16 %v579, %v577
        %v662 = vpack.c.b16 %v580, %v578
        %v663 = vpack.c.b16 %v583, %v581
        %v664 = vpack.c.b16 %v584, %v582
        %v665 = vpack.c.b16 %v587, %v585
        %v666 = vpack.c.b16 %v588, %v586
        %v667 = vpack.c.b16 %v591, %v589
        %v668 = vpack.c.b16 %v592, %v590
        %v669 = vpack.c.b16 %v595, %v593
        %v670 = vpack.c.b16 %v596, %v594
        %v671 = vpack.c.b16 %v599, %v597
        %v672 = vpack.c.b16 %v600, %v598
        %v673 = vpack.c.b16 %v603, %v601
        %v674 = vpack.c.b16 %v604, %v602
        %v675 = vpack.c.b16 %v607, %v605
        %v676 = vpack.c.b16 %v608, %v606
        %v677 = vpack.c.b16 %v611, %v609
        %v678 = vpack.c.b16 %v612, %v610
        %v679 = vpack.c.b16 %v615, %v613
        %v680 = vpack.c.b16 %v616, %v614
        %v737 = vunpack.c.l.b16 %v394
        %v738 = vunpack.c.l.b16 %v395
        %v739 = vunpack.c.l.b16 %v396
        %v740 = vunpack.c.l.b16 %v397
        %v741 = vunpack.c.l.b16 %v398
        %v742 = vunpack.c.l.b16 %v399
        %v743 = vunpack.c.l.b16 %v400
        %v744 = vunpack.c.l.b16 %v401
        %v745 = vunpack.c.l.b16 %v402
        %v746 = vunpack.c.l.b16 %v403
        %v747 = vunpack.c.l.b16 %v404
        %v748 = vunpack.c.l.b16 %v405
        %v749 = vunpack.c.l.b16 %v406
        %v750 = vunpack.c.l.b16 %v407
        %v751 = vunpack.c.l.b16 %v408
        %v752 = vunpack.c.l.b16 %v409
        %v753 = vunpack.c.l.b16 %v410
        %v754 = vunpack.c.l.b16 %v411
        %v755 = vunpack.c.l.b16 %v412
        %v756 = vunpack.c.l.b16 %v413
        %v757 = vunpack.c.l.b16 %v414
        %v758 = vunpack.c.l.b16 %v415
        %v759 = vunpack.c.l.b16 %v416
        %v760 = vunpack.c.l.b16 %v417
        %v761 = vpack.c.b16 %v738, %v737
        %v762 = vpack.c.b16 %v740, %v739
        %v763 = vpack.c.b16 %v742, %v741
        %v764 = vpack.c.b16 %v744, %v743
        %v765 = vpack.c.b16 %v746, %v745
        %v766 = vpack.c.b16 %v748, %v747
        %v767 = vpack.c.b16 %v750, %v749
        %v768 = vpack.c.b16 %v752, %v751
        %v769 = vpack.c.b16 %v754, %v753
        %v770 = vpack.c.b16 %v756, %v755
        %v771 = vpack.c.b16 %v758, %v757
        %v772 = vpack.c.b16 %v760, %v759
        %vm785 = vcmask 523264
        %v787 = vsel %vm785, %v618, 0
        %v790 = vsel %vm785, %v620, 0
        %v793 = vsel %vm785, %v622, 0
        %v796 = vsel %vm785, %v624, 0
        %v799 = vsel %vm785, %v626, 0
        %v802 = vsel %vm785, %v628, 0
        %v805 = vsel %vm785, %v630, 0
        %v808 = vsel %vm785, %v632, 0
        %v811 = vsel %vm785, %v634, 0
        %v814 = vsel %vm785, %v636, 0
        %v817 = vsel %vm785, %v638, 0
        %v820 = vsel %vm785, %v640, 0
        %v823 = vsel %vm785, %v642, 0
        %v826 = vsel %vm785, %v644, 0
        %v829 = vsel %vm785, %v646, 0
        %v832 = vsel %vm785, %v648, 0
        %v835 = vsel %vm785, %v650, 0
        %v838 = vsel %vm785, %v652, 0
        %v841 = vsel %vm785, %v654, 0
        %v844 = vsel %vm785, %v656, 0
        %v847 = vsel %vm785, %v658, 0
        %v850 = vsel %vm785, %v660, 0
        %v853 = vsel %vm785, %v662, 0
        %v856 = vsel %vm785, %v664, 0
        %v859 = vsel %vm785, %v666, 0
        %v862 = vsel %vm785, %v668, 0
        %v865 = vsel %vm785, %v670, 0
        %v868 = vsel %vm785, %v672, 0
        %v871 = vsel %vm785, %v674, 0
        %v874 = vsel %vm785, %v676, 0
        %v877 = vsel %vm785, %v678, 0
        %v880 = vsel %vm785, %v680, 0
        %882 = vmatprep.subr.bf16.mxu0 0
        %883 = vmatpush1.bf16.msra.mxu0 %v768
        %884 = vmatprep.subr.bf16.mxu0 0
        %885 = vmatpush1.bf16.msra.mxu0 %v767
        %886 = vmatprep.subr.bf16.mxu0 0
        %887 = vmatpush1.bf16.msra.mxu0 %v766
        %888 = vmatprep.subr.bf16.mxu0 0
        %889 = vmatpush1.bf16.msra.mxu0 %v765
        %890 = vmatprep.subr.bf16.mxu0 0
        %891 = vmatpush1.bf16.msra.mxu0 %v764
        %892 = vmatprep.subr.bf16.mxu0 0
        %893 = vmatpush1.bf16.msra.mxu0 %v763
        %894 = vmatprep.subr.bf16.mxu0 0
        %895 = vmatpush1.bf16.msra.mxu0 %v762
        %896 = vmatprep.subr.bf16.mxu0 0
        %897 = vmatpush1.bf16.msra.mxu0 %v761
        %898 = vmatprep.subr.bf16.mxu0 0
        %899 = vmatpush2.bf16.msra.mxu0 0
        %900 = vmatprep.subr.bf16.mxu0 0
        %901 = vmatpush2.bf16.msra.mxu0 0
        %902 = vmatprep.subr.bf16.mxu0 0
        %903 = vmatpush2.bf16.msra.mxu0 0
        %904 = vmatprep.subr.bf16.mxu0 0
        %905 = vmatpush2.bf16.msra.mxu0 0
        %906 = vmatprep.subr.bf16.mxu0 0
        %907 = vmatpush2.bf16.msra.mxu0 %v772
        %908 = vmatprep.subr.bf16.mxu0 0
        %909 = vmatpush2.bf16.msra.mxu0 %v771
        %910 = vmatprep.subr.bf16.mxu0 0
        %911 = vmatpush2.bf16.msra.mxu0 %v770
        %912 = vmatprep.subr.bf16.mxu0 0
        %913 = vmatpush2.bf16.msra.mxu0 %v769
        %914 = vmatprep.mubr.bf16.mxu0 %v787
        %915 = vmatmul.mubr.bf16.gmra.mxu0 %v617
        %v916 = vpop.f32.mrf.mxu0
        %v917 = vadd.f32 %v423, %v916
        %v918 = vpop.f32.mrf.mxu0
        %v919 = vpop.f32.mrf.mxu0
        %v920 = vadd.f32 %v423, %v919
        %v921 = vpop.f32.mrf.mxu0
        %922 = vmatprep.mubr.bf16.mxu0 %v790
        %923 = vmatmul.mubr.bf16.gmra.mxu0 %v619
        %v924 = vpop.f32.mrf.mxu0
        %v925 = vadd.f32 %v423, %v924
        %v926 = vpop.f32.mrf.mxu0
        %v927 = vpop.f32.mrf.mxu0
        %v928 = vadd.f32 %v423, %v927
        %v929 = vpop.f32.mrf.mxu0
        %930 = vmatprep.mubr.bf16.mxu0 %v793
        %931 = vmatmul.mubr.bf16.gmra.mxu0 %v621
        %v932 = vpop.f32.mrf.mxu0
        %v933 = vadd.f32 %v423, %v932
        %v934 = vpop.f32.mrf.mxu0
        %v935 = vpop.f32.mrf.mxu0
        %v936 = vadd.f32 %v423, %v935
        %v937 = vpop.f32.mrf.mxu0
        %938 = vmatprep.mubr.bf16.mxu0 %v796
        %939 = vmatmul.mubr.bf16.gmra.mxu0 %v623
        %v940 = vpop.f32.mrf.mxu0
        %v941 = vadd.f32 %v423, %v940
        %v942 = vpop.f32.mrf.mxu0
        %v943 = vpop.f32.mrf.mxu0
        %v944 = vadd.f32 %v423, %v943
        %v945 = vpop.f32.mrf.mxu0
        %946 = vmatprep.mubr.bf16.mxu0 %v799
        %947 = vmatmul.mubr.bf16.gmra.mxu0 %v625
        %v948 = vpop.f32.mrf.mxu0
        %v949 = vadd.f32 %v423, %v948
        %v950 = vpop.f32.mrf.mxu0
        %v951 = vpop.f32.mrf.mxu0
        %v952 = vadd.f32 %v423, %v951
        %v953 = vpop.f32.mrf.mxu0
        %954 = vmatprep.mubr.bf16.mxu0 %v802
        %955 = vmatmul.mubr.bf16.gmra.mxu0 %v627
        %v956 = vpop.f32.mrf.mxu0
        %v957 = vadd.f32 %v423, %v956
        %v958 = vpop.f32.mrf.mxu0
        %v959 = vpop.f32.mrf.mxu0
        %v960 = vadd.f32 %v423, %v959
        %v961 = vpop.f32.mrf.mxu0
        %962 = vmatprep.mubr.bf16.mxu0 %v805
        %963 = vmatmul.mubr.bf16.gmra.mxu0 %v629
        %v964 = vpop.f32.mrf.mxu0
        %v965 = vadd.f32 %v423, %v964
        %v966 = vpop.f32.mrf.mxu0
        %v967 = vpop.f32.mrf.mxu0
        %v968 = vadd.f32 %v423, %v967
        %v969 = vpop.f32.mrf.mxu0
        %970 = vmatprep.mubr.bf16.mxu0 %v808
        %971 = vmatmul.mubr.bf16.gmra.mxu0 %v631
        %v972 = vpop.f32.mrf.mxu0
        %v973 = vadd.f32 %v423, %v972
        %v974 = vpop.f32.mrf.mxu0
        %v975 = vpop.f32.mrf.mxu0
        %v976 = vadd.f32 %v423, %v975
        %v977 = vpop.f32.mrf.mxu0
        %978 = vmatprep.mubr.bf16.mxu0 %v811
        %979 = vmatmul.mubr.bf16.gmra.mxu0 %v633
        %v980 = vpop.f32.mrf.mxu0
        %v981 = vadd.f32 %v423, %v980
        %v982 = vpop.f32.mrf.mxu0
        %v983 = vpop.f32.mrf.mxu0
        %v984 = vadd.f32 %v423, %v983
        %v985 = vpop.f32.mrf.mxu0
        %986 = vmatprep.mubr.bf16.mxu0 %v814
        %987 = vmatmul.mubr.bf16.gmra.mxu0 %v635
        %v988 = vpop.f32.mrf.mxu0
        %v989 = vadd.f32 %v423, %v988
        %v990 = vpop.f32.mrf.mxu0
        %v991 = vpop.f32.mrf.mxu0
        %v992 = vadd.f32 %v423, %v991
        %v993 = vpop.f32.mrf.mxu0
        %994 = vmatprep.mubr.bf16.mxu0 %v817
        %995 = vmatmul.mubr.bf16.gmra.mxu0 %v637
        %v996 = vpop.f32.mrf.mxu0
        %v997 = vadd.f32 %v423, %v996
        %v998 = vpop.f32.mrf.mxu0
        %v999 = vpop.f32.mrf.mxu0
        %v1000 = vadd.f32 %v423, %v999
        %v1001 = vpop.f32.mrf.mxu0
        %1002 = vmatprep.mubr.bf16.mxu0 %v820
        %1003 = vmatmul.mubr.bf16.gmra.mxu0 %v639
        %v1004 = vpop.f32.mrf.mxu0
        %v1005 = vadd.f32 %v423, %v1004
        %v1006 = vpop.f32.mrf.mxu0
        %v1007 = vpop.f32.mrf.mxu0
        %v1008 = vadd.f32 %v423, %v1007
        %v1009 = vpop.f32.mrf.mxu0
        %1010 = vmatprep.mubr.bf16.mxu0 %v823
        %1011 = vmatmul.mubr.bf16.gmra.mxu0 %v641
        %v1012 = vpop.f32.mrf.mxu0
        %v1013 = vadd.f32 %v423, %v1012
        %v1014 = vpop.f32.mrf.mxu0
        %v1015 = vpop.f32.mrf.mxu0
        %v1016 = vadd.f32 %v423, %v1015
        %v1017 = vpop.f32.mrf.mxu0
        %1018 = vmatprep.mubr.bf16.mxu0 %v826
        %1019 = vmatmul.mubr.bf16.gmra.mxu0 %v643
        %v1020 = vpop.f32.mrf.mxu0
        %v1021 = vadd.f32 %v423, %v1020
        %v1022 = vpop.f32.mrf.mxu0
        %v1023 = vpop.f32.mrf.mxu0
        %v1024 = vadd.f32 %v423, %v1023
        %v1025 = vpop.f32.mrf.mxu0
        %1026 = vmatprep.mubr.bf16.mxu0 %v829
        %1027 = vmatmul.mubr.bf16.gmra.mxu0 %v645
        %v1028 = vpop.f32.mrf.mxu0
        %v1029 = vadd.f32 %v423, %v1028
        %v1030 = vpop.f32.mrf.mxu0
        %v1031 = vpop.f32.mrf.mxu0
        %v1032 = vadd.f32 %v423, %v1031
        %v1033 = vpop.f32.mrf.mxu0
        %1034 = vmatprep.mubr.bf16.mxu0 %v832
        %1035 = vmatmul.mubr.bf16.gmra.mxu0 %v647
        %v1036 = vpop.f32.mrf.mxu0
        %v1037 = vadd.f32 %v423, %v1036
        %v1038 = vpop.f32.mrf.mxu0
        %v1039 = vpop.f32.mrf.mxu0
        %v1040 = vadd.f32 %v423, %v1039
        %v1041 = vpop.f32.mrf.mxu0
        %1042 = vmatprep.mubr.bf16.mxu0 %v835
        %1043 = vmatmul.mubr.bf16.gmra.mxu0 %v649
        %v1044 = vpop.f32.mrf.mxu0
        %v1045 = vadd.f32 %v423, %v1044
        %v1046 = vpop.f32.mrf.mxu0
        %v1047 = vpop.f32.mrf.mxu0
        %v1048 = vadd.f32 %v423, %v1047
        %v1049 = vpop.f32.mrf.mxu0
        %1050 = vmatprep.mubr.bf16.mxu0 %v838
        %1051 = vmatmul.mubr.bf16.gmra.mxu0 %v651
        %v1052 = vpop.f32.mrf.mxu0
        %v1053 = vadd.f32 %v423, %v1052
        %v1054 = vpop.f32.mrf.mxu0
        %v1055 = vpop.f32.mrf.mxu0
        %v1056 = vadd.f32 %v423, %v1055
        %v1057 = vpop.f32.mrf.mxu0
        %1058 = vmatprep.mubr.bf16.mxu0 %v841
        %1059 = vmatmul.mubr.bf16.gmra.mxu0 %v653
        %v1060 = vpop.f32.mrf.mxu0
        %v1061 = vadd.f32 %v423, %v1060
        %v1062 = vpop.f32.mrf.mxu0
        %v1063 = vpop.f32.mrf.mxu0
        %v1064 = vadd.f32 %v423, %v1063
        %v1065 = vpop.f32.mrf.mxu0
        %1066 = vmatprep.mubr.bf16.mxu0 %v844
        %1067 = vmatmul.mubr.bf16.gmra.mxu0 %v655
        %v1068 = vpop.f32.mrf.mxu0
        %v1069 = vadd.f32 %v423, %v1068
        %v1070 = vpop.f32.mrf.mxu0
        %v1071 = vpop.f32.mrf.mxu0
        %v1072 = vadd.f32 %v423, %v1071
        %v1073 = vpop.f32.mrf.mxu0
        %1074 = vmatprep.mubr.bf16.mxu0 %v847
        %1075 = vmatmul.mubr.bf16.gmra.mxu0 %v657
        %v1076 = vpop.f32.mrf.mxu0
        %v1077 = vadd.f32 %v423, %v1076
        %v1078 = vpop.f32.mrf.mxu0
        %v1079 = vpop.f32.mrf.mxu0
        %v1080 = vadd.f32 %v423, %v1079
        %v1081 = vpop.f32.mrf.mxu0
        %1082 = vmatprep.mubr.bf16.mxu0 %v850
        %1083 = vmatmul.mubr.bf16.gmra.mxu0 %v659
        %v1084 = vpop.f32.mrf.mxu0
        %v1085 = vadd.f32 %v423, %v1084
        %v1086 = vpop.f32.mrf.mxu0
        %v1087 = vpop.f32.mrf.mxu0
        %v1088 = vadd.f32 %v423, %v1087
        %v1089 = vpop.f32.mrf.mxu0
        %1090 = vmatprep.mubr.bf16.mxu0 %v853
        %1091 = vmatmul.mubr.bf16.gmra.mxu0 %v661
        %v1092 = vpop.f32.mrf.mxu0
        %v1093 = vadd.f32 %v423, %v1092
        %v1094 = vpop.f32.mrf.mxu0
        %v1095 = vpop.f32.mrf.mxu0
        %v1096 = vadd.f32 %v423, %v1095
        %v1097 = vpop.f32.mrf.mxu0
        %1098 = vmatprep.mubr.bf16.mxu0 %v856
        %1099 = vmatmul.mubr.bf16.gmra.mxu0 %v663
        %v1100 = vpop.f32.mrf.mxu0
        %v1101 = vadd.f32 %v423, %v1100
        %v1102 = vpop.f32.mrf.mxu0
        %v1103 = vpop.f32.mrf.mxu0
        %v1104 = vadd.f32 %v423, %v1103
        %v1105 = vpop.f32.mrf.mxu0
        %1106 = vmatprep.mubr.bf16.mxu0 %v859
        %1107 = vmatmul.mubr.bf16.gmra.mxu0 %v665
        %v1108 = vpop.f32.mrf.mxu0
        %v1109 = vadd.f32 %v423, %v1108
        %v1110 = vpop.f32.mrf.mxu0
        %v1111 = vpop.f32.mrf.mxu0
        %v1112 = vadd.f32 %v423, %v1111
        %v1113 = vpop.f32.mrf.mxu0
        %1114 = vmatprep.mubr.bf16.mxu0 %v862
        %1115 = vmatmul.mubr.bf16.gmra.mxu0 %v667
        %v1116 = vpop.f32.mrf.mxu0
        %v1117 = vadd.f32 %v423, %v1116
        %v1118 = vpop.f32.mrf.mxu0
        %v1119 = vpop.f32.mrf.mxu0
        %v1120 = vadd.f32 %v423, %v1119
        %v1121 = vpop.f32.mrf.mxu0
        %1122 = vmatprep.mubr.bf16.mxu0 %v865
        %1123 = vmatmul.mubr.bf16.gmra.mxu0 %v669
        %v1124 = vpop.f32.mrf.mxu0
        %v1125 = vadd.f32 %v423, %v1124
        %v1126 = vpop.f32.mrf.mxu0
        %v1127 = vpop.f32.mrf.mxu0
        %v1128 = vadd.f32 %v423, %v1127
        %v1129 = vpop.f32.mrf.mxu0
        %1130 = vmatprep.mubr.bf16.mxu0 %v868
        %1131 = vmatmul.mubr.bf16.gmra.mxu0 %v671
        %v1132 = vpop.f32.mrf.mxu0
        %v1133 = vadd.f32 %v423, %v1132
        %v1134 = vpop.f32.mrf.mxu0
        %v1135 = vpop.f32.mrf.mxu0
        %v1136 = vadd.f32 %v423, %v1135
        %v1137 = vpop.f32.mrf.mxu0
        %1138 = vmatprep.mubr.bf16.mxu0 %v871
        %1139 = vmatmul.mubr.bf16.gmra.mxu0 %v673
        %v1140 = vpop.f32.mrf.mxu0
        %v1141 = vadd.f32 %v423, %v1140
        %v1142 = vpop.f32.mrf.mxu0
        %v1143 = vpop.f32.mrf.mxu0
        %v1144 = vadd.f32 %v423, %v1143
        %v1145 = vpop.f32.mrf.mxu0
        %1146 = vmatprep.mubr.bf16.mxu0 %v874
        %1147 = vmatmul.mubr.bf16.gmra.mxu0 %v675
        %v1148 = vpop.f32.mrf.mxu0
        %v1149 = vadd.f32 %v423, %v1148
        %v1150 = vpop.f32.mrf.mxu0
        %v1151 = vpop.f32.mrf.mxu0
        %v1152 = vadd.f32 %v423, %v1151
        %v1153 = vpop.f32.mrf.mxu0
        %1154 = vmatprep.mubr.bf16.mxu0 %v877
        %1155 = vmatmul.mubr.bf16.gmra.mxu0 %v677
        %v1156 = vpop.f32.mrf.mxu0
        %v1157 = vadd.f32 %v423, %v1156
        %v1158 = vpop.f32.mrf.mxu0
        %v1159 = vpop.f32.mrf.mxu0
        %v1160 = vadd.f32 %v423, %v1159
        %v1161 = vpop.f32.mrf.mxu0
        %1162 = vmatprep.mubr.bf16.mxu0 %v880
        %1163 = vmatmul.mubr.bf16.gmra.mxu0 %v679
        %v1164 = vpop.f32.mrf.mxu0
        %v1165 = vadd.f32 %v423, %v1164
        %v1166 = vpop.f32.mrf.mxu0
        %v1167 = vpop.f32.mrf.mxu0
        %v1168 = vadd.f32 %v423, %v1167
        %v1169 = vpop.f32.mrf.mxu0
        %1170 = vdwg.mxu0
        %v1171 = vmax.f32 %v917, 0.0
        %v1172 = vmax.f32 %v920, 0.0
        %v1173 = vmax.f32 %v925, 0.0
        %v1174 = vmax.f32 %v928, 0.0
        %v1175 = vmax.f32 %v933, 0.0
        %v1176 = vmax.f32 %v936, 0.0
        %v1177 = vmax.f32 %v941, 0.0
        %v1178 = vmax.f32 %v944, 0.0
        %v1179 = vmax.f32 %v949, 0.0
        %v1180 = vmax.f32 %v952, 0.0
        %v1181 = vmax.f32 %v957, 0.0
        %v1182 = vmax.f32 %v960, 0.0
        %v1183 = vmax.f32 %v965, 0.0
        %v1184 = vmax.f32 %v968, 0.0
        %v1185 = vmax.f32 %v973, 0.0
        %v1186 = vmax.f32 %v976, 0.0
        %v1187 = vmax.f32 %v981, 0.0
        %v1188 = vmax.f32 %v984, 0.0
        %v1189 = vmax.f32 %v989, 0.0
        %v1190 = vmax.f32 %v992, 0.0
        %v1191 = vmax.f32 %v997, 0.0
        %v1192 = vmax.f32 %v1000, 0.0
        %v1193 = vmax.f32 %v1005, 0.0
        %v1194 = vmax.f32 %v1008, 0.0
        %v1195 = vmax.f32 %v1013, 0.0
        %v1196 = vmax.f32 %v1016, 0.0
        %v1197 = vmax.f32 %v1021, 0.0
        %v1198 = vmax.f32 %v1024, 0.0
        %v1199 = vmax.f32 %v1029, 0.0
        %v1200 = vmax.f32 %v1032, 0.0
        %v1201 = vmax.f32 %v1037, 0.0
        %v1202 = vmax.f32 %v1040, 0.0
        %v1203 = vmax.f32 %v1045, 0.0
        %v1204 = vmax.f32 %v1048, 0.0
        %v1205 = vmax.f32 %v1053, 0.0
        %v1206 = vmax.f32 %v1056, 0.0
        %v1207 = vmax.f32 %v1061, 0.0
        %v1208 = vmax.f32 %v1064, 0.0
        %v1209 = vmax.f32 %v1069, 0.0
        %v1210 = vmax.f32 %v1072, 0.0
        %v1211 = vmax.f32 %v1077, 0.0
        %v1212 = vmax.f32 %v1080, 0.0
        %v1213 = vmax.f32 %v1085, 0.0
        %v1214 = vmax.f32 %v1088, 0.0
        %v1215 = vmax.f32 %v1093, 0.0
        %v1216 = vmax.f32 %v1096, 0.0
        %v1217 = vmax.f32 %v1101, 0.0
        %v1218 = vmax.f32 %v1104, 0.0
        %v1219 = vmax.f32 %v1109, 0.0
        %v1220 = vmax.f32 %v1112, 0.0
        %v1221 = vmax.f32 %v1117, 0.0
        %v1222 = vmax.f32 %v1120, 0.0
        %v1223 = vmax.f32 %v1125, 0.0
        %v1224 = vmax.f32 %v1128, 0.0
        %v1225 = vmax.f32 %v1133, 0.0
        %v1226 = vmax.f32 %v1136, 0.0
        %v1227 = vmax.f32 %v1141, 0.0
        %v1228 = vmax.f32 %v1144, 0.0
        %v1229 = vmax.f32 %v1149, 0.0
        %v1230 = vmax.f32 %v1152, 0.0
        %v1231 = vmax.f32 %v1157, 0.0
        %v1232 = vmax.f32 %v1160, 0.0
        %v1233 = vmax.f32 %v1165, 0.0
        %v1234 = vmax.f32 %v1168, 0.0
        %v1235 = vpack.c.bf16 %v1172, %v1171
        %v1236 = vpack.c.bf16 %v1174, %v1173
        %v1237 = vpack.c.bf16 %v1176, %v1175
        %v1238 = vpack.c.bf16 %v1178, %v1177
        %v1239 = vpack.c.bf16 %v1180, %v1179
        %v1240 = vpack.c.bf16 %v1182, %v1181
        %v1241 = vpack.c.bf16 %v1184, %v1183
        %v1242 = vpack.c.bf16 %v1186, %v1185
        %v1243 = vpack.c.bf16 %v1188, %v1187
        %v1244 = vpack.c.bf16 %v1190, %v1189
        %v1245 = vpack.c.bf16 %v1192, %v1191
        %v1246 = vpack.c.bf16 %v1194, %v1193
        %v1247 = vpack.c.bf16 %v1196, %v1195
        %v1248 = vpack.c.bf16 %v1198, %v1197
        %v1249 = vpack.c.bf16 %v1200, %v1199
        %v1250 = vpack.c.bf16 %v1202, %v1201
        %v1251 = vpack.c.bf16 %v1204, %v1203
        %v1252 = vpack.c.bf16 %v1206, %v1205
        %v1253 = vpack.c.bf16 %v1208, %v1207
        %v1254 = vpack.c.bf16 %v1210, %v1209
        %v1255 = vpack.c.bf16 %v1212, %v1211
        %v1256 = vpack.c.bf16 %v1214, %v1213
        %v1257 = vpack.c.bf16 %v1216, %v1215
        %v1258 = vpack.c.bf16 %v1218, %v1217
        %v1259 = vpack.c.bf16 %v1220, %v1219
        %v1260 = vpack.c.bf16 %v1222, %v1221
        %v1261 = vpack.c.bf16 %v1224, %v1223
        %v1262 = vpack.c.bf16 %v1226, %v1225
        %v1263 = vpack.c.bf16 %v1228, %v1227
        %v1264 = vpack.c.bf16 %v1230, %v1229
        %v1265 = vpack.c.bf16 %v1232, %v1231
        %v1266 = vpack.c.bf16 %v1234, %v1233
        %v1299 = vunpack.c.l.b16 %v1235
        %v1300 = vunpack.c.h.b16 %v1235
        %v1301 = vunpack.c.l.b16 %v1236
        %v1302 = vunpack.c.h.b16 %v1236
        %v1303 = vunpack.c.l.b16 %v1237
        %v1304 = vunpack.c.h.b16 %v1237
        %v1305 = vunpack.c.l.b16 %v1238
        %v1306 = vunpack.c.h.b16 %v1238
        %v1307 = vunpack.c.l.b16 %v1239
        %v1308 = vunpack.c.h.b16 %v1239
        %v1309 = vunpack.c.l.b16 %v1240
        %v1310 = vunpack.c.h.b16 %v1240
        %v1311 = vunpack.c.l.b16 %v1241
        %v1312 = vunpack.c.h.b16 %v1241
        %v1313 = vunpack.c.l.b16 %v1242
        %v1314 = vunpack.c.h.b16 %v1242
        %v1315 = vunpack.c.l.b16 %v1243
        %v1316 = vunpack.c.h.b16 %v1243
        %v1317 = vunpack.c.l.b16 %v1244
        %v1318 = vunpack.c.h.b16 %v1244
        %v1319 = vunpack.c.l.b16 %v1245
        %v1320 = vunpack.c.h.b16 %v1245
        %v1321 = vunpack.c.l.b16 %v1246
        %v1322 = vunpack.c.h.b16 %v1246
        %v1323 = vunpack.c.l.b16 %v1247
        %v1324 = vunpack.c.h.b16 %v1247
        %v1325 = vunpack.c.l.b16 %v1248
        %v1326 = vunpack.c.h.b16 %v1248
        %v1327 = vunpack.c.l.b16 %v1249
        %v1328 = vunpack.c.h.b16 %v1249
        %v1329 = vunpack.c.l.b16 %v1250
        %v1330 = vunpack.c.h.b16 %v1250
        %v1331 = vunpack.c.l.b16 %v1251
        %v1332 = vunpack.c.h.b16 %v1251
        %v1333 = vunpack.c.l.b16 %v1252
        %v1334 = vunpack.c.h.b16 %v1252
        %v1335 = vunpack.c.l.b16 %v1253
        %v1336 = vunpack.c.h.b16 %v1253
        %v1337 = vunpack.c.l.b16 %v1254
        %v1338 = vunpack.c.h.b16 %v1254
        %v1339 = vunpack.c.l.b16 %v1255
        %v1340 = vunpack.c.h.b16 %v1255
        %v1341 = vunpack.c.l.b16 %v1256
        %v1342 = vunpack.c.h.b16 %v1256
        %v1343 = vunpack.c.l.b16 %v1257
        %v1344 = vunpack.c.h.b16 %v1257
        %v1345 = vunpack.c.l.b16 %v1258
        %v1346 = vunpack.c.h.b16 %v1258
        %v1347 = vunpack.c.l.b16 %v1259
        %v1348 = vunpack.c.h.b16 %v1259
        %v1349 = vunpack.c.l.b16 %v1260
        %v1350 = vunpack.c.h.b16 %v1260
        %v1351 = vunpack.c.l.b16 %v1261
        %v1352 = vunpack.c.h.b16 %v1261
        %v1353 = vunpack.c.l.b16 %v1262
        %v1354 = vunpack.c.h.b16 %v1262
        %v1355 = vunpack.c.l.b16 %v1263
        %v1356 = vunpack.c.h.b16 %v1263
        %v1357 = vunpack.c.l.b16 %v1264
        %v1358 = vunpack.c.h.b16 %v1264
        %v1359 = vunpack.c.l.b16 %v1265
        %v1360 = vunpack.c.h.b16 %v1265
        %v1361 = vunpack.c.l.b16 %v1266
        %v1362 = vunpack.c.h.b16 %v1266
        %v1363 = vpack.c.b16 %v1299, %v1299
        %v1364 = vpack.c.b16 %v1300, %v1300
        %v1365 = vpack.c.b16 %v1301, %v1301
        %v1366 = vpack.c.b16 %v1302, %v1302
        %v1367 = vpack.c.b16 %v1303, %v1303
        %v1368 = vpack.c.b16 %v1304, %v1304
        %v1369 = vpack.c.b16 %v1305, %v1305
        %v1370 = vpack.c.b16 %v1306, %v1306
        %v1371 = vpack.c.b16 %v1307, %v1307
        %v1372 = vpack.c.b16 %v1308, %v1308
        %v1373 = vpack.c.b16 %v1309, %v1309
        %v1374 = vpack.c.b16 %v1310, %v1310
        %v1375 = vpack.c.b16 %v1311, %v1311
        %v1376 = vpack.c.b16 %v1312, %v1312
        %v1377 = vpack.c.b16 %v1313, %v1313
        %v1378 = vpack.c.b16 %v1314, %v1314
        %v1379 = vpack.c.b16 %v1315, %v1315
        %v1380 = vpack.c.b16 %v1316, %v1316
        %v1381 = vpack.c.b16 %v1317, %v1317
        %v1382 = vpack.c.b16 %v1318, %v1318
        %v1383 = vpack.c.b16 %v1319, %v1319
        %v1384 = vpack.c.b16 %v1320, %v1320
        %v1385 = vpack.c.b16 %v1321, %v1321
        %v1386 = vpack.c.b16 %v1322, %v1322
        %v1387 = vpack.c.b16 %v1323, %v1323
        %v1388 = vpack.c.b16 %v1324, %v1324
        %v1389 = vpack.c.b16 %v1325, %v1325
        %v1390 = vpack.c.b16 %v1326, %v1326
        %v1391 = vpack.c.b16 %v1327, %v1327
        %v1392 = vpack.c.b16 %v1328, %v1328
        %v1393 = vpack.c.b16 %v1329, %v1329
        %v1394 = vpack.c.b16 %v1330, %v1330
        %v1395 = vpack.c.b16 %v1331, %v1331
        %v1396 = vpack.c.b16 %v1332, %v1332
        %v1397 = vpack.c.b16 %v1333, %v1333
        %v1398 = vpack.c.b16 %v1334, %v1334
        %v1399 = vpack.c.b16 %v1335, %v1335
        %v1400 = vpack.c.b16 %v1336, %v1336
        %v1401 = vpack.c.b16 %v1337, %v1337
        %v1402 = vpack.c.b16 %v1338, %v1338
        %v1403 = vpack.c.b16 %v1339, %v1339
        %v1404 = vpack.c.b16 %v1340, %v1340
        %v1405 = vpack.c.b16 %v1341, %v1341
        %v1406 = vpack.c.b16 %v1342, %v1342
        %v1407 = vpack.c.b16 %v1343, %v1343
        %v1408 = vpack.c.b16 %v1344, %v1344
        %v1409 = vpack.c.b16 %v1345, %v1345
        %v1410 = vpack.c.b16 %v1346, %v1346
        %v1411 = vpack.c.b16 %v1347, %v1347
        %v1412 = vpack.c.b16 %v1348, %v1348
        %v1413 = vpack.c.b16 %v1349, %v1349
        %v1414 = vpack.c.b16 %v1350, %v1350
        %v1415 = vpack.c.b16 %v1351, %v1351
        %v1416 = vpack.c.b16 %v1352, %v1352
        %v1417 = vpack.c.b16 %v1353, %v1353
        %v1418 = vpack.c.b16 %v1354, %v1354
        %v1419 = vpack.c.b16 %v1355, %v1355
        %v1420 = vpack.c.b16 %v1356, %v1356
        %v1421 = vpack.c.b16 %v1357, %v1357
        %v1422 = vpack.c.b16 %v1358, %v1358
        %v1423 = vpack.c.b16 %v1359, %v1359
        %v1424 = vpack.c.b16 %v1360, %v1360
        %v1425 = vpack.c.b16 %v1361, %v1361
        %v1426 = vpack.c.b16 %v1362, %v1362
        %vm1491 = vcmask 60416
        %1492 = vst.msk [vmem:[%s177] sm:$0xf] %vm1491, %v1363
        %1493 = vst.msk [vmem:[%s177 + $0x4] sm:$0xf] %vm1491, %v1364
        %1494 = vst.msk [vmem:[%s177 + $0x8] sm:$0xf] %vm1491, %v1365
        %1495 = vst.msk [vmem:[%s177 + $0xc] sm:$0xf] %vm1491, %v1366
        %1496 = vst.msk [vmem:[%s177 + $0x10] sm:$0xf] %vm1491, %v1367
        %1497 = vst.msk [vmem:[%s177 + $0x14] sm:$0xf] %vm1491, %v1368
        %1498 = vst.msk [vmem:[%s177 + $0x18] sm:$0xf] %vm1491, %v1369
        %1499 = vst.msk [vmem:[%s177 + $0x1c] sm:$0xf] %vm1491, %v1370
        %1500 = vst.msk [vmem:[%s177 + $0x20] sm:$0xf] %vm1491, %v1371
        %1501 = vst.msk [vmem:[%s177 + $0x24] sm:$0xf] %vm1491, %v1372
        %1502 = vst.msk [vmem:[%s177 + $0x28] sm:$0xf] %vm1491, %v1373
        %1503 = vst.msk [vmem:[%s177 + $0x2c] sm:$0xf] %vm1491, %v1374
        %1504 = vst.msk [vmem:[%s177 + $0x30] sm:$0xf] %vm1491, %v1375
        %1505 = vst.msk [vmem:[%s177 + $0x34] sm:$0xf] %vm1491, %v1376
        %1506 = vst.msk [vmem:[%s177 + $0x38] sm:$0xf] %vm1491, %v1377
        %1507 = vst.msk [vmem:[%s177 + $0x3c] sm:$0xf] %vm1491, %v1378
        %1508 = vst.msk [vmem:[%s177 + $0x40] sm:$0xf] %vm1491, %v1379
        %1509 = vst.msk [vmem:[%s177 + $0x44] sm:$0xf] %vm1491, %v1380
        %1510 = vst.msk [vmem:[%s177 + $0x48] sm:$0xf] %vm1491, %v1381
        %1511 = vst.msk [vmem:[%s177 + $0x4c] sm:$0xf] %vm1491, %v1382
        %1512 = vst.msk [vmem:[%s177 + $0x50] sm:$0xf] %vm1491, %v1383
        %1513 = vst.msk [vmem:[%s177 + $0x54] sm:$0xf] %vm1491, %v1384
        %1514 = vst.msk [vmem:[%s177 + $0x58] sm:$0xf] %vm1491, %v1385
        %1515 = vst.msk [vmem:[%s177 + $0x5c] sm:$0xf] %vm1491, %v1386
        %1516 = vst.msk [vmem:[%s177 + $0x60] sm:$0xf] %vm1491, %v1387
        %1517 = vst.msk [vmem:[%s177 + $0x64] sm:$0xf] %vm1491, %v1388
        %1518 = vst.msk [vmem:[%s177 + $0x68] sm:$0xf] %vm1491, %v1389
        %1519 = vst.msk [vmem:[%s177 + $0x6c] sm:$0xf] %vm1491, %v1390
        %1520 = vst.msk [vmem:[%s177 + $0x70] sm:$0xf] %vm1491, %v1391
        %1521 = vst.msk [vmem:[%s177 + $0x74] sm:$0xf] %vm1491, %v1392
        %1522 = vst.msk [vmem:[%s177 + $0x78] sm:$0xf] %vm1491, %v1393
        %1523 = vst.msk [vmem:[%s177 + $0x7c] sm:$0xf] %vm1491, %v1394
        %1524 = vst.msk [vmem:[%s177 + $0x80] sm:$0xf] %vm1491, %v1395
        %1525 = vst.msk [vmem:[%s177 + $0x84] sm:$0xf] %vm1491, %v1396
        %1526 = vst.msk [vmem:[%s177 + $0x88] sm:$0xf] %vm1491, %v1397
        %1527 = vst.msk [vmem:[%s177 + $0x8c] sm:$0xf] %vm1491, %v1398
        %1528 = vst.msk [vmem:[%s177 + $0x90] sm:$0xf] %vm1491, %v1399
        %1529 = vst.msk [vmem:[%s177 + $0x94] sm:$0xf] %vm1491, %v1400
        %1530 = vst.msk [vmem:[%s177 + $0x98] sm:$0xf] %vm1491, %v1401
        %1531 = vst.msk [vmem:[%s177 + $0x9c] sm:$0xf] %vm1491, %v1402
        %1532 = vst.msk [vmem:[%s177 + $0xa0] sm:$0xf] %vm1491, %v1403
        %1533 = vst.msk [vmem:[%s177 + $0xa4] sm:$0xf] %vm1491, %v1404
        %1534 = vst.msk [vmem:[%s177 + $0xa8] sm:$0xf] %vm1491, %v1405
        %1535 = vst.msk [vmem:[%s177 + $0xac] sm:$0xf] %vm1491, %v1406
        %1536 = vst.msk [vmem:[%s177 + $0xb0] sm:$0xf] %vm1491, %v1407
        %1537 = vst.msk [vmem:[%s177 + $0xb4] sm:$0xf] %vm1491, %v1408
        %1538 = vst.msk [vmem:[%s177 + $0xb8] sm:$0xf] %vm1491, %v1409
        %1539 = vst.msk [vmem:[%s177 + $0xbc] sm:$0xf] %vm1491, %v1410
        %1540 = vst.msk [vmem:[%s177 + $0xc0] sm:$0xf] %vm1491, %v1411
        %1541 = vst.msk [vmem:[%s177 + $0xc4] sm:$0xf] %vm1491, %v1412
        %1542 = vst.msk [vmem:[%s177 + $0xc8] sm:$0xf] %vm1491, %v1413
        %1543 = vst.msk [vmem:[%s177 + $0xcc] sm:$0xf] %vm1491, %v1414
        %1544 = vst.msk [vmem:[%s177 + $0xd0] sm:$0xf] %vm1491, %v1415
        %1545 = vst.msk [vmem:[%s177 + $0xd4] sm:$0xf] %vm1491, %v1416
        %1546 = vst.msk [vmem:[%s177 + $0xd8] sm:$0xf] %vm1491, %v1417
        %1547 = vst.msk [vmem:[%s177 + $0xdc] sm:$0xf] %vm1491, %v1418
        %1548 = vst.msk [vmem:[%s177 + $0xe0] sm:$0xf] %vm1491, %v1419
        %1549 = vst.msk [vmem:[%s177 + $0xe4] sm:$0xf] %vm1491, %v1420
        %1550 = vst.msk [vmem:[%s177 + $0xe8] sm:$0xf] %vm1491, %v1421
        %1551 = vst.msk [vmem:[%s177 + $0xec] sm:$0xf] %vm1491, %v1422
        %1552 = vst.msk [vmem:[%s177 + $0xf0] sm:$0xf] %vm1491, %v1423
        %1553 = vst.msk [vmem:[%s177 + $0xf4] sm:$0xf] %vm1491, %v1424
        %1554 = vst.msk [vmem:[%s177 + $0xf8] sm:$0xf] %vm1491, %v1425
        %1555 = vst.msk [vmem:[%s177 + $0xfc] sm:$0xf] %vm1491, %v1426
        %s1556 = sand.u32 %s90, 1
        %s1557 = sand.u32 %s90, 1
        %s1558 = smul.addr %s1557, 256
        %s1559 = scalar_lea.vmem [#allocation2], %s1558
        // Predicated region
        $region33: #{policy_forward.4} parent=31 // pred_check
          %p1560 = pneg %p100
        $region34: #{policy_forward.4} parent=31 // pred_check_branch
          %1562 = sbr.rel (%p1560) target = $region36
        $region35: #{policy_forward.4} parent=31 // pred_region
          %s1563 = smul.u32 64, %s14
          %s1564 = ssub.s32 100, %s1563
          %p1565 = scmp.lt.s32.totalorder %s1564, 64
          %s1566 = scalar_select %p1565, %s1564, 64
          %s1567 = smul.u32 64, %s1566
          %p1568 = scmp.ne.s32.totalorder 0, %s1567
          %s1569 = smul.addr %s1563, 4
          %s1570 = scalar_lea.vmem %s3, %s1569
          // Predicated region
          $region37: #{policy_forward.4} parent=35 // pred_check
            %p1571 = pneg %p1568
          $region38: #{policy_forward.4} parent=35 // pred_check_branch
            %1573 = sbr.rel (%p1571) target = $region40
          $region39: #{policy_forward.4} parent=35 // pred_region
            // Predicated region
            $region41: #{policy_forward.4} parent=39 // pred_check
              _
            $region42: #{policy_forward.4} parent=39 // pred_check_branch
              %1575 = sbr.rel target = $region44
            $region43: #{policy_forward.4} parent=39 // pred_region
              // Predicated region
              $region63: #{policy_forward.4} parent=43 // pred_check
                _
              $region64: #{policy_forward.4} parent=43 // pred_check_branch
                %1751 = sbr.rel (0) target = $region66
              $region65: #{policy_forward.4} parent=43 // pred_region
                %s1753 = ssub.s32 16, 1
                %s1754 = sshrl.u32 %s1566, 6
                // While loop
                $region67: #{policy_forward.4} parent=65 // loop_pre_header
                  _
                $region68: #{policy_forward.4} parent=65 // loop_header
                  %s1756 = sphi 0, %s1758
                  %p1757 = scmp.ge.s32.totalorder %s1756, %s1754
                  %s1761 = sphi 0, %s1894
                  %s1762 = sphi %s1559, %s1897
                  %s1763 = sphi %s1570, %s1898
                $region69: #{policy_forward.4} parent=65 // loop_header_branch
                  %1760 = sbr.rel (%p1757) target = $region73
                $region70: #{policy_forward.4} parent=65 // loop_body
                  %v1764 = vld [vmem:[%s1762] sm:%s1753]
                  %1765 = vst [vmem:[%s1763] sm:%s1753] %v1764
                  %v1766 = vld [vmem:[%s1762 + $0x4] sm:%s1753]
                  %1767 = vst [vmem:[%s1763 + $0x4] sm:%s1753] %v1766
                  %v1768 = vld [vmem:[%s1762 + $0x8] sm:%s1753]
                  %1769 = vst [vmem:[%s1763 + $0x8] sm:%s1753] %v1768
                  %v1770 = vld [vmem:[%s1762 + $0xc] sm:%s1753]
                  %1771 = vst [vmem:[%s1763 + $0xc] sm:%s1753] %v1770
                  %v1772 = vld [vmem:[%s1762 + $0x10] sm:%s1753]
                  %1773 = vst [vmem:[%s1763 + $0x10] sm:%s1753] %v1772
                  %v1774 = vld [vmem:[%s1762 + $0x14] sm:%s1753]
                  %1775 = vst [vmem:[%s1763 + $0x14] sm:%s1753] %v1774
                  %v1776 = vld [vmem:[%s1762 + $0x18] sm:%s1753]
                  %1777 = vst [vmem:[%s1763 + $0x18] sm:%s1753] %v1776
                  %v1778 = vld [vmem:[%s1762 + $0x1c] sm:%s1753]
                  %1779 = vst [vmem:[%s1763 + $0x1c] sm:%s1753] %v1778
                  %v1780 = vld [vmem:[%s1762 + $0x20] sm:%s1753]
                  %1781 = vst [vmem:[%s1763 + $0x20] sm:%s1753] %v1780
                  %v1782 = vld [vmem:[%s1762 + $0x24] sm:%s1753]
                  %1783 = vst [vmem:[%s1763 + $0x24] sm:%s1753] %v1782
                  %v1784 = vld [vmem:[%s1762 + $0x28] sm:%s1753]
                  %1785 = vst [vmem:[%s1763 + $0x28] sm:%s1753] %v1784
                  %v1786 = vld [vmem:[%s1762 + $0x2c] sm:%s1753]
                  %1787 = vst [vmem:[%s1763 + $0x2c] sm:%s1753] %v1786
                  %v1788 = vld [vmem:[%s1762 + $0x30] sm:%s1753]
                  %1789 = vst [vmem:[%s1763 + $0x30] sm:%s1753] %v1788
                  %v1790 = vld [vmem:[%s1762 + $0x34] sm:%s1753]
                  %1791 = vst [vmem:[%s1763 + $0x34] sm:%s1753] %v1790
                  %v1792 = vld [vmem:[%s1762 + $0x38] sm:%s1753]
                  %1793 = vst [vmem:[%s1763 + $0x38] sm:%s1753] %v1792
                  %v1794 = vld [vmem:[%s1762 + $0x3c] sm:%s1753]
                  %1795 = vst [vmem:[%s1763 + $0x3c] sm:%s1753] %v1794
                  %v1796 = vld [vmem:[%s1762 + $0x40] sm:%s1753]
                  %1797 = vst [vmem:[%s1763 + $0x40] sm:%s1753] %v1796
                  %v1798 = vld [vmem:[%s1762 + $0x44] sm:%s1753]
                  %1799 = vst [vmem:[%s1763 + $0x44] sm:%s1753] %v1798
                  %v1800 = vld [vmem:[%s1762 + $0x48] sm:%s1753]
                  %1801 = vst [vmem:[%s1763 + $0x48] sm:%s1753] %v1800
                  %v1802 = vld [vmem:[%s1762 + $0x4c] sm:%s1753]
                  %1803 = vst [vmem:[%s1763 + $0x4c] sm:%s1753] %v1802
                  %v1804 = vld [vmem:[%s1762 + $0x50] sm:%s1753]
                  %1805 = vst [vmem:[%s1763 + $0x50] sm:%s1753] %v1804
                  %v1806 = vld [vmem:[%s1762 + $0x54] sm:%s1753]
                  %1807 = vst [vmem:[%s1763 + $0x54] sm:%s1753] %v1806
                  %v1808 = vld [vmem:[%s1762 + $0x58] sm:%s1753]
                  %1809 = vst [vmem:[%s1763 + $0x58] sm:%s1753] %v1808
                  %v1810 = vld [vmem:[%s1762 + $0x5c] sm:%s1753]
                  %1811 = vst [vmem:[%s1763 + $0x5c] sm:%s1753] %v1810
                  %v1812 = vld [vmem:[%s1762 + $0x60] sm:%s1753]
                  %1813 = vst [vmem:[%s1763 + $0x60] sm:%s1753] %v1812
                  %v1814 = vld [vmem:[%s1762 + $0x64] sm:%s1753]
                  %1815 = vst [vmem:[%s1763 + $0x64] sm:%s1753] %v1814
                  %v1816 = vld [vmem:[%s1762 + $0x68] sm:%s1753]
                  %1817 = vst [vmem:[%s1763 + $0x68] sm:%s1753] %v1816
                  %v1818 = vld [vmem:[%s1762 + $0x6c] sm:%s1753]
                  %1819 = vst [vmem:[%s1763 + $0x6c] sm:%s1753] %v1818
                  %v1820 = vld [vmem:[%s1762 + $0x70] sm:%s1753]
                  %1821 = vst [vmem:[%s1763 + $0x70] sm:%s1753] %v1820
                  %v1822 = vld [vmem:[%s1762 + $0x74] sm:%s1753]
                  %1823 = vst [vmem:[%s1763 + $0x74] sm:%s1753] %v1822
                  %v1824 = vld [vmem:[%s1762 + $0x78] sm:%s1753]
                  %1825 = vst [vmem:[%s1763 + $0x78] sm:%s1753] %v1824
                  %v1826 = vld [vmem:[%s1762 + $0x7c] sm:%s1753]
                  %1827 = vst [vmem:[%s1763 + $0x7c] sm:%s1753] %v1826
                  %v1828 = vld [vmem:[%s1762 + $0x80] sm:%s1753]
                  %1829 = vst [vmem:[%s1763 + $0x80] sm:%s1753] %v1828
                  %v1830 = vld [vmem:[%s1762 + $0x84] sm:%s1753]
                  %1831 = vst [vmem:[%s1763 + $0x84] sm:%s1753] %v1830
                  %v1832 = vld [vmem:[%s1762 + $0x88] sm:%s1753]
                  %1833 = vst [vmem:[%s1763 + $0x88] sm:%s1753] %v1832
                  %v1834 = vld [vmem:[%s1762 + $0x8c] sm:%s1753]
                  %1835 = vst [vmem:[%s1763 + $0x8c] sm:%s1753] %v1834
                  %v1836 = vld [vmem:[%s1762 + $0x90] sm:%s1753]
                  %1837 = vst [vmem:[%s1763 + $0x90] sm:%s1753] %v1836
                  %v1838 = vld [vmem:[%s1762 + $0x94] sm:%s1753]
                  %1839 = vst [vmem:[%s1763 + $0x94] sm:%s1753] %v1838
                  %v1840 = vld [vmem:[%s1762 + $0x98] sm:%s1753]
                  %1841 = vst [vmem:[%s1763 + $0x98] sm:%s1753] %v1840
                  %v1842 = vld [vmem:[%s1762 + $0x9c] sm:%s1753]
                  %1843 = vst [vmem:[%s1763 + $0x9c] sm:%s1753] %v1842
                  %v1844 = vld [vmem:[%s1762 + $0xa0] sm:%s1753]
                  %1845 = vst [vmem:[%s1763 + $0xa0] sm:%s1753] %v1844
                  %v1846 = vld [vmem:[%s1762 + $0xa4] sm:%s1753]
                  %1847 = vst [vmem:[%s1763 + $0xa4] sm:%s1753] %v1846
                  %v1848 = vld [vmem:[%s1762 + $0xa8] sm:%s1753]
                  %1849 = vst [vmem:[%s1763 + $0xa8] sm:%s1753] %v1848
                  %v1850 = vld [vmem:[%s1762 + $0xac] sm:%s1753]
                  %1851 = vst [vmem:[%s1763 + $0xac] sm:%s1753] %v1850
                  %v1852 = vld [vmem:[%s1762 + $0xb0] sm:%s1753]
                  %1853 = vst [vmem:[%s1763 + $0xb0] sm:%s1753] %v1852
                  %v1854 = vld [vmem:[%s1762 + $0xb4] sm:%s1753]
                  %1855 = vst [vmem:[%s1763 + $0xb4] sm:%s1753] %v1854
                  %v1856 = vld [vmem:[%s1762 + $0xb8] sm:%s1753]
                  %1857 = vst [vmem:[%s1763 + $0xb8] sm:%s1753] %v1856
                  %v1858 = vld [vmem:[%s1762 + $0xbc] sm:%s1753]
                  %1859 = vst [vmem:[%s1763 + $0xbc] sm:%s1753] %v1858
                  %v1860 = vld [vmem:[%s1762 + $0xc0] sm:%s1753]
                  %1861 = vst [vmem:[%s1763 + $0xc0] sm:%s1753] %v1860
                  %v1862 = vld [vmem:[%s1762 + $0xc4] sm:%s1753]
                  %1863 = vst [vmem:[%s1763 + $0xc4] sm:%s1753] %v1862
                  %v1864 = vld [vmem:[%s1762 + $0xc8] sm:%s1753]
                  %1865 = vst [vmem:[%s1763 + $0xc8] sm:%s1753] %v1864
                  %v1866 = vld [vmem:[%s1762 + $0xcc] sm:%s1753]
                  %1867 = vst [vmem:[%s1763 + $0xcc] sm:%s1753] %v1866
                  %v1868 = vld [vmem:[%s1762 + $0xd0] sm:%s1753]
                  %1869 = vst [vmem:[%s1763 + $0xd0] sm:%s1753] %v1868
                  %v1870 = vld [vmem:[%s1762 + $0xd4] sm:%s1753]
                  %1871 = vst [vmem:[%s1763 + $0xd4] sm:%s1753] %v1870
                  %v1872 = vld [vmem:[%s1762 + $0xd8] sm:%s1753]
                  %1873 = vst [vmem:[%s1763 + $0xd8] sm:%s1753] %v1872
                  %v1874 = vld [vmem:[%s1762 + $0xdc] sm:%s1753]
                  %1875 = vst [vmem:[%s1763 + $0xdc] sm:%s1753] %v1874
                  %v1876 = vld [vmem:[%s1762 + $0xe0] sm:%s1753]
                  %1877 = vst [vmem:[%s1763 + $0xe0] sm:%s1753] %v1876
                  %v1878 = vld [vmem:[%s1762 + $0xe4] sm:%s1753]
                  %1879 = vst [vmem:[%s1763 + $0xe4] sm:%s1753] %v1878
                  %v1880 = vld [vmem:[%s1762 + $0xe8] sm:%s1753]
                  %1881 = vst [vmem:[%s1763 + $0xe8] sm:%s1753] %v1880
                  %v1882 = vld [vmem:[%s1762 + $0xec] sm:%s1753]
                  %1883 = vst [vmem:[%s1763 + $0xec] sm:%s1753] %v1882
                  %v1884 = vld [vmem:[%s1762 + $0xf0] sm:%s1753]
                  %1885 = vst [vmem:[%s1763 + $0xf0] sm:%s1753] %v1884
                  %v1886 = vld [vmem:[%s1762 + $0xf4] sm:%s1753]
                  %1887 = vst [vmem:[%s1763 + $0xf4] sm:%s1753] %v1886
                  %v1888 = vld [vmem:[%s1762 + $0xf8] sm:%s1753]
                  %1889 = vst [vmem:[%s1763 + $0xf8] sm:%s1753] %v1888
                  %v1890 = vld [vmem:[%s1762 + $0xfc] sm:%s1753]
                  %1891 = vst [vmem:[%s1763 + $0xfc] sm:%s1753] %v1890
                  %s1892 = sadd.s32 1, %s1761
                  %p1893 = scmp.ge.s32.totalorder %s1892, %s1754
                  %s1894 = scalar_select %p1893, 0, %s1892
                  %s1895 = smul.u32 %s1894, 256
                  %s1896 = smul.u32 %s1894, 256
                  %s1897 = scalar_lea.vmem %s1559, %s1895 [#allocation2]
                  %s1898 = scalar_lea.vmem %s1570, %s1896
                $region71: #{policy_forward.4} parent=65 // loop_footer
                  %s1758 = sadd.s32 %s1756, 1
                $region72: #{policy_forward.4} parent=65 // loop_footer_branch
                  %1755 = sbr.rel target = $region68
                $region73: #{policy_forward.4} parent=65 // loop_exit
                  _
                %s1899 = sshrl.u32 %s1566, 6
                %s1900 = sand.u32 %s1566, 63
                %s1901 = smul.u32 %s1899, 64
                %s1902 = smul.u32 4, %s1901
                %s1903 = scalar_lea.vmem %s1559, %s1902 [#allocation2]
                %s1904 = smul.u32 4, %s1901
                %s1905 = scalar_lea.vmem %s1570, %s1904
                // While loop
                $region74: #{policy_forward.4} parent=65 // loop_pre_header
                  _
                $region75: #{policy_forward.4} parent=65 // loop_header
                  %s1907 = sphi 0, %s1909
                  %p1908 = scmp.ge.s32.totalorder %s1907, %s1900
                  %s1912 = sphi 0, %s1919
                  %s1913 = sphi %s1903, %s1922
                  %s1914 = sphi %s1905, %s1923
                $region76: #{policy_forward.4} parent=65 // loop_header_branch
                  %1911 = sbr.rel (%p1908) target = $region80
                $region77: #{policy_forward.4} parent=65 // loop_body
                  %v1915 = vld [vmem:[%s1913] sm:%s1753]
                  %1916 = vst [vmem:[%s1914] sm:%s1753] %v1915
                  %s1917 = sadd.s32 1, %s1912
                  %p1918 = scmp.ge.s32.totalorder %s1917, %s1900
                  %s1919 = scalar_select %p1918, 0, %s1917
                  %s1920 = smul.u32 %s1919, 4
                  %s1921 = smul.u32 %s1919, 4
                  %s1922 = scalar_lea.vmem %s1903, %s1920 [#allocation2]
                  %s1923 = scalar_lea.vmem %s1905, %s1921
                $region78: #{policy_forward.4} parent=65 // loop_footer
                  %s1909 = sadd.s32 %s1907, 1
                $region79: #{policy_forward.4} parent=65 // loop_footer_branch
                  %1906 = sbr.rel target = $region75
                $region80: #{policy_forward.4} parent=65 // loop_exit
                  _
              $region66: #{policy_forward.4} parent=43 // pred_fallthru
                _
            $region44: #{policy_forward.4} parent=39 // pred_fallthru
              _
            // Predicated region
            $region45: #{policy_forward.4} parent=39 // pred_check
              _
            $region46: #{policy_forward.4} parent=39 // pred_check_branch
              %1577 = sbr.rel (0) target = $region48
            $region47: #{policy_forward.4} parent=39 // pred_region
              %s1579 = ssub.s32 16, 1
              %s1580 = sshrl.u32 %s1566, 6
              // While loop
              $region49: #{policy_forward.4} parent=47 // loop_pre_header
                _
              $region50: #{policy_forward.4} parent=47 // loop_header
                %s1582 = sphi 0, %s1584
                %p1583 = scmp.ge.s32.totalorder %s1582, %s1580
                %s1587 = sphi 0, %s1720
                %s1588 = sphi %s1559, %s1723
                %s1589 = sphi %s1570, %s1724
              $region51: #{policy_forward.4} parent=47 // loop_header_branch
                %1586 = sbr.rel (%p1583) target = $region55
              $region52: #{policy_forward.4} parent=47 // loop_body
                %v1590 = vld [vmem:[%s1588] sm:%s1579]
                %1591 = vst [vmem:[%s1589] sm:%s1579] %v1590
                %v1592 = vld [vmem:[%s1588 + $0x4] sm:%s1579]
                %1593 = vst [vmem:[%s1589 + $0x4] sm:%s1579] %v1592
                %v1594 = vld [vmem:[%s1588 + $0x8] sm:%s1579]
                %1595 = vst [vmem:[%s1589 + $0x8] sm:%s1579] %v1594
                %v1596 = vld [vmem:[%s1588 + $0xc] sm:%s1579]
                %1597 = vst [vmem:[%s1589 + $0xc] sm:%s1579] %v1596
                %v1598 = vld [vmem:[%s1588 + $0x10] sm:%s1579]
                %1599 = vst [vmem:[%s1589 + $0x10] sm:%s1579] %v1598
                %v1600 = vld [vmem:[%s1588 + $0x14] sm:%s1579]
                %1601 = vst [vmem:[%s1589 + $0x14] sm:%s1579] %v1600
                %v1602 = vld [vmem:[%s1588 + $0x18] sm:%s1579]
                %1603 = vst [vmem:[%s1589 + $0x18] sm:%s1579] %v1602
                %v1604 = vld [vmem:[%s1588 + $0x1c] sm:%s1579]
                %1605 = vst [vmem:[%s1589 + $0x1c] sm:%s1579] %v1604
                %v1606 = vld [vmem:[%s1588 + $0x20] sm:%s1579]
                %1607 = vst [vmem:[%s1589 + $0x20] sm:%s1579] %v1606
                %v1608 = vld [vmem:[%s1588 + $0x24] sm:%s1579]
                %1609 = vst [vmem:[%s1589 + $0x24] sm:%s1579] %v1608
                %v1610 = vld [vmem:[%s1588 + $0x28] sm:%s1579]
                %1611 = vst [vmem:[%s1589 + $0x28] sm:%s1579] %v1610
                %v1612 = vld [vmem:[%s1588 + $0x2c] sm:%s1579]
                %1613 = vst [vmem:[%s1589 + $0x2c] sm:%s1579] %v1612
                %v1614 = vld [vmem:[%s1588 + $0x30] sm:%s1579]
                %1615 = vst [vmem:[%s1589 + $0x30] sm:%s1579] %v1614
                %v1616 = vld [vmem:[%s1588 + $0x34] sm:%s1579]
                %1617 = vst [vmem:[%s1589 + $0x34] sm:%s1579] %v1616
                %v1618 = vld [vmem:[%s1588 + $0x38] sm:%s1579]
                %1619 = vst [vmem:[%s1589 + $0x38] sm:%s1579] %v1618
                %v1620 = vld [vmem:[%s1588 + $0x3c] sm:%s1579]
                %1621 = vst [vmem:[%s1589 + $0x3c] sm:%s1579] %v1620
                %v1622 = vld [vmem:[%s1588 + $0x40] sm:%s1579]
                %1623 = vst [vmem:[%s1589 + $0x40] sm:%s1579] %v1622
                %v1624 = vld [vmem:[%s1588 + $0x44] sm:%s1579]
                %1625 = vst [vmem:[%s1589 + $0x44] sm:%s1579] %v1624
                %v1626 = vld [vmem:[%s1588 + $0x48] sm:%s1579]
                %1627 = vst [vmem:[%s1589 + $0x48] sm:%s1579] %v1626
                %v1628 = vld [vmem:[%s1588 + $0x4c] sm:%s1579]
                %1629 = vst [vmem:[%s1589 + $0x4c] sm:%s1579] %v1628
                %v1630 = vld [vmem:[%s1588 + $0x50] sm:%s1579]
                %1631 = vst [vmem:[%s1589 + $0x50] sm:%s1579] %v1630
                %v1632 = vld [vmem:[%s1588 + $0x54] sm:%s1579]
                %1633 = vst [vmem:[%s1589 + $0x54] sm:%s1579] %v1632
                %v1634 = vld [vmem:[%s1588 + $0x58] sm:%s1579]
                %1635 = vst [vmem:[%s1589 + $0x58] sm:%s1579] %v1634
                %v1636 = vld [vmem:[%s1588 + $0x5c] sm:%s1579]
                %1637 = vst [vmem:[%s1589 + $0x5c] sm:%s1579] %v1636
                %v1638 = vld [vmem:[%s1588 + $0x60] sm:%s1579]
                %1639 = vst [vmem:[%s1589 + $0x60] sm:%s1579] %v1638
                %v1640 = vld [vmem:[%s1588 + $0x64] sm:%s1579]
                %1641 = vst [vmem:[%s1589 + $0x64] sm:%s1579] %v1640
                %v1642 = vld [vmem:[%s1588 + $0x68] sm:%s1579]
                %1643 = vst [vmem:[%s1589 + $0x68] sm:%s1579] %v1642
                %v1644 = vld [vmem:[%s1588 + $0x6c] sm:%s1579]
                %1645 = vst [vmem:[%s1589 + $0x6c] sm:%s1579] %v1644
                %v1646 = vld [vmem:[%s1588 + $0x70] sm:%s1579]
                %1647 = vst [vmem:[%s1589 + $0x70] sm:%s1579] %v1646
                %v1648 = vld [vmem:[%s1588 + $0x74] sm:%s1579]
                %1649 = vst [vmem:[%s1589 + $0x74] sm:%s1579] %v1648
                %v1650 = vld [vmem:[%s1588 + $0x78] sm:%s1579]
                %1651 = vst [vmem:[%s1589 + $0x78] sm:%s1579] %v1650
                %v1652 = vld [vmem:[%s1588 + $0x7c] sm:%s1579]
                %1653 = vst [vmem:[%s1589 + $0x7c] sm:%s1579] %v1652
                %v1654 = vld [vmem:[%s1588 + $0x80] sm:%s1579]
                %1655 = vst [vmem:[%s1589 + $0x80] sm:%s1579] %v1654
                %v1656 = vld [vmem:[%s1588 + $0x84] sm:%s1579]
                %1657 = vst [vmem:[%s1589 + $0x84] sm:%s1579] %v1656
                %v1658 = vld [vmem:[%s1588 + $0x88] sm:%s1579]
                %1659 = vst [vmem:[%s1589 + $0x88] sm:%s1579] %v1658
                %v1660 = vld [vmem:[%s1588 + $0x8c] sm:%s1579]
                %1661 = vst [vmem:[%s1589 + $0x8c] sm:%s1579] %v1660
                %v1662 = vld [vmem:[%s1588 + $0x90] sm:%s1579]
                %1663 = vst [vmem:[%s1589 + $0x90] sm:%s1579] %v1662
                %v1664 = vld [vmem:[%s1588 + $0x94] sm:%s1579]
                %1665 = vst [vmem:[%s1589 + $0x94] sm:%s1579] %v1664
                %v1666 = vld [vmem:[%s1588 + $0x98] sm:%s1579]
                %1667 = vst [vmem:[%s1589 + $0x98] sm:%s1579] %v1666
                %v1668 = vld [vmem:[%s1588 + $0x9c] sm:%s1579]
                %1669 = vst [vmem:[%s1589 + $0x9c] sm:%s1579] %v1668
                %v1670 = vld [vmem:[%s1588 + $0xa0] sm:%s1579]
                %1671 = vst [vmem:[%s1589 + $0xa0] sm:%s1579] %v1670
                %v1672 = vld [vmem:[%s1588 + $0xa4] sm:%s1579]
                %1673 = vst [vmem:[%s1589 + $0xa4] sm:%s1579] %v1672
                %v1674 = vld [vmem:[%s1588 + $0xa8] sm:%s1579]
                %1675 = vst [vmem:[%s1589 + $0xa8] sm:%s1579] %v1674
                %v1676 = vld [vmem:[%s1588 + $0xac] sm:%s1579]
                %1677 = vst [vmem:[%s1589 + $0xac] sm:%s1579] %v1676
                %v1678 = vld [vmem:[%s1588 + $0xb0] sm:%s1579]
                %1679 = vst [vmem:[%s1589 + $0xb0] sm:%s1579] %v1678
                %v1680 = vld [vmem:[%s1588 + $0xb4] sm:%s1579]
                %1681 = vst [vmem:[%s1589 + $0xb4] sm:%s1579] %v1680
                %v1682 = vld [vmem:[%s1588 + $0xb8] sm:%s1579]
                %1683 = vst [vmem:[%s1589 + $0xb8] sm:%s1579] %v1682
                %v1684 = vld [vmem:[%s1588 + $0xbc] sm:%s1579]
                %1685 = vst [vmem:[%s1589 + $0xbc] sm:%s1579] %v1684
                %v1686 = vld [vmem:[%s1588 + $0xc0] sm:%s1579]
                %1687 = vst [vmem:[%s1589 + $0xc0] sm:%s1579] %v1686
                %v1688 = vld [vmem:[%s1588 + $0xc4] sm:%s1579]
                %1689 = vst [vmem:[%s1589 + $0xc4] sm:%s1579] %v1688
                %v1690 = vld [vmem:[%s1588 + $0xc8] sm:%s1579]
                %1691 = vst [vmem:[%s1589 + $0xc8] sm:%s1579] %v1690
                %v1692 = vld [vmem:[%s1588 + $0xcc] sm:%s1579]
                %1693 = vst [vmem:[%s1589 + $0xcc] sm:%s1579] %v1692
                %v1694 = vld [vmem:[%s1588 + $0xd0] sm:%s1579]
                %1695 = vst [vmem:[%s1589 + $0xd0] sm:%s1579] %v1694
                %v1696 = vld [vmem:[%s1588 + $0xd4] sm:%s1579]
                %1697 = vst [vmem:[%s1589 + $0xd4] sm:%s1579] %v1696
                %v1698 = vld [vmem:[%s1588 + $0xd8] sm:%s1579]
                %1699 = vst [vmem:[%s1589 + $0xd8] sm:%s1579] %v1698
                %v1700 = vld [vmem:[%s1588 + $0xdc] sm:%s1579]
                %1701 = vst [vmem:[%s1589 + $0xdc] sm:%s1579] %v1700
                %v1702 = vld [vmem:[%s1588 + $0xe0] sm:%s1579]
                %1703 = vst [vmem:[%s1589 + $0xe0] sm:%s1579] %v1702
                %v1704 = vld [vmem:[%s1588 + $0xe4] sm:%s1579]
                %1705 = vst [vmem:[%s1589 + $0xe4] sm:%s1579] %v1704
                %v1706 = vld [vmem:[%s1588 + $0xe8] sm:%s1579]
                %1707 = vst [vmem:[%s1589 + $0xe8] sm:%s1579] %v1706
                %v1708 = vld [vmem:[%s1588 + $0xec] sm:%s1579]
                %1709 = vst [vmem:[%s1589 + $0xec] sm:%s1579] %v1708
                %v1710 = vld [vmem:[%s1588 + $0xf0] sm:%s1579]
                %1711 = vst [vmem:[%s1589 + $0xf0] sm:%s1579] %v1710
                %v1712 = vld [vmem:[%s1588 + $0xf4] sm:%s1579]
                %1713 = vst [vmem:[%s1589 + $0xf4] sm:%s1579] %v1712
                %v1714 = vld [vmem:[%s1588 + $0xf8] sm:%s1579]
                %1715 = vst [vmem:[%s1589 + $0xf8] sm:%s1579] %v1714
                %v1716 = vld [vmem:[%s1588 + $0xfc] sm:%s1579]
                %1717 = vst [vmem:[%s1589 + $0xfc] sm:%s1579] %v1716
                %s1718 = sadd.s32 1, %s1587
                %p1719 = scmp.ge.s32.totalorder %s1718, %s1580
                %s1720 = scalar_select %p1719, 0, %s1718
                %s1721 = smul.u32 %s1720, 256
                %s1722 = smul.u32 %s1720, 256
                %s1723 = scalar_lea.vmem %s1559, %s1721 [#allocation2]
                %s1724 = scalar_lea.vmem %s1570, %s1722
              $region53: #{policy_forward.4} parent=47 // loop_footer
                %s1584 = sadd.s32 %s1582, 1
              $region54: #{policy_forward.4} parent=47 // loop_footer_branch
                %1581 = sbr.rel target = $region50
              $region55: #{policy_forward.4} parent=47 // loop_exit
                _
              %s1725 = sshrl.u32 %s1566, 6
              %s1726 = sand.u32 %s1566, 63
              %s1727 = smul.u32 %s1725, 64
              %s1728 = smul.u32 4, %s1727
              %s1729 = scalar_lea.vmem %s1559, %s1728 [#allocation2]
              %s1730 = smul.u32 4, %s1727
              %s1731 = scalar_lea.vmem %s1570, %s1730
              // While loop
              $region56: #{policy_forward.4} parent=47 // loop_pre_header
                _
              $region57: #{policy_forward.4} parent=47 // loop_header
                %s1733 = sphi 0, %s1735
                %p1734 = scmp.ge.s32.totalorder %s1733, %s1726
                %s1738 = sphi 0, %s1745
                %s1739 = sphi %s1729, %s1748
                %s1740 = sphi %s1731, %s1749
              $region58: #{policy_forward.4} parent=47 // loop_header_branch
                %1737 = sbr.rel (%p1734) target = $region62
              $region59: #{policy_forward.4} parent=47 // loop_body
                %v1741 = vld [vmem:[%s1739] sm:%s1579]
                %1742 = vst [vmem:[%s1740] sm:%s1579] %v1741
                %s1743 = sadd.s32 1, %s1738
                %p1744 = scmp.ge.s32.totalorder %s1743, %s1726
                %s1745 = scalar_select %p1744, 0, %s1743
                %s1746 = smul.u32 %s1745, 4
                %s1747 = smul.u32 %s1745, 4
                %s1748 = scalar_lea.vmem %s1729, %s1746 [#allocation2]
                %s1749 = scalar_lea.vmem %s1731, %s1747
              $region60: #{policy_forward.4} parent=47 // loop_footer
                %s1735 = sadd.s32 %s1733, 1
              $region61: #{policy_forward.4} parent=47 // loop_footer_branch
                %1732 = sbr.rel target = $region57
              $region62: #{policy_forward.4} parent=47 // loop_exit
                _
            $region48: #{policy_forward.4} parent=39 // pred_fallthru
              _
          $region40: #{policy_forward.4} parent=35 // pred_fallthru
            _
          %1924 = vnop
        $region36: #{policy_forward.4} parent=31 // pred_fallthru
          _
      $region32: #{policy_forward.4} parent=5 // pred_fallthru
        _
      %p1925 = scmp.le.s32.totalorder 2, %s9
      // Predicated region
      $region81: #{policy_forward.4} parent=5 // pred_check
        %p1926 = pneg %p1925
      $region82: #{policy_forward.4} parent=5 // pred_check_branch
        %1928 = sbr.rel (%p1926) target = $region84
      $region83: #{policy_forward.4} parent=5 // pred_region
        %s1929 = ssub.s32 %s9, 2
        // Predicated region
        $region85: #{policy_forward.4} parent=83 // pred_check
          %p1930 = pneg %p106
        $region86: #{policy_forward.4} parent=83 // pred_check_branch
          %1932 = sbr.rel (%p1930) target = $region88
        $region87: #{policy_forward.4} parent=83 // pred_region
          %s1933 = sand.u32 %s91, 1
          %s1934 = sand.u32 %s91, 1
          %s1935 = smul.addr %s1934, 256
          %s1936 = scalar_lea.vmem [#allocation2], %s1935
        $region88: #{policy_forward.4} parent=83 // pred_fallthru
          _
      $region84: #{policy_forward.4} parent=5 // pred_fallthru
        _
    $region6: #{policy_forward.4} parent=1 // loop_footer
      %s13 = sadd.s32 1, %s9
    $region7: #{policy_forward.4} parent=1 // loop_footer_branch
      %8 = sbr.rel target = $region3
    $region8: #{policy_forward.4} parent=1 // loop_exit
      _

// kernel: policy_forward.5
$region0: #{policy_forward.5}
  #allocation0 [shape = 'u32[]', space=smem, size = 0x4, offset = 0x4, fixed_abs, tag = 'smem constant byte address 0x4 - core index']
  #allocation1 [shape = 'u32[144,128]{1,0:T(1,128)}', space=vmem, size = 0x12000, scoped, tag = 'internal scratch']
  %s0 = inlined_call_operand.vmem [shape: bf16[162,128], index: 0, kind: input, shape index: {}]
  %s1 = inlined_call_operand.vmem [shape: bf16[128,16], index: 1, kind: input, shape index: {}]
  %s2 = inlined_call_operand.vmem [shape: f32[1,16], index: 2, kind: input, shape index: {}]
  %s3 = inlined_call_operand.vmem [shape: bf16[162,16], index: 3, kind: output, shape index: {}]
  %s4 = sld [smem:[#allocation0]]
  $region22: #{policy_forward.5} parent=0
    _
  %s6 = ssub.s32 1, %s4
  %s7 = scalar_select 0, %s6, %s4
  // Predicated region
  $region2: #{policy_forward.5} parent=0 // pred_check
    _
  $region3: #{policy_forward.5} parent=0 // pred_check_branch
    %9 = sbr.rel (0) target = $region5
  $region4: #{policy_forward.5} parent=0 // pred_region
    _
  $region5: #{policy_forward.5} parent=0 // pred_fallthru
    _
  // Predicated region
  $region6: #{policy_forward.5} parent=0 // pred_check
    _
  $region7: #{policy_forward.5} parent=0 // pred_check_branch
    %11 = sbr.rel (0) target = $region9
  $region8: #{policy_forward.5} parent=0 // pred_region
    _
  $region9: #{policy_forward.5} parent=0 // pred_fallthru
    _
  // Predicated region
  $region10: #{policy_forward.5} parent=0 // pred_check
    _
  $region11: #{policy_forward.5} parent=0 // pred_check_branch
    %13 = sbr.rel (0) target = $region13
  $region12: #{policy_forward.5} parent=0 // pred_region
    _
  $region13: #{policy_forward.5} parent=0 // pred_fallthru
    _
  %v15 = vld [vmem:[%s0] sm:$0xf]
  %v16 = vld [vmem:[%s0 + $0x4] sm:$0xf]
  %v17 = vld [vmem:[%s0 + $0x8] sm:$0xf]
  %v18 = vld [vmem:[%s0 + $0xc] sm:$0xf]
  %v19 = vld [vmem:[%s0 + $0x10] sm:$0xf]
  %v20 = vld [vmem:[%s0 + $0x14] sm:$0xf]
  %v21 = vld [vmem:[%s0 + $0x18] sm:$0xf]
  %v22 = vld [vmem:[%s0 + $0x1c] sm:$0xf]
  %v23 = vld [vmem:[%s0 + $0x20] sm:$0xf]
  %v24 = vld [vmem:[%s0 + $0x24] sm:$0xf]
  %v25 = vld [vmem:[%s0 + $0x28] sm:$0xf]
  %v26 = vld [vmem:[%s0 + $0x2c] sm:$0xf]
  %v27 = vld [vmem:[%s0 + $0x30] sm:$0xf]
  %v28 = vld [vmem:[%s0 + $0x34] sm:$0xf]
  %v29 = vld [vmem:[%s0 + $0x38] sm:$0xf]
  %v30 = vld [vmem:[%s0 + $0x3c] sm:$0xf]
  %v31 = vld [vmem:[%s0 + $0x40] sm:$0xf]
  %v32 = vld [vmem:[%s0 + $0x44] sm:$0xf]
  %v33 = vld [vmem:[%s0 + $0x48] sm:$0xf]
  %v34 = vld [vmem:[%s0 + $0x4c] sm:$0xf]
  %v35 = vld [vmem:[%s0 + $0x50] sm:$0x1]
  %v36 = vld [vmem:[%s1] sm:$0xf]
  %v37 = vld [vmem:[%s1 + $0x4] sm:$0xf]
  %v38 = vld [vmem:[%s1 + $0x8] sm:$0xf]
  %v39 = vld [vmem:[%s1 + $0xc] sm:$0xf]
  %v40 = vld [vmem:[%s1 + $0x10] sm:$0xf]
  %v41 = vld [vmem:[%s1 + $0x14] sm:$0xf]
  %v42 = vld [vmem:[%s1 + $0x18] sm:$0xf]
  %v43 = vld [vmem:[%s1 + $0x1c] sm:$0xf]
  %v44 = vld [vmem:[%s1 + $0x20] sm:$0xf]
  %v45 = vld [vmem:[%s1 + $0x24] sm:$0xf]
  %v46 = vld [vmem:[%s1 + $0x28] sm:$0xf]
  %v47 = vld [vmem:[%s1 + $0x2c] sm:$0xf]
  %v48 = vld [vmem:[%s1 + $0x30] sm:$0xf]
  %v49 = vld [vmem:[%s1 + $0x34] sm:$0xf]
  %v50 = vld [vmem:[%s1 + $0x38] sm:$0xf]
  %v51 = vld [vmem:[%s1 + $0x3c] sm:$0xf]
  %v52 = vld [vmem:[%s2] sm:$0x1]
  %v54 = vlaneseq
  %v55 = vshrl.u32 %v54, 7
  %v56 = vsub.s32 0, %v55
  %v57 = vrot.slane %v52, %v56
  %v80 = vunpack.c.l.b16 %v15
  %v81 = vunpack.c.l.b16 %v16
  %v82 = vunpack.c.l.b16 %v17
  %v83 = vunpack.c.l.b16 %v18
  %v84 = vunpack.c.l.b16 %v19
  %v85 = vunpack.c.l.b16 %v20
  %v86 = vunpack.c.l.b16 %v21
  %v87 = vunpack.c.l.b16 %v22
  %v88 = vunpack.c.l.b16 %v23
  %v89 = vunpack.c.l.b16 %v24
  %v90 = vunpack.c.l.b16 %v25
  %v91 = vunpack.c.l.b16 %v26
  %v92 = vunpack.c.l.b16 %v27
  %v93 = vunpack.c.l.b16 %v28
  %v94 = vunpack.c.l.b16 %v29
  %v95 = vunpack.c.l.b16 %v30
  %v96 = vunpack.c.l.b16 %v31
  %v97 = vunpack.c.l.b16 %v32
  %v98 = vunpack.c.l.b16 %v33
  %v99 = vunpack.c.l.b16 %v34
  %v100 = vunpack.c.l.b16 %v35
  %v101 = vpack.c.b16 %v81, %v80
  %v102 = vpack.c.b16 %v83, %v82
  %v103 = vpack.c.b16 %v85, %v84
  %v104 = vpack.c.b16 %v87, %v86
  %v105 = vpack.c.b16 %v89, %v88
  %v106 = vpack.c.b16 %v91, %v90
  %v107 = vpack.c.b16 %v93, %v92
  %v108 = vpack.c.b16 %v95, %v94
  %v109 = vpack.c.b16 %v97, %v96
  %v110 = vpack.c.b16 %v99, %v98
  %v111 = vpack.c.b16 %v100, %v100
  %v139 = vunpack.c.l.b16 %v36
  %v140 = vunpack.c.l.b16 %v37
  %v141 = vunpack.c.l.b16 %v38
  %v142 = vunpack.c.l.b16 %v39
  %v143 = vunpack.c.l.b16 %v40
  %v144 = vunpack.c.l.b16 %v41
  %v145 = vunpack.c.l.b16 %v42
  %v146 = vunpack.c.l.b16 %v43
  %v147 = vunpack.c.l.b16 %v44
  %v148 = vunpack.c.l.b16 %v45
  %v149 = vunpack.c.l.b16 %v46
  %v150 = vunpack.c.l.b16 %v47
  %v151 = vunpack.c.l.b16 %v48
  %v152 = vunpack.c.l.b16 %v49
  %v153 = vunpack.c.l.b16 %v50
  %v154 = vunpack.c.l.b16 %v51
  %v155 = vpack.c.b16 %v140, %v139
  %v156 = vpack.c.b16 %v142, %v141
  %v157 = vpack.c.b16 %v144, %v143
  %v158 = vpack.c.b16 %v146, %v145
  %v159 = vpack.c.b16 %v148, %v147
  %v160 = vpack.c.b16 %v150, %v149
  %v161 = vpack.c.b16 %v152, %v151
  %v162 = vpack.c.b16 %v154, %v153
  %171 = vmatprep.subr.bf16.mxu0 0
  %172 = vmatpush1.bf16.msra.mxu0 %v162
  %173 = vmatprep.subr.bf16.mxu0 0
  %174 = vmatpush1.bf16.msra.mxu0 %v161
  %175 = vmatprep.subr.bf16.mxu0 0
  %176 = vmatpush1.bf16.msra.mxu0 %v160
  %177 = vmatprep.subr.bf16.mxu0 0
  %178 = vmatpush1.bf16.msra.mxu0 %v159
  %179 = vmatprep.subr.bf16.mxu0 0
  %180 = vmatpush1.bf16.msra.mxu0 %v158
  %181 = vmatprep.subr.bf16.mxu0 0
  %182 = vmatpush1.bf16.msra.mxu0 %v157
  %183 = vmatprep.subr.bf16.mxu0 0
  %184 = vmatpush1.bf16.msra.mxu0 %v156
  %185 = vmatprep.subr.bf16.mxu0 0
  %186 = vmatpush1.bf16.msra.mxu0 %v155
  %187 = vmatprep.subr.bf16.mxu0 0
  %188 = vmatpush2.bf16.msra.mxu0 0
  %189 = vmatprep.subr.bf16.mxu0 0
  %190 = vmatpush2.bf16.msra.mxu0 0
  %191 = vmatprep.subr.bf16.mxu0 0
  %192 = vmatpush2.bf16.msra.mxu0 0
  %193 = vmatprep.subr.bf16.mxu0 0
  %194 = vmatpush2.bf16.msra.mxu0 0
  %195 = vmatprep.subr.bf16.mxu0 0
  %196 = vmatpush2.bf16.msra.mxu0 0
  %197 = vmatprep.subr.bf16.mxu0 0
  %198 = vmatpush2.bf16.msra.mxu0 0
  %199 = vmatprep.subr.bf16.mxu0 0
  %200 = vmatpush2.bf16.msra.mxu0 0
  %201 = vmatprep.subr.bf16.mxu0 0
  %202 = vmatpush2.bf16.msra.mxu0 0
  %203 = vmatprep.mubr.bf16.mxu0 0
  %204 = vmatmul.mubr.bf16.gmra.mxu0 %v101
  %v205 = vpop.f32.mrf.mxu0
  %v206 = vadd.f32 %v57, %v205
  %v207 = vpop.f32.mrf.mxu0
  %v208 = vpop.f32.mrf.mxu0
  %v209 = vadd.f32 %v57, %v208
  %v210 = vpop.f32.mrf.mxu0
  %211 = vmatprep.mubr.bf16.mxu0 0
  %212 = vmatmul.mubr.bf16.gmra.mxu0 %v102
  %v213 = vpop.f32.mrf.mxu0
  %v214 = vadd.f32 %v57, %v213
  %v215 = vpop.f32.mrf.mxu0
  %v216 = vpop.f32.mrf.mxu0
  %v217 = vadd.f32 %v57, %v216
  %v218 = vpop.f32.mrf.mxu0
  %219 = vmatprep.mubr.bf16.mxu0 0
  %220 = vmatmul.mubr.bf16.gmra.mxu0 %v103
  %v221 = vpop.f32.mrf.mxu0
  %v222 = vadd.f32 %v57, %v221
  %v223 = vpop.f32.mrf.mxu0
  %v224 = vpop.f32.mrf.mxu0
  %v225 = vadd.f32 %v57, %v224
  %v226 = vpop.f32.mrf.mxu0
  %227 = vmatprep.mubr.bf16.mxu0 0
  %228 = vmatmul.mubr.bf16.gmra.mxu0 %v104
  %v229 = vpop.f32.mrf.mxu0
  %v230 = vadd.f32 %v57, %v229
  %v231 = vpop.f32.mrf.mxu0
  %v232 = vpop.f32.mrf.mxu0
  %v233 = vadd.f32 %v57, %v232
  %v234 = vpop.f32.mrf.mxu0
  %235 = vmatprep.mubr.bf16.mxu0 0
  %236 = vmatmul.mubr.bf16.gmra.mxu0 %v105
  %v237 = vpop.f32.mrf.mxu0
  %v238 = vadd.f32 %v57, %v237
  %v239 = vpop.f32.mrf.mxu0
  %v240 = vpop.f32.mrf.mxu0
  %v241 = vadd.f32 %v57, %v240
  %v242 = vpop.f32.mrf.mxu0
  %243 = vmatprep.mubr.bf16.mxu0 0
  %244 = vmatmul.mubr.bf16.gmra.mxu0 %v106
  %v245 = vpop.f32.mrf.mxu0
  %v246 = vadd.f32 %v57, %v245
  %v247 = vpop.f32.mrf.mxu0
  %v248 = vpop.f32.mrf.mxu0
  %v249 = vadd.f32 %v57, %v248
  %v250 = vpop.f32.mrf.mxu0
  %251 = vmatprep.mubr.bf16.mxu0 0
  %252 = vmatmul.mubr.bf16.gmra.mxu0 %v107
  %v253 = vpop.f32.mrf.mxu0
  %v254 = vadd.f32 %v57, %v253
  %v255 = vpop.f32.mrf.mxu0
  %v256 = vpop.f32.mrf.mxu0
  %v257 = vadd.f32 %v57, %v256
  %v258 = vpop.f32.mrf.mxu0
  %259 = vmatprep.mubr.bf16.mxu0 0
  %260 = vmatmul.mubr.bf16.gmra.mxu0 %v108
  %v261 = vpop.f32.mrf.mxu0
  %v262 = vadd.f32 %v57, %v261
  %v263 = vpop.f32.mrf.mxu0
  %v264 = vpop.f32.mrf.mxu0
  %v265 = vadd.f32 %v57, %v264
  %v266 = vpop.f32.mrf.mxu0
  %267 = vmatprep.mubr.bf16.mxu0 0
  %268 = vmatmul.mubr.bf16.gmra.mxu0 %v109
  %v269 = vpop.f32.mrf.mxu0
  %v270 = vadd.f32 %v57, %v269
  %v271 = vpop.f32.mrf.mxu0
  %v272 = vpop.f32.mrf.mxu0
  %v273 = vadd.f32 %v57, %v272
  %v274 = vpop.f32.mrf.mxu0
  %275 = vmatprep.mubr.bf16.mxu0 0
  %276 = vmatmul.mubr.bf16.gmra.mxu0 %v110
  %v277 = vpop.f32.mrf.mxu0
  %v278 = vadd.f32 %v57, %v277
  %v279 = vpop.f32.mrf.mxu0
  %v280 = vpop.f32.mrf.mxu0
  %v281 = vadd.f32 %v57, %v280
  %v282 = vpop.f32.mrf.mxu0
  %283 = vmatprep.mubr.bf16.mxu0 0
  %284 = vmatmul.mubr.bf16.gmra.mxu0 %v111
  %v285 = vpop.f32.mrf.mxu0
  %v286 = vadd.f32 %v57, %v285
  %v287 = vpop.f32.mrf.mxu0
  %v288 = vpop.f32.mrf.mxu0
  %v289 = vpop.f32.mrf.mxu0
  %290 = vdwg.mxu0
  %v291 = vmax.f32 %v206, 0.0
  %v292 = vmax.f32 %v209, 0.0
  %v293 = vmax.f32 %v214, 0.0
  %v294 = vmax.f32 %v217, 0.0
  %v295 = vmax.f32 %v222, 0.0
  %v296 = vmax.f32 %v225, 0.0
  %v297 = vmax.f32 %v230, 0.0
  %v298 = vmax.f32 %v233, 0.0
  %v299 = vmax.f32 %v238, 0.0
  %v300 = vmax.f32 %v241, 0.0
  %v301 = vmax.f32 %v246, 0.0
  %v302 = vmax.f32 %v249, 0.0
  %v303 = vmax.f32 %v254, 0.0
  %v304 = vmax.f32 %v257, 0.0
  %v305 = vmax.f32 %v262, 0.0
  %v306 = vmax.f32 %v265, 0.0
  %v307 = vmax.f32 %v270, 0.0
  %v308 = vmax.f32 %v273, 0.0
  %v309 = vmax.f32 %v278, 0.0
  %v310 = vmax.f32 %v281, 0.0
  %v311 = vmax.f32 %v286, 0.0
  %v312 = vpack.c.bf16 %v292, %v291
  %v313 = vpack.c.bf16 %v294, %v293
  %v314 = vpack.c.bf16 %v296, %v295
  %v315 = vpack.c.bf16 %v298, %v297
  %v316 = vpack.c.bf16 %v300, %v299
  %v317 = vpack.c.bf16 %v302, %v301
  %v318 = vpack.c.bf16 %v304, %v303
  %v319 = vpack.c.bf16 %v306, %v305
  %v320 = vpack.c.bf16 %v308, %v307
  %v321 = vpack.c.bf16 %v310, %v309
  %v322 = vpack.c.bf16 %v311, %v311
  %v334 = vunpack.c.l.b16 %v312
  %v335 = vunpack.c.h.b16 %v312
  %v336 = vunpack.c.l.b16 %v313
  %v337 = vunpack.c.h.b16 %v313
  %v338 = vunpack.c.l.b16 %v314
  %v339 = vunpack.c.h.b16 %v314
  %v340 = vunpack.c.l.b16 %v315
  %v341 = vunpack.c.h.b16 %v315
  %v342 = vunpack.c.l.b16 %v316
  %v343 = vunpack.c.h.b16 %v316
  %v344 = vunpack.c.l.b16 %v317
  %v345 = vunpack.c.h.b16 %v317
  %v346 = vunpack.c.l.b16 %v318
  %v347 = vunpack.c.h.b16 %v318
  %v348 = vunpack.c.l.b16 %v319
  %v349 = vunpack.c.h.b16 %v319
  %v350 = vunpack.c.l.b16 %v320
  %v351 = vunpack.c.h.b16 %v320
  %v352 = vunpack.c.l.b16 %v321
  %v353 = vunpack.c.h.b16 %v321
  %v354 = vunpack.c.l.b16 %v322
  %v355 = vpack.c.b16 %v334, %v334
  %v356 = vpack.c.b16 %v335, %v335
  %v357 = vpack.c.b16 %v336, %v336
  %v358 = vpack.c.b16 %v337, %v337
  %v359 = vpack.c.b16 %v338, %v338
  %v360 = vpack.c.b16 %v339, %v339
  %v361 = vpack.c.b16 %v340, %v340
  %v362 = vpack.c.b16 %v341, %v341
  %v363 = vpack.c.b16 %v342, %v342
  %v364 = vpack.c.b16 %v343, %v343
  %v365 = vpack.c.b16 %v344, %v344
  %v366 = vpack.c.b16 %v345, %v345
  %v367 = vpack.c.b16 %v346, %v346
  %v368 = vpack.c.b16 %v347, %v347
  %v369 = vpack.c.b16 %v348, %v348
  %v370 = vpack.c.b16 %v349, %v349
  %v371 = vpack.c.b16 %v350, %v350
  %v372 = vpack.c.b16 %v351, %v351
  %v373 = vpack.c.b16 %v352, %v352
  %v374 = vpack.c.b16 %v353, %v353
  %v375 = vpack.c.b16 %v354, %v354
  %vm397 = vcmask 125952
  %398 = vst.msk [vmem:[%s3] sm:$0xf] %vm397, %v355
  %399 = vst.msk [vmem:[%s3 + $0x4] sm:$0xf] %vm397, %v356
  %400 = vst.msk [vmem:[%s3 + $0x8] sm:$0xf] %vm397, %v357
  %401 = vst.msk [vmem:[%s3 + $0xc] sm:$0xf] %vm397, %v358
  %402 = vst.msk [vmem:[%s3 + $0x10] sm:$0xf] %vm397, %v359
  %403 = vst.msk [vmem:[%s3 + $0x14] sm:$0xf] %vm397, %v360
  %404 = vst.msk [vmem:[%s3 + $0x18] sm:$0xf] %vm397, %v361
  %405 = vst.msk [vmem:[%s3 + $0x1c] sm:$0xf] %vm397, %v362
  %406 = vst.msk [vmem:[%s3 + $0x20] sm:$0xf] %vm397, %v363
  %407 = vst.msk [vmem:[%s3 + $0x24] sm:$0xf] %vm397, %v364
  %408 = vst.msk [vmem:[%s3 + $0x28] sm:$0xf] %vm397, %v365
  %409 = vst.msk [vmem:[%s3 + $0x2c] sm:$0xf] %vm397, %v366
  %410 = vst.msk [vmem:[%s3 + $0x30] sm:$0xf] %vm397, %v367
  %411 = vst.msk [vmem:[%s3 + $0x34] sm:$0xf] %vm397, %v368
  %412 = vst.msk [vmem:[%s3 + $0x38] sm:$0xf] %vm397, %v369
  %413 = vst.msk [vmem:[%s3 + $0x3c] sm:$0xf] %vm397, %v370
  %414 = vst.msk [vmem:[%s3 + $0x40] sm:$0xf] %vm397, %v371
  %415 = vst.msk [vmem:[%s3 + $0x44] sm:$0xf] %vm397, %v372
  %416 = vst.msk [vmem:[%s3 + $0x48] sm:$0xf] %vm397, %v373
  %417 = vst.msk [vmem:[%s3 + $0x4c] sm:$0xf] %vm397, %v374
  %vm418 = vcmask 122880
  %419 = vst.msk [vmem:[%s3 + $0x50] sm:$0x1] %vm418, %v375
  // Predicated region
  $region14: #{policy_forward.5} parent=0 // pred_check
    _
  $region15: #{policy_forward.5} parent=0 // pred_check_branch
    %421 = sbr.rel (0) target = $region17
  $region16: #{policy_forward.5} parent=0 // pred_region
    _
  $region17: #{policy_forward.5} parent=0 // pred_fallthru
    _
  // Predicated region
  $region18: #{policy_forward.5} parent=0 // pred_check
    _
  $region19: #{policy_forward.5} parent=0 // pred_check_branch
    %423 = sbr.rel (0) target = $region21
  $region20: #{policy_forward.5} parent=0 // pred_region
    _
  $region21: #{policy_forward.5} parent=0 // pred_fallthru
    _

// kernel: policy_forward.6
$region0: #{policy_forward.6}
  #allocation0 [shape = 'u32[]', space=smem, size = 0x4, offset = 0x4, fixed_abs, tag = 'smem constant byte address 0x4 - core index']
  #allocation1 [shape = 'u32[144,128]{1,0:T(1,128)}', space=vmem, size = 0x12000, scoped, tag = 'internal scratch']
  %s0 = inlined_call_operand.vmem [shape: bf16[18,256], index: 0, kind: input, shape index: {}]
  %s1 = inlined_call_operand.vmem [shape: bf16[256,32], index: 1, kind: input, shape index: {}]
  %s2 = inlined_call_operand.vmem [shape: f32[1,32], index: 2, kind: input, shape index: {}]
  %s3 = inlined_call_operand.vmem [shape: bf16[18,32], index: 3, kind: output, shape index: {}]
  %s4 = sld [smem:[#allocation0]]
  $region22: #{policy_forward.6} parent=0
    _
  %s6 = ssub.s32 1, %s4
  %s7 = scalar_select 0, %s6, %s4
  // Predicated region
  $region2: #{policy_forward.6} parent=0 // pred_check
    _
  $region3: #{policy_forward.6} parent=0 // pred_check_branch
    %9 = sbr.rel (0) target = $region5
  $region4: #{policy_forward.6} parent=0 // pred_region
    _
  $region5: #{policy_forward.6} parent=0 // pred_fallthru
    _
  // Predicated region
  $region6: #{policy_forward.6} parent=0 // pred_check
    _
  $region7: #{policy_forward.6} parent=0 // pred_check_branch
    %11 = sbr.rel (0) target = $region9
  $region8: #{policy_forward.6} parent=0 // pred_region
    _
  $region9: #{policy_forward.6} parent=0 // pred_fallthru
    _
  // Predicated region
  $region10: #{policy_forward.6} parent=0 // pred_check
    _
  $region11: #{policy_forward.6} parent=0 // pred_check_branch
    %13 = sbr.rel (0) target = $region13
  $region12: #{policy_forward.6} parent=0 // pred_region
    _
  $region13: #{policy_forward.6} parent=0 // pred_fallthru
    _
  %v15 = vld [vmem:[%s0] sm:$0xff]
  %v16 = vld [vmem:[%s0 + $0x8] sm:$0xff]
  %v17 = vld [vmem:[%s0 + $0x10] sm:$0x11]
  %v18 = vld [vmem:[%s1] sm:$0xf]
  %v19 = vld [vmem:[%s1 + $0x4] sm:$0xf]
  %v20 = vld [vmem:[%s1 + $0x8] sm:$0xf]
  %v21 = vld [vmem:[%s1 + $0xc] sm:$0xf]
  %v22 = vld [vmem:[%s1 + $0x10] sm:$0xf]
  %v23 = vld [vmem:[%s1 + $0x14] sm:$0xf]
  %v24 = vld [vmem:[%s1 + $0x18] sm:$0xf]
  %v25 = vld [vmem:[%s1 + $0x1c] sm:$0xf]
  %v26 = vld [vmem:[%s1 + $0x20] sm:$0xf]
  %v27 = vld [vmem:[%s1 + $0x24] sm:$0xf]
  %v28 = vld [vmem:[%s1 + $0x28] sm:$0xf]
  %v29 = vld [vmem:[%s1 + $0x2c] sm:$0xf]
  %v30 = vld [vmem:[%s1 + $0x30] sm:$0xf]
  %v31 = vld [vmem:[%s1 + $0x34] sm:$0xf]
  %v32 = vld [vmem:[%s1 + $0x38] sm:$0xf]
  %v33 = vld [vmem:[%s1 + $0x3c] sm:$0xf]
  %v34 = vld [vmem:[%s1 + $0x40] sm:$0xf]
  %v35 = vld [vmem:[%s1 + $0x44] sm:$0xf]
  %v36 = vld [vmem:[%s1 + $0x48] sm:$0xf]
  %v37 = vld [vmem:[%s1 + $0x4c] sm:$0xf]
  %v38 = vld [vmem:[%s1 + $0x50] sm:$0xf]
  %v39 = vld [vmem:[%s1 + $0x54] sm:$0xf]
  %v40 = vld [vmem:[%s1 + $0x58] sm:$0xf]
  %v41 = vld [vmem:[%s1 + $0x5c] sm:$0xf]
  %v42 = vld [vmem:[%s1 + $0x60] sm:$0xf]
  %v43 = vld [vmem:[%s1 + $0x64] sm:$0xf]
  %v44 = vld [vmem:[%s1 + $0x68] sm:$0xf]
  %v45 = vld [vmem:[%s1 + $0x6c] sm:$0xf]
  %v46 = vld [vmem:[%s1 + $0x70] sm:$0xf]
  %v47 = vld [vmem:[%s1 + $0x74] sm:$0xf]
  %v48 = vld [vmem:[%s1 + $0x78] sm:$0xf]
  %v49 = vld [vmem:[%s1 + $0x7c] sm:$0xf]
  %v50 = vld [vmem:[%s2] sm:$0x1]
  %v52 = vlaneseq
  %v53 = vshrl.u32 %v52, 7
  %v54 = vsub.s32 0, %v53
  %v55 = vrot.slane %v50, %v54
  %v60 = vunpack.c.l.b16 %v15
  %v61 = vunpack.c.h.b16 %v15
  %v62 = vunpack.c.l.b16 %v16
  %v63 = vunpack.c.h.b16 %v16
  %v64 = vunpack.c.l.b16 %v17
  %v65 = vunpack.c.h.b16 %v17
  %v66 = vpack.c.b16 %v62, %v60
  %v67 = vpack.c.b16 %v63, %v61
  %v68 = vpack.c.b16 %v64, %v64
  %v69 = vpack.c.b16 %v65, %v65
  %v106 = vunpack.c.l.b16 %v18
  %v107 = vunpack.c.l.b16 %v19
  %v108 = vunpack.c.l.b16 %v20
  %v109 = vunpack.c.l.b16 %v21
  %v110 = vunpack.c.l.b16 %v22
  %v111 = vunpack.c.l.b16 %v23
  %v112 = vunpack.c.l.b16 %v24
  %v113 = vunpack.c.l.b16 %v25
  %v114 = vunpack.c.l.b16 %v26
  %v115 = vunpack.c.l.b16 %v27
  %v116 = vunpack.c.l.b16 %v28
  %v117 = vunpack.c.l.b16 %v29
  %v118 = vunpack.c.l.b16 %v30
  %v119 = vunpack.c.l.b16 %v31
  %v120 = vunpack.c.l.b16 %v32
  %v121 = vunpack.c.l.b16 %v33
  %v122 = vunpack.c.l.b16 %v34
  %v123 = vunpack.c.l.b16 %v35
  %v124 = vunpack.c.l.b16 %v36
  %v125 = vunpack.c.l.b16 %v37
  %v126 = vunpack.c.l.b16 %v38
  %v127 = vunpack.c.l.b16 %v39
  %v128 = vunpack.c.l.b16 %v40
  %v129 = vunpack.c.l.b16 %v41
  %v130 = vunpack.c.l.b16 %v42
  %v131 = vunpack.c.l.b16 %v43
  %v132 = vunpack.c.l.b16 %v44
  %v133 = vunpack.c.l.b16 %v45
  %v134 = vunpack.c.l.b16 %v46
  %v135 = vunpack.c.l.b16 %v47
  %v136 = vunpack.c.l.b16 %v48
  %v137 = vunpack.c.l.b16 %v49
  %v138 = vpack.c.b16 %v107, %v106
  %v139 = vpack.c.b16 %v109, %v108
  %v140 = vpack.c.b16 %v111, %v110
  %v141 = vpack.c.b16 %v113, %v112
  %v142 = vpack.c.b16 %v115, %v114
  %v143 = vpack.c.b16 %v117, %v116
  %v144 = vpack.c.b16 %v119, %v118
  %v145 = vpack.c.b16 %v121, %v120
  %v146 = vpack.c.b16 %v123, %v122
  %v147 = vpack.c.b16 %v125, %v124
  %v148 = vpack.c.b16 %v127, %v126
  %v149 = vpack.c.b16 %v129, %v128
  %v150 = vpack.c.b16 %v131, %v130
  %v151 = vpack.c.b16 %v133, %v132
  %v152 = vpack.c.b16 %v135, %v134
  %v153 = vpack.c.b16 %v137, %v136
  %170 = vmatprep.subr.bf16.mxu0 0
  %171 = vmatpush1.bf16.msra.mxu0 %v145
  %172 = vmatprep.subr.bf16.mxu0 0
  %173 = vmatpush1.bf16.msra.mxu0 %v144
  %174 = vmatprep.subr.bf16.mxu0 0
  %175 = vmatpush1.bf16.msra.mxu0 %v143
  %176 = vmatprep.subr.bf16.mxu0 0
  %177 = vmatpush1.bf16.msra.mxu0 %v142
  %178 = vmatprep.subr.bf16.mxu0 0
  %179 = vmatpush1.bf16.msra.mxu0 %v141
  %180 = vmatprep.subr.bf16.mxu0 0
  %181 = vmatpush1.bf16.msra.mxu0 %v140
  %182 = vmatprep.subr.bf16.mxu0 0
  %183 = vmatpush1.bf16.msra.mxu0 %v139
  %184 = vmatprep.subr.bf16.mxu0 0
  %185 = vmatpush1.bf16.msra.mxu0 %v138
  %186 = vmatprep.subr.bf16.mxu0 0
  %187 = vmatpush2.bf16.msra.mxu0 %v153
  %188 = vmatprep.subr.bf16.mxu0 0
  %189 = vmatpush2.bf16.msra.mxu0 %v152
  %190 = vmatprep.subr.bf16.mxu0 0
  %191 = vmatpush2.bf16.msra.mxu0 %v151
  %192 = vmatprep.subr.bf16.mxu0 0
  %193 = vmatpush2.bf16.msra.mxu0 %v150
  %194 = vmatprep.subr.bf16.mxu0 0
  %195 = vmatpush2.bf16.msra.mxu0 %v149
  %196 = vmatprep.subr.bf16.mxu0 0
  %197 = vmatpush2.bf16.msra.mxu0 %v148
  %198 = vmatprep.subr.bf16.mxu0 0
  %199 = vmatpush2.bf16.msra.mxu0 %v147
  %200 = vmatprep.subr.bf16.mxu0 0
  %201 = vmatpush2.bf16.msra.mxu0 %v146
  %202 = vmatprep.mubr.bf16.mxu0 %v67
  %203 = vmatmul.mubr.bf16.gmra.mxu0 %v66
  %v204 = vpop.f32.mrf.mxu0
  %v205 = vadd.f32 %v55, %v204
  %v206 = vpop.f32.mrf.mxu0
  %v207 = vpop.f32.mrf.mxu0
  %v208 = vadd.f32 %v55, %v207
  %v209 = vpop.f32.mrf.mxu0
  %210 = vmatprep.mubr.bf16.mxu0 %v69
  %211 = vmatmul.mubr.bf16.gmra.mxu0 %v68
  %v212 = vpop.f32.mrf.mxu0
  %v213 = vadd.f32 %v55, %v212
  %v214 = vpop.f32.mrf.mxu0
  %v215 = vpop.f32.mrf.mxu0
  %v216 = vpop.f32.mrf.mxu0
  %217 = vdwg.mxu0
  %v218 = vmax.f32 %v205, 0.0
  %v219 = vmax.f32 %v208, 0.0
  %v220 = vmax.f32 %v213, 0.0
  %v221 = vpack.c.bf16 %v219, %v218
  %v222 = vpack.c.bf16 %v220, %v220
  %v225 = vunpack.c.l.b16 %v221
  %v226 = vunpack.c.h.b16 %v221
  %v227 = vunpack.c.l.b16 %v222
  %v228 = vpack.c.b16 %v225, %v225
  %v229 = vpack.c.b16 %v226, %v226
  %v230 = vpack.c.b16 %v227, %v227
  %vm234 = vcmask 257024
  %235 = vst.msk [vmem:[%s3] sm:$0xf] %vm234, %v228
  %236 = vst.msk [vmem:[%s3 + $0x4] sm:$0xf] %vm234, %v229
  %vm237 = vcmask 253952
  %238 = vst.msk [vmem:[%s3 + $0x8] sm:$0x1] %vm237, %v230
  // Predicated region
  $region14: #{policy_forward.6} parent=0 // pred_check
    _
  $region15: #{policy_forward.6} parent=0 // pred_check_branch
    %240 = sbr.rel (0) target = $region17
  $region16: #{policy_forward.6} parent=0 // pred_region
    _
  $region17: #{policy_forward.6} parent=0 // pred_fallthru
    _
  // Predicated region
  $region18: #{policy_forward.6} parent=0 // pred_check
    _
  $region19: #{policy_forward.6} parent=0 // pred_check_branch
    %242 = sbr.rel (0) target = $region21
  $region20: #{policy_forward.6} parent=0 // pred_region
    _
  $region21: #{policy_forward.6} parent=0 // pred_fallthru
    _

// kernel: policy_forward.7
$region0: #{policy_forward.7}
  #allocation0 [shape = 'u32[]', space=smem, size = 0x4, offset = 0x4, fixed_abs, tag = 'smem constant byte address 0x4 - core index']
  #allocation1 [shape = 'u32[144,128]{1,0:T(1,128)}', space=vmem, size = 0x12000, scoped, tag = 'internal scratch']
  %s0 = inlined_call_operand.vmem [shape: bf16[2,288], index: 0, kind: input, shape index: {}]
  %s1 = inlined_call_operand.vmem [shape: f32[2,2], index: 1, kind: input, shape index: {}]
  %s2 = inlined_call_operand.vmem [shape: bf16[288,256], index: 2, kind: input, shape index: {}]
  %s3 = inlined_call_operand.vmem [shape: f32[2,256], index: 3, kind: input, shape index: {}]
  %s4 = inlined_call_operand.vmem [shape: f32[1,256], index: 4, kind: input, shape index: {}]
  %s5 = inlined_call_operand.vmem [shape: bf16[256,128], index: 5, kind: input, shape index: {}]
  %s6 = inlined_call_operand.vmem [shape: f32[1,128], index: 6, kind: input, shape index: {}]
  %s7 = inlined_call_operand.vmem [shape: bf16[128,128], index: 7, kind: input, shape index: {}]
  %s8 = inlined_call_operand.vmem [shape: f32[1,128], index: 8, kind: input, shape index: {}]
  %s9 = inlined_call_operand.vmem [shape: f32[2,128], index: 9, kind: output, shape index: {}]
  %s10 = sld [smem:[#allocation0]]
  $region46: #{policy_forward.7} parent=0
    _
  %s12 = ssub.s32 1, %s10
  %s13 = scalar_select 0, %s12, %s10
  // Predicated region
  $region2: #{policy_forward.7} parent=0 // pred_check
    _
  $region3: #{policy_forward.7} parent=0 // pred_check_branch
    %15 = sbr.rel (0) target = $region5
  $region4: #{policy_forward.7} parent=0 // pred_region
    _
  $region5: #{policy_forward.7} parent=0 // pred_fallthru
    _
  // Predicated region
  $region6: #{policy_forward.7} parent=0 // pred_check
    _
  $region7: #{policy_forward.7} parent=0 // pred_check_branch
    %17 = sbr.rel (0) target = $region9
  $region8: #{policy_forward.7} parent=0 // pred_region
    _
  $region9: #{policy_forward.7} parent=0 // pred_fallthru
    _
  // Predicated region
  $region10: #{policy_forward.7} parent=0 // pred_check
    _
  $region11: #{policy_forward.7} parent=0 // pred_check_branch
    %19 = sbr.rel (0) target = $region13
  $region12: #{policy_forward.7} parent=0 // pred_region
    _
  $region13: #{policy_forward.7} parent=0 // pred_fallthru
    _
  // Predicated region
  $region14: #{policy_forward.7} parent=0 // pred_check
    _
  $region15: #{policy_forward.7} parent=0 // pred_check_branch
    %21 = sbr.rel (0) target = $region17
  $region16: #{policy_forward.7} parent=0 // pred_region
    _
  $region17: #{policy_forward.7} parent=0 // pred_fallthru
    _
  // Predicated region
  $region18: #{policy_forward.7} parent=0 // pred_check
    _
  $region19: #{policy_forward.7} parent=0 // pred_check_branch
    %23 = sbr.rel (0) target = $region21
  $region20: #{policy_forward.7} parent=0 // pred_region
    _
  $region21: #{policy_forward.7} parent=0 // pred_fallthru
    _
  // Predicated region
  $region22: #{policy_forward.7} parent=0 // pred_check
    _
  $region23: #{policy_forward.7} parent=0 // pred_check_branch
    %25 = sbr.rel (0) target = $region25
  $region24: #{policy_forward.7} parent=0 // pred_region
    _
  $region25: #{policy_forward.7} parent=0 // pred_fallthru
    _
  // Predicated region
  $region26: #{policy_forward.7} parent=0 // pred_check
    _
  $region27: #{policy_forward.7} parent=0 // pred_check_branch
    %27 = sbr.rel (0) target = $region29
  $region28: #{policy_forward.7} parent=0 // pred_region
    _
  $region29: #{policy_forward.7} parent=0 // pred_fallthru
    _
  // Predicated region
  $region30: #{policy_forward.7} parent=0 // pred_check
    _
  $region31: #{policy_forward.7} parent=0 // pred_check_branch
    %29 = sbr.rel (0) target = $region33
  $region32: #{policy_forward.7} parent=0 // pred_region
    _
  $region33: #{policy_forward.7} parent=0 // pred_fallthru
    _
  // Predicated region
  $region34: #{policy_forward.7} parent=0 // pred_check
    _
  $region35: #{policy_forward.7} parent=0 // pred_check_branch
    %31 = sbr.rel (0) target = $region37
  $region36: #{policy_forward.7} parent=0 // pred_region
    _
  $region37: #{policy_forward.7} parent=0 // pred_fallthru
    _
  %v33 = vld [vmem:[%s0] sm:$0x7]
  %v34 = vld [vmem:[%s2] sm:$0xff]
  %v35 = vld [vmem:[%s2 + $0x8] sm:$0xff]
  %v36 = vld [vmem:[%s2 + $0x10] sm:$0xff]
  %v37 = vld [vmem:[%s2 + $0x18] sm:$0xff]
  %v38 = vld [vmem:[%s2 + $0x20] sm:$0xff]
  %v39 = vld [vmem:[%s2 + $0x28] sm:$0xff]
  %v40 = vld [vmem:[%s2 + $0x30] sm:$0xff]
  %v41 = vld [vmem:[%s2 + $0x38] sm:$0xff]
  %v42 = vld [vmem:[%s2 + $0x40] sm:$0xff]
  %v43 = vld [vmem:[%s2 + $0x48] sm:$0xff]
  %v44 = vld [vmem:[%s2 + $0x50] sm:$0xff]
  %v45 = vld [vmem:[%s2 + $0x58] sm:$0xff]
  %v46 = vld [vmem:[%s2 + $0x60] sm:$0xff]
  %v47 = vld [vmem:[%s2 + $0x68] sm:$0xff]
  %v48 = vld [vmem:[%s2 + $0x70] sm:$0xff]
  %v49 = vld [vmem:[%s2 + $0x78] sm:$0xff]
  %v50 = vld [vmem:[%s2 + $0x80] sm:$0xff]
  %v51 = vld [vmem:[%s2 + $0x88] sm:$0xff]
  %v52 = vld [vmem:[%s2 + $0x90] sm:$0xff]
  %v53 = vld [vmem:[%s2 + $0x98] sm:$0xff]
  %v54 = vld [vmem:[%s2 + $0xa0] sm:$0xff]
  %v55 = vld [vmem:[%s2 + $0xa8] sm:$0xff]
  %v56 = vld [vmem:[%s2 + $0xb0] sm:$0xff]
  %v57 = vld [vmem:[%s2 + $0xb8] sm:$0xff]
  %v58 = vld [vmem:[%s2 + $0xc0] sm:$0xff]
  %v59 = vld [vmem:[%s2 + $0xc8] sm:$0xff]
  %v60 = vld [vmem:[%s2 + $0xd0] sm:$0xff]
  %v61 = vld [vmem:[%s2 + $0xd8] sm:$0xff]
  %v62 = vld [vmem:[%s2 + $0xe0] sm:$0xff]
  %v63 = vld [vmem:[%s2 + $0xe8] sm:$0xff]
  %v64 = vld [vmem:[%s2 + $0xf0] sm:$0xff]
  %v65 = vld [vmem:[%s2 + $0xf8] sm:$0xff]
  %v66 = vld [vmem:[%s2 + $0x100] sm:$0xff]
  %v67 = vld [vmem:[%s2 + $0x108] sm:$0xff]
  %v68 = vld [vmem:[%s2 + $0x110] sm:$0xff]
  %v69 = vld [vmem:[%s2 + $0x118] sm:$0xff]
  %v70 = vld [vmem:[%s1] sm:$0x3]
  %v71 = vmax.f32 %v70, -10.0
  %v72 = vmin.f32 %v71, 10.0
  %v73 = vld [vmem:[%s3] ss:$2 sm:$0x3]
  %75 = vset.pattern.permute.xlu0 0
  %76 = vperm.xlu0 %75, %v72
  %v77 = vpop.permute.xlu0 %76
  %v80 = vlaneseq
  %v81 = vshrl.u32 %v80, 7
  %v82 = vsub.s32 0, %v81
  %v83 = vrot.slane %v73, %v82
  %v84 = vlaneseq
  %v85 = vshrl.u32 %v84, 7
  %v86 = vsub.s32 1, %v85
  %v87 = vrot.slane %v73, %v86
  %v90 = vmul.f32 %v77, %v83
  %v91 = vmul.f32 %v77, %v87
  %v94 = vunpack.c.l.s4 1966171168
  %v95 = vunpack.c.0.s8 %v94
  %v96 = vlaneseq
  %v97 = vshrl.u32 %v96, 7
  %v98 = vsub.s32 %v95, %v97
  %v99 = vrot.slane %v33, %v98
  %v100 = vcombine.high %v99, %v99
  %v102 = vunpack.c.l.s4 1966171168
  %v103 = vunpack.c.0.s8 %v102
  %v104 = vlaneseq
  %v105 = vshrl.u32 %v104, 7
  %v106 = vsub.s32 %v103, %v105
  %v107 = vrot.slane %v99, %v106
  %v109 = vunpack.c.l.s4 1966171168
  %v110 = vunpack.c.0.s8 %v109
  %v111 = vlaneseq
  %v112 = vshrl.u32 %v111, 7
  %v113 = vsub.s32 %v110, %v112
  %v114 = vrot.slane %v100, %v113
  %v115 = vcombine.high %v107, %v107
  %v154 = vunpack.c.l.b16 %v34
  %v155 = vunpack.c.h.b16 %v34
  %v156 = vunpack.c.l.b16 %v35
  %v157 = vunpack.c.h.b16 %v35
  %v158 = vunpack.c.l.b16 %v36
  %v159 = vunpack.c.h.b16 %v36
  %v160 = vunpack.c.l.b16 %v37
  %v161 = vunpack.c.h.b16 %v37
  %v162 = vunpack.c.l.b16 %v38
  %v163 = vunpack.c.h.b16 %v38
  %v164 = vunpack.c.l.b16 %v39
  %v165 = vunpack.c.h.b16 %v39
  %v166 = vunpack.c.l.b16 %v40
  %v167 = vunpack.c.h.b16 %v40
  %v168 = vunpack.c.l.b16 %v41
  %v169 = vunpack.c.h.b16 %v41
  %v170 = vunpack.c.l.b16 %v42
  %v171 = vunpack.c.h.b16 %v42
  %v172 = vunpack.c.l.b16 %v43
  %v173 = vunpack.c.h.b16 %v43
  %v174 = vunpack.c.l.b16 %v44
  %v175 = vunpack.c.h.b16 %v44
  %v176 = vunpack.c.l.b16 %v45
  %v177 = vunpack.c.h.b16 %v45
  %v178 = vunpack.c.l.b16 %v46
  %v179 = vunpack.c.h.b16 %v46
  %v180 = vunpack.c.l.b16 %v47
  %v181 = vunpack.c.h.b16 %v47
  %v182 = vunpack.c.l.b16 %v48
  %v183 = vunpack.c.h.b16 %v48
  %v184 = vunpack.c.l.b16 %v49
  %v185 = vunpack.c.h.b16 %v49
  %v186 = vunpack.c.l.b16 %v50
  %v187 = vunpack.c.h.b16 %v50
  %v188 = vunpack.c.l.b16 %v51
  %v189 = vunpack.c.h.b16 %v51
  %v190 = vunpack.c.l.b16 %v52
  %v191 = vunpack.c.h.b16 %v52
  %v192 = vunpack.c.l.b16 %v53
  %v193 = vunpack.c.h.b16 %v53
  %v194 = vunpack.c.l.b16 %v54
  %v195 = vunpack.c.h.b16 %v54
  %v196 = vunpack.c.l.b16 %v55
  %v197 = vunpack.c.h.b16 %v55
  %v198 = vunpack.c.l.b16 %v56
  %v199 = vunpack.c.h.b16 %v56
  %v200 = vunpack.c.l.b16 %v57
  %v201 = vunpack.c.h.b16 %v57
  %v202 = vunpack.c.l.b16 %v58
  %v203 = vunpack.c.h.b16 %v58
  %v204 = vunpack.c.l.b16 %v59
  %v205 = vunpack.c.h.b16 %v59
  %v206 = vunpack.c.l.b16 %v60
  %v207 = vunpack.c.h.b16 %v60
  %v208 = vunpack.c.l.b16 %v61
  %v209 = vunpack.c.h.b16 %v61
  %v210 = vunpack.c.l.b16 %v62
  %v211 = vunpack.c.h.b16 %v62
  %v212 = vunpack.c.l.b16 %v63
  %v213 = vunpack.c.h.b16 %v63
  %v214 = vunpack.c.l.b16 %v64
  %v215 = vunpack.c.h.b16 %v64
  %v216 = vunpack.c.l.b16 %v65
  %v217 = vunpack.c.h.b16 %v65
  %v218 = vunpack.c.l.b16 %v66
  %v219 = vunpack.c.h.b16 %v66
  %v220 = vunpack.c.l.b16 %v67
  %v221 = vunpack.c.h.b16 %v67
  %v222 = vunpack.c.l.b16 %v68
  %v223 = vunpack.c.h.b16 %v68
  %v224 = vunpack.c.l.b16 %v69
  %v225 = vunpack.c.h.b16 %v69
  %v226 = vpack.c.b16 %v156, %v154
  %v227 = vpack.c.b16 %v157, %v155
  %v228 = vpack.c.b16 %v160, %v158
  %v229 = vpack.c.b16 %v161, %v159
  %v230 = vpack.c.b16 %v164, %v162
  %v231 = vpack.c.b16 %v165, %v163
  %v232 = vpack.c.b16 %v168, %v166
  %v233 = vpack.c.b16 %v169, %v167
  %v234 = vpack.c.b16 %v172, %v170
  %v235 = vpack.c.b16 %v173, %v171
  %v236 = vpack.c.b16 %v176, %v174
  %v237 = vpack.c.b16 %v177, %v175
  %v238 = vpack.c.b16 %v180, %v178
  %v239 = vpack.c.b16 %v181, %v179
  %v240 = vpack.c.b16 %v184, %v182
  %v241 = vpack.c.b16 %v185, %v183
  %v242 = vpack.c.b16 %v188, %v186
  %v243 = vpack.c.b16 %v189, %v187
  %v244 = vpack.c.b16 %v192, %v190
  %v245 = vpack.c.b16 %v193, %v191
  %v246 = vpack.c.b16 %v196, %v194
  %v247 = vpack.c.b16 %v197, %v195
  %v248 = vpack.c.b16 %v200, %v198
  %v249 = vpack.c.b16 %v201, %v199
  %v250 = vpack.c.b16 %v204, %v202
  %v251 = vpack.c.b16 %v205, %v203
  %v252 = vpack.c.b16 %v208, %v206
  %v253 = vpack.c.b16 %v209, %v207
  %v254 = vpack.c.b16 %v212, %v210
  %v255 = vpack.c.b16 %v213, %v211
  %v256 = vpack.c.b16 %v216, %v214
  %v257 = vpack.c.b16 %v217, %v215
  %v258 = vpack.c.b16 %v220, %v218
  %v259 = vpack.c.b16 %v221, %v219
  %v260 = vpack.c.b16 %v224, %v222
  %v261 = vpack.c.b16 %v225, %v223
  %vm298 = vcmask 261120
  %v300 = vsel %vm298, %v115, 0
  %302 = vmatprep.subr.bf16.mxu0 %v241
  %303 = vmatpush1.bf16.msra.mxu0 %v240
  %304 = vmatprep.subr.bf16.mxu0 %v239
  %305 = vmatpush1.bf16.msra.mxu0 %v238
  %306 = vmatprep.subr.bf16.mxu0 %v237
  %307 = vmatpush1.bf16.msra.mxu0 %v236
  %308 = vmatprep.subr.bf16.mxu0 %v235
  %309 = vmatpush1.bf16.msra.mxu0 %v234
  %310 = vmatprep.subr.bf16.mxu0 %v233
  %311 = vmatpush1.bf16.msra.mxu0 %v232
  %312 = vmatprep.subr.bf16.mxu0 %v231
  %313 = vmatpush1.bf16.msra.mxu0 %v230
  %314 = vmatprep.subr.bf16.mxu0 %v229
  %315 = vmatpush1.bf16.msra.mxu0 %v228
  %316 = vmatprep.subr.bf16.mxu0 %v227
  %317 = vmatpush1.bf16.msra.mxu0 %v226
  %318 = vmatprep.subr.bf16.mxu0 %v257
  %319 = vmatpush2.bf16.msra.mxu0 %v256
  %320 = vmatprep.subr.bf16.mxu0 %v255
  %321 = vmatpush2.bf16.msra.mxu0 %v254
  %322 = vmatprep.subr.bf16.mxu0 %v253
  %323 = vmatpush2.bf16.msra.mxu0 %v252
  %324 = vmatprep.subr.bf16.mxu0 %v251
  %325 = vmatpush2.bf16.msra.mxu0 %v250
  %326 = vmatprep.subr.bf16.mxu0 %v249
  %327 = vmatpush2.bf16.msra.mxu0 %v248
  %328 = vmatprep.subr.bf16.mxu0 %v247
  %329 = vmatpush2.bf16.msra.mxu0 %v246
  %330 = vmatprep.subr.bf16.mxu0 %v245
  %331 = vmatpush2.bf16.msra.mxu0 %v244
  %332 = vmatprep.subr.bf16.mxu0 %v243
  %333 = vmatpush2.bf16.msra.mxu0 %v242
  %334 = vmatprep.mubr.bf16.mxu0 %v114
  %335 = vmatmul.mubr.bf16.gmra.mxu0 %v107
  %v336 = vpop.f32.mrf.mxu0
  %v337 = vadd.f32 %v90, %v336
  %v338 = vpop.f32.mrf.mxu0
  %v339 = vadd.f32 %v91, %v338
  %v340 = vpop.f32.mrf.mxu0
  %v341 = vpop.f32.mrf.mxu0
  %342 = vdwg.mxu0
  %343 = vmatprep.subr.bf16.mxu0 0
  %344 = vmatpush1.bf16.msra.mxu0 0
  %345 = vmatprep.subr.bf16.mxu0 0
  %346 = vmatpush1.bf16.msra.mxu0 0
  %347 = vmatprep.subr.bf16.mxu0 0
  %348 = vmatpush1.bf16.msra.mxu0 0
  %349 = vmatprep.subr.bf16.mxu0 0
  %350 = vmatpush1.bf16.msra.mxu0 0
  %351 = vmatprep.subr.bf16.mxu0 0
  %352 = vmatpush1.bf16.msra.mxu0 0
  %353 = vmatprep.subr.bf16.mxu0 0
  %354 = vmatpush1.bf16.msra.mxu0 0
  %355 = vmatprep.subr.bf16.mxu0 %v261
  %356 = vmatpush1.bf16.msra.mxu0 %v260
  %357 = vmatprep.subr.bf16.mxu0 %v259
  %358 = vmatpush1.bf16.msra.mxu0 %v258
  %359 = vmatprep.subr.bf16.mxu0 0
  %360 = vmatpush2.bf16.msra.mxu0 0
  %361 = vmatprep.subr.bf16.mxu0 0
  %362 = vmatpush2.bf16.msra.mxu0 0
  %363 = vmatprep.subr.bf16.mxu0 0
  %364 = vmatpush2.bf16.msra.mxu0 0
  %365 = vmatprep.subr.bf16.mxu0 0
  %366 = vmatpush2.bf16.msra.mxu0 0
  %367 = vmatprep.subr.bf16.mxu0 0
  %368 = vmatpush2.bf16.msra.mxu0 0
  %369 = vmatprep.subr.bf16.mxu0 0
  %370 = vmatpush2.bf16.msra.mxu0 0
  %371 = vmatprep.subr.bf16.mxu0 0
  %372 = vmatpush2.bf16.msra.mxu0 0
  %373 = vmatprep.subr.bf16.mxu0 0
  %374 = vmatpush2.bf16.msra.mxu0 0
  %375 = vmatprep.mubr.bf16.mxu0 0
  %376 = vmatmul.mubr.bf16.gmra.mxu0 %v300
  %v377 = vpop.f32.mrf.mxu0
  %v378 = vadd.f32 %v337, %v377
  %v379 = vpop.f32.mrf.mxu0
  %v380 = vadd.f32 %v339, %v379
  %v381 = vpop.f32.mrf.mxu0
  %v382 = vpop.f32.mrf.mxu0
  %383 = vdwg.mxu0
  %s384 = scalar_lea.vmem %s3, 1
  %v385 = vld [vmem:[%s384] ss:$2 sm:$0x3]
  %386 = vset.pattern.permute.xlu0 1
  %387 = vperm.xlu0 %386, %v72
  %v388 = vpop.permute.xlu0 %387
  %v391 = vlaneseq
  %v392 = vshrl.u32 %v391, 7
  %v393 = vsub.s32 0, %v392
  %v394 = vrot.slane %v385, %v393
  %v395 = vlaneseq
  %v396 = vshrl.u32 %v395, 7
  %v397 = vsub.s32 1, %v396
  %v398 = vrot.slane %v385, %v397
  %v401 = vmul.f32 %v388, %v394
  %v402 = vmul.f32 %v388, %v398
  %v403 = vadd.f32 %v378, %v401
  %v404 = vadd.f32 %v380, %v402
  %v405 = vld [vmem:[%s4] sm:$0x3]
  %v407 = vlaneseq
  %v408 = vshrl.u32 %v407, 7
  %v409 = vsub.s32 0, %v408
  %v410 = vrot.slane %v405, %v409
  %v411 = vlaneseq
  %v412 = vshrl.u32 %v411, 7
  %v413 = vsub.s32 1, %v412
  %v414 = vrot.slane %v405, %v413
  %v417 = vadd.f32 %v403, %v410
  %v418 = vadd.f32 %v404, %v414
  %v419 = vmax.f32 %v417, 0.0
  %v420 = vmax.f32 %v418, 0.0
  %v421 = vpack.c.bf16 %v419, %v419
  %v422 = vpack.c.bf16 %v420, %v420
  %v423 = vld [vmem:[%s5] sm:$0xf]
  %v424 = vld [vmem:[%s5 + $0x4] sm:$0xf]
  %v425 = vld [vmem:[%s5 + $0x8] sm:$0xf]
  %v426 = vld [vmem:[%s5 + $0xc] sm:$0xf]
  %v427 = vld [vmem:[%s5 + $0x10] sm:$0xf]
  %v428 = vld [vmem:[%s5 + $0x14] sm:$0xf]
  %v429 = vld [vmem:[%s5 + $0x18] sm:$0xf]
  %v430 = vld [vmem:[%s5 + $0x1c] sm:$0xf]
  %v431 = vld [vmem:[%s5 + $0x20] sm:$0xf]
  %v432 = vld [vmem:[%s5 + $0x24] sm:$0xf]
  %v433 = vld [vmem:[%s5 + $0x28] sm:$0xf]
  %v434 = vld [vmem:[%s5 + $0x2c] sm:$0xf]
  %v435 = vld [vmem:[%s5 + $0x30] sm:$0xf]
  %v436 = vld [vmem:[%s5 + $0x34] sm:$0xf]
  %v437 = vld [vmem:[%s5 + $0x38] sm:$0xf]
  %v438 = vld [vmem:[%s5 + $0x3c] sm:$0xf]
  %v439 = vld [vmem:[%s5 + $0x40] sm:$0xf]
  %v440 = vld [vmem:[%s5 + $0x44] sm:$0xf]
  %v441 = vld [vmem:[%s5 + $0x48] sm:$0xf]
  %v442 = vld [vmem:[%s5 + $0x4c] sm:$0xf]
  %v443 = vld [vmem:[%s5 + $0x50] sm:$0xf]
  %v444 = vld [vmem:[%s5 + $0x54] sm:$0xf]
  %v445 = vld [vmem:[%s5 + $0x58] sm:$0xf]
  %v446 = vld [vmem:[%s5 + $0x5c] sm:$0xf]
  %v447 = vld [vmem:[%s5 + $0x60] sm:$0xf]
  %v448 = vld [vmem:[%s5 + $0x64] sm:$0xf]
  %v449 = vld [vmem:[%s5 + $0x68] sm:$0xf]
  %v450 = vld [vmem:[%s5 + $0x6c] sm:$0xf]
  %v451 = vld [vmem:[%s5 + $0x70] sm:$0xf]
  %v452 = vld [vmem:[%s5 + $0x74] sm:$0xf]
  %v453 = vld [vmem:[%s5 + $0x78] sm:$0xf]
  %v454 = vld [vmem:[%s5 + $0x7c] sm:$0xf]
  %v455 = vld [vmem:[%s6] sm:$0x1]
  %v457 = vlaneseq
  %v458 = vshrl.u32 %v457, 7
  %v459 = vsub.s32 0, %v458
  %v460 = vrot.slane %v455, %v459
  %v494 = vunpack.c.l.b16 %v423
  %v495 = vunpack.c.l.b16 %v424
  %v496 = vunpack.c.l.b16 %v425
  %v497 = vunpack.c.l.b16 %v426
  %v498 = vunpack.c.l.b16 %v427
  %v499 = vunpack.c.l.b16 %v428
  %v500 = vunpack.c.l.b16 %v429
  %v501 = vunpack.c.l.b16 %v430
  %v502 = vunpack.c.l.b16 %v431
  %v503 = vunpack.c.l.b16 %v432
  %v504 = vunpack.c.l.b16 %v433
  %v505 = vunpack.c.l.b16 %v434
  %v506 = vunpack.c.l.b16 %v435
  %v507 = vunpack.c.l.b16 %v436
  %v508 = vunpack.c.l.b16 %v437
  %v509 = vunpack.c.l.b16 %v438
  %v510 = vunpack.c.l.b16 %v439
  %v511 = vunpack.c.l.b16 %v440
  %v512 = vunpack.c.l.b16 %v441
  %v513 = vunpack.c.l.b16 %v442
  %v514 = vunpack.c.l.b16 %v443
  %v515 = vunpack.c.l.b16 %v444
  %v516 = vunpack.c.l.b16 %v445
  %v517 = vunpack.c.l.b16 %v446
  %v518 = vunpack.c.l.b16 %v447
  %v519 = vunpack.c.l.b16 %v448
  %v520 = vunpack.c.l.b16 %v449
  %v521 = vunpack.c.l.b16 %v450
  %v522 = vunpack.c.l.b16 %v451
  %v523 = vunpack.c.l.b16 %v452
  %v524 = vunpack.c.l.b16 %v453
  %v525 = vunpack.c.l.b16 %v454
  %v526 = vpack.c.b16 %v495, %v494
  %v527 = vpack.c.b16 %v497, %v496
  %v528 = vpack.c.b16 %v499, %v498
  %v529 = vpack.c.b16 %v501, %v500
  %v530 = vpack.c.b16 %v503, %v502
  %v531 = vpack.c.b16 %v505, %v504
  %v532 = vpack.c.b16 %v507, %v506
  %v533 = vpack.c.b16 %v509, %v508
  %v534 = vpack.c.b16 %v511, %v510
  %v535 = vpack.c.b16 %v513, %v512
  %v536 = vpack.c.b16 %v515, %v514
  %v537 = vpack.c.b16 %v517, %v516
  %v538 = vpack.c.b16 %v519, %v518
  %v539 = vpack.c.b16 %v521, %v520
  %v540 = vpack.c.b16 %v523, %v522
  %v541 = vpack.c.b16 %v525, %v524
  %558 = vmatprep.subr.bf16.mxu0 0
  %559 = vmatpush1.bf16.msra.mxu0 %v533
  %560 = vmatprep.subr.bf16.mxu0 0
  %561 = vmatpush1.bf16.msra.mxu0 %v532
  %562 = vmatprep.subr.bf16.mxu0 0
  %563 = vmatpush1.bf16.msra.mxu0 %v531
  %564 = vmatprep.subr.bf16.mxu0 0
  %565 = vmatpush1.bf16.msra.mxu0 %v530
  %566 = vmatprep.subr.bf16.mxu0 0
  %567 = vmatpush1.bf16.msra.mxu0 %v529
  %568 = vmatprep.subr.bf16.mxu0 0
  %569 = vmatpush1.bf16.msra.mxu0 %v528
  %570 = vmatprep.subr.bf16.mxu0 0
  %571 = vmatpush1.bf16.msra.mxu0 %v527
  %572 = vmatprep.subr.bf16.mxu0 0
  %573 = vmatpush1.bf16.msra.mxu0 %v526
  %574 = vmatprep.subr.bf16.mxu0 0
  %575 = vmatpush2.bf16.msra.mxu0 %v541
  %576 = vmatprep.subr.bf16.mxu0 0
  %577 = vmatpush2.bf16.msra.mxu0 %v540
  %578 = vmatprep.subr.bf16.mxu0 0
  %579 = vmatpush2.bf16.msra.mxu0 %v539
  %580 = vmatprep.subr.bf16.mxu0 0
  %581 = vmatpush2.bf16.msra.mxu0 %v538
  %582 = vmatprep.subr.bf16.mxu0 0
  %583 = vmatpush2.bf16.msra.mxu0 %v537
  %584 = vmatprep.subr.bf16.mxu0 0
  %585 = vmatpush2.bf16.msra.mxu0 %v536
  %586 = vmatprep.subr.bf16.mxu0 0
  %587 = vmatpush2.bf16.msra.mxu0 %v535
  %588 = vmatprep.subr.bf16.mxu0 0
  %589 = vmatpush2.bf16.msra.mxu0 %v534
  %590 = vmatprep.mubr.bf16.mxu0 %v422
  %591 = vmatmul.mubr.bf16.gmra.mxu0 %v421
  %v592 = vpop.f32.mrf.mxu0
  %v593 = vadd.f32 %v460, %v592
  %v594 = vpop.f32.mrf.mxu0
  %v595 = vpop.f32.mrf.mxu0
  %v596 = vpop.f32.mrf.mxu0
  %597 = vdwg.mxu0
  %v598 = vmax.f32 %v593, 0.0
  %v599 = vpack.c.bf16 %v598, %v598
  %v600 = vld [vmem:[%s7] sm:$0xf]
  %v601 = vld [vmem:[%s7 + $0x4] sm:$0xf]
  %v602 = vld [vmem:[%s7 + $0x8] sm:$0xf]
  %v603 = vld [vmem:[%s7 + $0xc] sm:$0xf]
  %v604 = vld [vmem:[%s7 + $0x10] sm:$0xf]
  %v605 = vld [vmem:[%s7 + $0x14] sm:$0xf]
  %v606 = vld [vmem:[%s7 + $0x18] sm:$0xf]
  %v607 = vld [vmem:[%s7 + $0x1c] sm:$0xf]
  %v608 = vld [vmem:[%s7 + $0x20] sm:$0xf]
  %v609 = vld [vmem:[%s7 + $0x24] sm:$0xf]
  %v610 = vld [vmem:[%s7 + $0x28] sm:$0xf]
  %v611 = vld [vmem:[%s7 + $0x2c] sm:$0xf]
  %v612 = vld [vmem:[%s7 + $0x30] sm:$0xf]
  %v613 = vld [vmem:[%s7 + $0x34] sm:$0xf]
  %v614 = vld [vmem:[%s7 + $0x38] sm:$0xf]
  %v615 = vld [vmem:[%s7 + $0x3c] sm:$0xf]
  %v616 = vld [vmem:[%s8] sm:$0x1]
  %v618 = vlaneseq
  %v619 = vshrl.u32 %v618, 7
  %v620 = vsub.s32 0, %v619
  %v621 = vrot.slane %v616, %v620
  %v639 = vunpack.c.l.b16 %v600
  %v640 = vunpack.c.l.b16 %v601
  %v641 = vunpack.c.l.b16 %v602
  %v642 = vunpack.c.l.b16 %v603
  %v643 = vunpack.c.l.b16 %v604
  %v644 = vunpack.c.l.b16 %v605
  %v645 = vunpack.c.l.b16 %v606
  %v646 = vunpack.c.l.b16 %v607
  %v647 = vunpack.c.l.b16 %v608
  %v648 = vunpack.c.l.b16 %v609
  %v649 = vunpack.c.l.b16 %v610
  %v650 = vunpack.c.l.b16 %v611
  %v651 = vunpack.c.l.b16 %v612
  %v652 = vunpack.c.l.b16 %v613
  %v653 = vunpack.c.l.b16 %v614
  %v654 = vunpack.c.l.b16 %v615
  %v655 = vpack.c.b16 %v640, %v639
  %v656 = vpack.c.b16 %v642, %v641
  %v657 = vpack.c.b16 %v644, %v643
  %v658 = vpack.c.b16 %v646, %v645
  %v659 = vpack.c.b16 %v648, %v647
  %v660 = vpack.c.b16 %v650, %v649
  %v661 = vpack.c.b16 %v652, %v651
  %v662 = vpack.c.b16 %v654, %v653
  %671 = vmatprep.subr.bf16.mxu0 0
  %672 = vmatpush1.bf16.msra.mxu0 %v662
  %673 = vmatprep.subr.bf16.mxu0 0
  %674 = vmatpush1.bf16.msra.mxu0 %v661
  %675 = vmatprep.subr.bf16.mxu0 0
  %676 = vmatpush1.bf16.msra.mxu0 %v660
  %677 = vmatprep.subr.bf16.mxu0 0
  %678 = vmatpush1.bf16.msra.mxu0 %v659
  %679 = vmatprep.subr.bf16.mxu0 0
  %680 = vmatpush1.bf16.msra.mxu0 %v658
  %681 = vmatprep.subr.bf16.mxu0 0
  %682 = vmatpush1.bf16.msra.mxu0 %v657
  %683 = vmatprep.subr.bf16.mxu0 0
  %684 = vmatpush1.bf16.msra.mxu0 %v656
  %685 = vmatprep.subr.bf16.mxu0 0
  %686 = vmatpush1.bf16.msra.mxu0 %v655
  %687 = vmatprep.subr.bf16.mxu0 0
  %688 = vmatpush2.bf16.msra.mxu0 0
  %689 = vmatprep.subr.bf16.mxu0 0
  %690 = vmatpush2.bf16.msra.mxu0 0
  %691 = vmatprep.subr.bf16.mxu0 0
  %692 = vmatpush2.bf16.msra.mxu0 0
  %693 = vmatprep.subr.bf16.mxu0 0
  %694 = vmatpush2.bf16.msra.mxu0 0
  %695 = vmatprep.subr.bf16.mxu0 0
  %696 = vmatpush2.bf16.msra.mxu0 0
  %697 = vmatprep.subr.bf16.mxu0 0
  %698 = vmatpush2.bf16.msra.mxu0 0
  %699 = vmatprep.subr.bf16.mxu0 0
  %700 = vmatpush2.bf16.msra.mxu0 0
  %701 = vmatprep.subr.bf16.mxu0 0
  %702 = vmatpush2.bf16.msra.mxu0 0
  %703 = vmatprep.mubr.bf16.mxu0 0
  %704 = vmatmul.mubr.bf16.gmra.mxu0 %v599
  %v705 = vpop.f32.mrf.mxu0
  %v706 = vadd.f32 %v621, %v705
  %v707 = vpop.f32.mrf.mxu0
  %v708 = vpop.f32.mrf.mxu0
  %v709 = vpop.f32.mrf.mxu0
  %710 = vdwg.mxu0
  %v711 = vlaneseq
  %v712 = vand.u32 %v711, 127
  %vm713 = vcmp.lt.s32.totalorder %v712, 1
  %v714 = vtanh.pop %v706
  %vm715 = vcmp.lt.s32.totalorder %v712, 2
  %v716 = vmax.f32 %v706, -5.0
  %v717 = vmin.f32 %v716, 2.0
  %v718 = vsel %vm715, %v717, 0.0
  %v719 = vsel %vm713, %v714, %v718
  %720 = vst [vmem:[%s9] sm:$0x3] %v719
  // Predicated region
  $region38: #{policy_forward.7} parent=0 // pred_check
    _
  $region39: #{policy_forward.7} parent=0 // pred_check_branch
    %722 = sbr.rel (0) target = $region41
  $region40: #{policy_forward.7} parent=0 // pred_region
    _
  $region41: #{policy_forward.7} parent=0 // pred_fallthru
    _
  // Predicated region
  $region42: #{policy_forward.7} parent=0 // pred_check
    _
  $region43: #{policy_forward.7} parent=0 // pred_check_branch
    %724 = sbr.rel (0) target = $region45
  $region44: #{policy_forward.7} parent=0 // pred_region
    _
  $region45: #{policy_forward.7} parent=0 // pred_fallthru
    _

</llo_original>
